<compile_context>
chip_gen: v7x
topology: tpu7x:2x2x1
jax: 0.10.0
libtpu: 0.0.40
codegen_flags: <defaults>
</compile_context>

<pallas_src>
import jax
import jax.numpy as jnp
from jax.experimental import pallas as pl
from jax.experimental.pallas import tpu as pltpu
from jax.scipy.special import logsumexp

TB = 32  # batch tile per grid step (multiple of 8; sweep 32/64/128)


# ---------------------------------------------------------------------------
# Fused forward kernel
# ---------------------------------------------------------------------------
def _smallnet_kernel(x_ref, w1_ref, b1_ref, s1_ref, w2_ref, b2_ref, s2_ref,
                     fc1w_ref, fc1b_ref, fc2w_ref, fc2b_ref, o_ref):
    f32 = jnp.float32
    bf16 = jnp.bfloat16
    x = x_ref[...]                                        # (28, TB, 28) f32 = [H, n, W]

    # ---- conv1 (1->10, k=5): single banded matmul, K = 5*28 = 140.
    # Shifted H-slices are lane-concatenated along K; the 5x5 taps over W are
    # folded into the (140, 240) weight built on the host.
    lhs1 = jnp.concatenate(
        [x[di:di + 24].reshape(24 * TB, 28) for di in range(5)], axis=-1)
    c1 = jnp.dot(lhs1.astype(bf16), w1_ref[...],
                 preferred_element_type=f32) + b1_ref[...]      # (24*TB, 240)

    # ---- maxpool 2x2 + relu: H via sublane row-blocks, W via one combined
    # even|odd select matmul (odd half at lane 128) + vreg-aligned max.
    c1 = c1.reshape(12, 2 * TB, 240)
    hmax = jnp.maximum(c1[:, :TB, :], c1[:, TB:, :]).reshape(12 * TB, 240)
    y1 = jnp.dot(hmax.astype(bf16), s1_ref[...], preferred_element_type=f32)  # (12*TB, 256)
    p1 = jnp.maximum(jnp.maximum(y1[:, :128], y1[:, 128:]), 0.0)
    p1 = p1.astype(bf16).reshape(12, TB, 128)   # lanes: w*10+c (0..119), 120..127 = 0

    # ---- conv2 (10->20, k=5): single banded matmul, K = 5*128 = 640
    # (pieces are exactly one lane-tile wide -> aligned concat, no lane shifts).
    lhs2 = jnp.concatenate(
        [p1[di:di + 8].reshape(8 * TB, 128) for di in range(5)], axis=-1)
    c2 = jnp.dot(lhs2, w2_ref[...], preferred_element_type=f32) + b2_ref[...]  # (8*TB, 160)
    # TODO(synk): Dropout2d after conv2 and F.dropout after fc1 use inference
    # (identity) semantics; training-mode stochastic masking is not reproduced.

    # ---- maxpool 2x2 + relu: (8,8,20) -> (4,4,20)
    c2 = c2.reshape(4, 2 * TB, 160)
    hmax2 = jnp.maximum(c2[:, :TB, :], c2[:, TB:, :]).reshape(4 * TB, 160)
    y2 = jnp.dot(hmax2.astype(bf16), s2_ref[...], preferred_element_type=f32)  # (4*TB, 256)
    p2 = jnp.maximum(jnp.maximum(y2[:, :128], y2[:, 128:]), 0.0)
    p2 = p2.astype(bf16).reshape(4, TB, 128)    # lanes: w*20+c (0..79), 80..127 = 0

    # ---- fc1: single matmul over the lane-concatenated (TB, 512) feature slab
    # (PyTorch's NCHW x.view(-1,320) order + the 128-lane padding are folded
    # into the host-side row permutation of fc1's weights).
    lhs3 = jnp.concatenate([p2[0], p2[1], p2[2], p2[3]], axis=-1)   # (TB, 512)
    h1 = jnp.maximum(jnp.dot(lhs3, fc1w_ref[...], preferred_element_type=f32)
                     + fc1b_ref[...], 0.0)                          # (TB, 50)

    # ---- fc2 + log_softmax over 128 lane-dense classes; pad classes carry a
    # -1e30 bias so they contribute nothing and the wrapper slices [:, :10].
    logits = jnp.dot(h1.astype(bf16), fc2w_ref[...],
                     preferred_element_type=f32) + fc2b_ref[...]    # (TB, 128)
    m = jnp.max(logits, axis=-1, keepdims=True)
    s = logits - m
    lse = jnp.log(jnp.sum(jnp.exp(s), axis=-1, keepdims=True))
    o_ref[...] = s - lse                                            # (TB, 128)


# ---------------------------------------------------------------------------
# Host-side weight packing (one-time, pure jnp)
# ---------------------------------------------------------------------------
def _banded_conv_weight(w_oihw, w_in, k_pad=None):
    """(Cout,Cin,5,5) conv weight -> (5*K_band, w_out*Cout) fused banded matrix.

    Per kernel row, K_band rows are (input_col, cin) (optionally zero-padded to
    k_pad rows so LHS pieces can be 128-lane aligned); columns are
    (output_col, cout). The 5 bands are stacked along rows, matching the
    lane-concatenation of shifted H-slices in the kernel.
    """
    cout, cin, kh, kw = w_oihw.shape
    w_out = w_in - kw + 1
    k_band = w_in * cin
    if k_pad is None:
        k_pad = k_band
    w_kkio = jnp.transpose(w_oihw, (2, 3, 1, 0)).astype(jnp.float32)  # (kh,kw,cin,cout)
    bands = []
    for di in range(kh):
        m = jnp.zeros((k_band, w_out * cout), jnp.float32)
        for dj in range(kw):
            eye = jnp.eye(w_in, w_out, k=-dj, dtype=jnp.float32)  # [v,j]=1 iff v==j+dj
            m = m + jnp.einsum('vj,io->vijo', eye, w_kkio[di, dj]).reshape(
                k_band, w_out * cout)
        if k_pad > k_band:
            m = jnp.concatenate(
                [m, jnp.zeros((k_pad - k_band, w_out * cout), jnp.float32)], axis=0)
        bands.append(m)
    return jnp.concatenate(bands, axis=0)       # (kh*k_pad, w_out*cout)


def _pool_select_combined(w_in, c):
    """(w_in*c, 256) even|odd selection matrix for 2x2 W-pooling on (w,c) lanes.

    Columns [0, w_in//2*c) select even w, columns [128, 128+w_in//2*c) select
    odd w, the rest are zero — so max(y[:, :128], y[:, 128:]) is vreg-aligned.
    """
    w_half = w_in // 2
    j = jnp.arange(w_in)[:, None]
    v = jnp.arange(w_half)[None, :]
    eye_c = jnp.eye(c, dtype=jnp.float32)
    even = (j == 2 * v).astype(jnp.float32)
    odd = (j == 2 * v + 1).astype(jnp.float32)
    se = jnp.einsum('jv,cd->jcvd', even, eye_c).reshape(w_in * c, w_half * c)
    so = jnp.einsum('jv,cd->jcvd', odd, eye_c).reshape(w_in * c, w_half * c)
    zpad = jnp.zeros((w_in * c, 128 - w_half * c), jnp.float32)
    return jnp.concatenate([se, zpad, so, zpad], axis=1)   # (w_in*c, 256)


def pack_params(raw):
    bf16 = jnp.bfloat16
    # PyTorch x.view(-1, 320) flattens (C=20, H=4, W=4); the kernel emits the
    # feature slab as (h, 128-lane-padded (w,c)) -> permute fc1's rows once here.
    f = jnp.arange(320)
    c = f // 16
    h = (f % 16) // 4
    w = f % 4
    dest = h * 128 + w * 20 + c
    fc1w = jnp.zeros((512, 50), jnp.float32).at[dest].set(jnp.transpose(raw["fc1_w"]))
    fc2w = jnp.zeros((50, 128), jnp.float32).at[:, :10].set(jnp.transpose(raw["fc2_w"]))
    fc2b = jnp.full((1, 128), -1e30, jnp.float32).at[0, :10].set(raw["fc2_b"])
    return {
        "w1": _banded_conv_weight(raw["conv1_w"], 28).astype(bf16),             # (140, 240)
        "b1": jnp.tile(raw["conv1_b"], 24).reshape(1, 240).astype(jnp.float32),
        "s1": _pool_select_combined(24, 10).astype(bf16),                       # (240, 256)
        "w2": _banded_conv_weight(raw["conv2_w"], 12, k_pad=128).astype(bf16),  # (640, 160)
        "b2": jnp.tile(raw["conv2_b"], 8).reshape(1, 160).astype(jnp.float32),
        "s2": _pool_select_combined(8, 20).astype(bf16),                        # (160, 256)
        "fc1w": fc1w.astype(bf16),                                              # (512, 50)
        "fc1b": raw["fc1_b"].reshape(1, 50).astype(jnp.float32),
        "fc2w": fc2w.astype(bf16),                                              # (50, 128)
        "fc2b": fc2b,                                                           # (1, 128)
    }


# ---------------------------------------------------------------------------
# Public forward
# ---------------------------------------------------------------------------
def smallnet_forward(params, x_nchw):
    """x_nchw: (N, 1, 28, 28) -> (N, 10) log-probabilities."""
    n = x_nchw.shape[0]
    n_pad = ((n + TB - 1) // TB) * TB
    x = x_nchw.astype(jnp.float32)
    if n_pad != n:
        x = jnp.pad(x, ((0, n_pad - n), (0, 0), (0, 0), (0, 0)))
    # (N,1,28,28) -> (28, N, 28) = [H, batch, W]; batch lands on sublanes in-kernel.
    xk = jnp.transpose(x[:, 0], (1, 0, 2))

    out = pl.pallas_call(
        _smallnet_kernel,
        out_shape=jax.ShapeDtypeStruct((n_pad, 128), jnp.float32),
        grid_spec=pltpu.PrefetchScalarGridSpec(
            num_scalar_prefetch=0,
            grid=(n_pad // TB,),
            in_specs=[
                pl.BlockSpec((28, TB, 28), lambda i: (0, i, 0)),   # input tile
                pl.BlockSpec((140, 240), lambda i: (0, 0)),        # conv1 fused banded W
                pl.BlockSpec((1, 240), lambda i: (0, 0)),          # conv1 bias
                pl.BlockSpec((240, 256), lambda i: (0, 0)),        # pool1 even|odd select
                pl.BlockSpec((640, 160), lambda i: (0, 0)),        # conv2 fused banded W
                pl.BlockSpec((1, 160), lambda i: (0, 0)),          # conv2 bias
                pl.BlockSpec((160, 256), lambda i: (0, 0)),        # pool2 even|odd select
                pl.BlockSpec((512, 50), lambda i: (0, 0)),         # fc1 W (permuted+padded)
                pl.BlockSpec((1, 50), lambda i: (0, 0)),           # fc1 bias
                pl.BlockSpec((50, 128), lambda i: (0, 0)),         # fc2 W (lane-padded)
                pl.BlockSpec((1, 128), lambda i: (0, 0)),          # fc2 bias (+ -1e30 pad)
            ],
            out_specs=pl.BlockSpec((TB, 128), lambda i: (i, 0)),
        ),
        compiler_params=pltpu.CompilerParams(
            # NOTE: on v7x, verify the batch axis actually shards across both
            # TensorCores; if not, split it explicitly with core_map.
            dimension_semantics=("parallel",),
            vmem_limit_bytes=48 * 1024 * 1024,
        ),
    )(xk, params["w1"], params["b1"], params["s1"], params["w2"], params["b2"],
      params["s2"], params["fc1w"], params["fc1b"], params["fc2w"], params["fc2b"])
    return out[:n, :10]


# ---------------------------------------------------------------------------
# Deterministic init (PyTorch-style uniform(-1/sqrt(fan_in), ..)) + XLA reference
# ---------------------------------------------------------------------------
def init_raw_params(key):
    ks = jax.random.split(key, 8)

    def u(k, shape, fan_in):
        bound = 1.0 / (fan_in ** 0.5)
        return jax.random.uniform(k, shape, jnp.float32, -bound, bound)

    return {
        "conv1_w": u(ks[0], (10, 1, 5, 5), 25), "conv1_b": u(ks[1], (10,), 25),
        "conv2_w": u(ks[2], (20, 10, 5, 5), 250), "conv2_b": u(ks[3], (20,), 250),
        "fc1_w": u(ks[4], (50, 320), 320), "fc1_b": u(ks[5], (50,), 320),
        "fc2_w": u(ks[6], (10, 50), 50), "fc2_b": u(ks[7], (10,), 50),
    }


def reference_forward(raw, x_nchw):
    hp = jax.lax.Precision.HIGHEST
    x = x_nchw.astype(jnp.float32)
    y = jax.lax.conv_general_dilated(
        x, raw["conv1_w"], (1, 1), "VALID",
        dimension_numbers=("NCHW", "OIHW", "NCHW"), precision=hp
    ) + raw["conv1_b"][None, :, None, None]
    y = jax.lax.reduce_window(y, -jnp.inf, jax.lax.max, (1, 1, 2, 2), (1, 1, 2, 2), "VALID")
    y = jnp.maximum(y, 0.0)
    y = jax.lax.conv_general_dilated(
        y, raw["conv2_w"], (1, 1), "VALID",
        dimension_numbers=("NCHW", "OIHW", "NCHW"), precision=hp
    ) + raw["conv2_b"][None, :, None, None]
    y = jax.lax.reduce_window(y, -jnp.inf, jax.lax.max, (1, 1, 2, 2), (1, 1, 2, 2), "VALID")
    y = jnp.maximum(y, 0.0)
    y = y.reshape(y.shape[0], 320)
    y = jnp.maximum(jnp.dot(y, raw["fc1_w"].T, precision=hp) + raw["fc1_b"], 0.0)
    y = jnp.dot(y, raw["fc2_w"].T, precision=hp) + raw["fc2_b"]
    return jax.nn.log_softmax(y, axis=-1)


if __name__ == "__main__":
    key = jax.random.PRNGKey(0)
    pkey, xkey = jax.random.split(key)
    raw = init_raw_params(pkey)
    params = pack_params(raw)

    # SmallNet's fc1(320) implies MNIST-sized 28x28 single-channel input.
    x = jax.random.normal(xkey, (2, 1, 28, 28), dtype=jnp.float32)

    out = jax.jit(smallnet_forward)(params, x)
    out = jax.block_until_ready(out)

    assert out.shape == (2, 10) and out.dtype == jnp.float32
    # log_softmax rows must (log-)normalize to ~0
    assert bool(jnp.all(jnp.abs(logsumexp(out, axis=1)) < 1e-4))
    # cross-check against a plain-XLA f32 reference of the same forward pass
    # (bf16 MXU operands with f32 accumulation -> allow a slightly looser tol)
    ref = reference_forward(raw, x)
    max_err = float(jnp.max(jnp.abs(out - ref)))
    assert bool(jnp.allclose(out, ref, atol=2e-2, rtol=2e-2)), max_err
    print("KERNEL_OK")
</pallas_src>

<mosaic_0001>
module attributes {stable_mosaic.version = 11 : i64} {
  func.func @_smallnet_kernel(%arg0: i32, %arg1: memref<28x32x28xf32, #tpu.memory_space<vmem>>, %arg2: memref<140x240xbf16, #tpu.memory_space<vmem>>, %arg3: memref<1x240xf32, #tpu.memory_space<vmem>>, %arg4: memref<240x256xbf16, #tpu.memory_space<vmem>>, %arg5: memref<640x160xbf16, #tpu.memory_space<vmem>>, %arg6: memref<1x160xf32, #tpu.memory_space<vmem>>, %arg7: memref<160x256xbf16, #tpu.memory_space<vmem>>, %arg8: memref<512x50xbf16, #tpu.memory_space<vmem>>, %arg9: memref<1x50xf32, #tpu.memory_space<vmem>>, %arg10: memref<50x128xbf16, #tpu.memory_space<vmem>>, %arg11: memref<1x128xf32, #tpu.memory_space<vmem>>, %arg12: memref<32x128xf32, #tpu.memory_space<vmem>>) attributes {dimension_semantics = [#tpu.dimension_semantics<parallel>], iteration_bounds = array<i64: 1>, scalar_prefetch = 0 : i64, scratch_operands = 0 : i64, tpu.core_type = #tpu.core_type<tc>, window_params = [{transform_indices = @transform_0, window_bounds = array<i64: 28, 32, 28>}, {pipeline_mode = #tpu.pipeline_mode<synchronous>, transform_indices = @transform_1, window_bounds = array<i64: 140, 240>}, {pipeline_mode = #tpu.pipeline_mode<synchronous>, transform_indices = @transform_2, window_bounds = array<i64: 1, 240>}, {pipeline_mode = #tpu.pipeline_mode<synchronous>, transform_indices = @transform_3, window_bounds = array<i64: 240, 256>}, {pipeline_mode = #tpu.pipeline_mode<synchronous>, transform_indices = @transform_4, window_bounds = array<i64: 640, 160>}, {pipeline_mode = #tpu.pipeline_mode<synchronous>, transform_indices = @transform_5, window_bounds = array<i64: 1, 160>}, {pipeline_mode = #tpu.pipeline_mode<synchronous>, transform_indices = @transform_6, window_bounds = array<i64: 160, 256>}, {pipeline_mode = #tpu.pipeline_mode<synchronous>, transform_indices = @transform_7, window_bounds = array<i64: 512, 50>}, {pipeline_mode = #tpu.pipeline_mode<synchronous>, transform_indices = @transform_8, window_bounds = array<i64: 1, 50>}, {pipeline_mode = #tpu.pipeline_mode<synchronous>, transform_indices = @transform_9, window_bounds = array<i64: 50, 128>}, {pipeline_mode = #tpu.pipeline_mode<synchronous>, transform_indices = @transform_10, window_bounds = array<i64: 1, 128>}, {transform_indices = @transform_11, window_bounds = array<i64: 32, 128>}]} {
    %c0 = arith.constant 0 : index
    %c0_0 = arith.constant 0 : index
    %c0_1 = arith.constant 0 : index
    %0 = vector.load %arg1[%c0, %c0_0, %c0_1] : memref<28x32x28xf32, #tpu.memory_space<vmem>>, vector<28x32x28xf32>
    %1 = vector.extract_strided_slice %0 {offsets = [0, 0, 0], sizes = [24, 32, 28], strides = [1, 1, 1]} : vector<28x32x28xf32> to vector<24x32x28xf32>
    %2 = vector.shape_cast %1 : vector<24x32x28xf32> to vector<768x28xf32>
    %3 = vector.extract_strided_slice %0 {offsets = [1, 0, 0], sizes = [24, 32, 28], strides = [1, 1, 1]} : vector<28x32x28xf32> to vector<24x32x28xf32>
    %4 = vector.shape_cast %3 : vector<24x32x28xf32> to vector<768x28xf32>
    %5 = vector.extract_strided_slice %0 {offsets = [2, 0, 0], sizes = [24, 32, 28], strides = [1, 1, 1]} : vector<28x32x28xf32> to vector<24x32x28xf32>
    %6 = vector.shape_cast %5 : vector<24x32x28xf32> to vector<768x28xf32>
    %7 = vector.extract_strided_slice %0 {offsets = [3, 0, 0], sizes = [24, 32, 28], strides = [1, 1, 1]} : vector<28x32x28xf32> to vector<24x32x28xf32>
    %8 = vector.shape_cast %7 : vector<24x32x28xf32> to vector<768x28xf32>
    %9 = vector.extract_strided_slice %0 {offsets = [4, 0, 0], sizes = [24, 32, 28], strides = [1, 1, 1]} : vector<28x32x28xf32> to vector<24x32x28xf32>
    %10 = vector.shape_cast %9 : vector<24x32x28xf32> to vector<768x28xf32>
    %11 = tpu.concatenate %2, %4, %6, %8, %10 in 1 : vector<768x28xf32>, vector<768x28xf32>, vector<768x28xf32>, vector<768x28xf32>, vector<768x28xf32> -> vector<768x140xf32>
    %12 = arith.truncf %11 : vector<768x140xf32> to vector<768x140xbf16>
    %c0_2 = arith.constant 0 : index
    %c0_3 = arith.constant 0 : index
    %13 = vector.load %arg2[%c0_2, %c0_3] : memref<140x240xbf16, #tpu.memory_space<vmem>>, vector<140x240xbf16>
    %cst = arith.constant dense<0.000000e+00> : vector<768x240xf32>
    %14 = tpu.matmul %12, %13, %cst {dimension_numbers = #tpu.dot_dimension_numbers<[1], [0], [0], [1], [0, 0, 1, 1], [], []>} : vector<768x140xbf16>, vector<140x240xbf16>, vector<768x240xf32> -> vector<768x240xf32>
    %c0_4 = arith.constant 0 : index
    %c0_5 = arith.constant 0 : index
    %15 = vector.load %arg3[%c0_4, %c0_5] : memref<1x240xf32, #tpu.memory_space<vmem>>, vector<1x240xf32>
    %16 = vector.broadcast %15 : vector<1x240xf32> to vector<768x240xf32>
    %17 = arith.addf %14, %16 : vector<768x240xf32>
    %18 = vector.shape_cast %17 : vector<768x240xf32> to vector<12x64x240xf32>
    %19 = vector.extract_strided_slice %18 {offsets = [0, 0, 0], sizes = [12, 32, 240], strides = [1, 1, 1]} : vector<12x64x240xf32> to vector<12x32x240xf32>
    %20 = vector.extract_strided_slice %18 {offsets = [0, 32, 0], sizes = [12, 32, 240], strides = [1, 1, 1]} : vector<12x64x240xf32> to vector<12x32x240xf32>
    %21 = arith.maximumf %19, %20 : vector<12x32x240xf32>
    %22 = vector.shape_cast %21 : vector<12x32x240xf32> to vector<384x240xf32>
    %23 = arith.truncf %22 : vector<384x240xf32> to vector<384x240xbf16>
    %c0_6 = arith.constant 0 : index
    %c0_7 = arith.constant 0 : index
    %24 = vector.load %arg4[%c0_6, %c0_7] : memref<240x256xbf16, #tpu.memory_space<vmem>>, vector<240x256xbf16>
    %cst_8 = arith.constant dense<0.000000e+00> : vector<384x256xf32>
    %25 = tpu.matmul %23, %24, %cst_8 {dimension_numbers = #tpu.dot_dimension_numbers<[1], [0], [0], [1], [0, 0, 1, 1], [], []>} : vector<384x240xbf16>, vector<240x256xbf16>, vector<384x256xf32> -> vector<384x256xf32>
    %26 = vector.extract_strided_slice %25 {offsets = [0, 0], sizes = [384, 128], strides = [1, 1]} : vector<384x256xf32> to vector<384x128xf32>
    %27 = vector.extract_strided_slice %25 {offsets = [0, 128], sizes = [384, 128], strides = [1, 1]} : vector<384x256xf32> to vector<384x128xf32>
    %28 = arith.maximumf %26, %27 : vector<384x128xf32>
    %cst_9 = arith.constant 0.000000e+00 : f32
    %29 = vector.broadcast %cst_9 : f32 to vector<384x128xf32>
    %30 = arith.maximumf %28, %29 : vector<384x128xf32>
    %31 = arith.truncf %30 : vector<384x128xf32> to vector<384x128xbf16>
    %32 = vector.shape_cast %31 : vector<384x128xbf16> to vector<12x32x128xbf16>
    %33 = vector.extract_strided_slice %32 {offsets = [0, 0, 0], sizes = [8, 32, 128], strides = [1, 1, 1]} : vector<12x32x128xbf16> to vector<8x32x128xbf16>
    %34 = vector.shape_cast %33 : vector<8x32x128xbf16> to vector<256x128xbf16>
    %35 = vector.extract_strided_slice %32 {offsets = [1, 0, 0], sizes = [8, 32, 128], strides = [1, 1, 1]} : vector<12x32x128xbf16> to vector<8x32x128xbf16>
    %36 = vector.shape_cast %35 : vector<8x32x128xbf16> to vector<256x128xbf16>
    %37 = vector.extract_strided_slice %32 {offsets = [2, 0, 0], sizes = [8, 32, 128], strides = [1, 1, 1]} : vector<12x32x128xbf16> to vector<8x32x128xbf16>
    %38 = vector.shape_cast %37 : vector<8x32x128xbf16> to vector<256x128xbf16>
    %39 = vector.extract_strided_slice %32 {offsets = [3, 0, 0], sizes = [8, 32, 128], strides = [1, 1, 1]} : vector<12x32x128xbf16> to vector<8x32x128xbf16>
    %40 = vector.shape_cast %39 : vector<8x32x128xbf16> to vector<256x128xbf16>
    %41 = vector.extract_strided_slice %32 {offsets = [4, 0, 0], sizes = [8, 32, 128], strides = [1, 1, 1]} : vector<12x32x128xbf16> to vector<8x32x128xbf16>
    %42 = vector.shape_cast %41 : vector<8x32x128xbf16> to vector<256x128xbf16>
    %43 = tpu.concatenate %34, %36, %38, %40, %42 in 1 : vector<256x128xbf16>, vector<256x128xbf16>, vector<256x128xbf16>, vector<256x128xbf16>, vector<256x128xbf16> -> vector<256x640xbf16>
    %c0_10 = arith.constant 0 : index
    %c0_11 = arith.constant 0 : index
    %44 = vector.load %arg5[%c0_10, %c0_11] : memref<640x160xbf16, #tpu.memory_space<vmem>>, vector<640x160xbf16>
    %cst_12 = arith.constant dense<0.000000e+00> : vector<256x160xf32>
    %45 = tpu.matmul %43, %44, %cst_12 {dimension_numbers = #tpu.dot_dimension_numbers<[1], [0], [0], [1], [0, 0, 1, 1], [], []>} : vector<256x640xbf16>, vector<640x160xbf16>, vector<256x160xf32> -> vector<256x160xf32>
    %c0_13 = arith.constant 0 : index
    %c0_14 = arith.constant 0 : index
    %46 = vector.load %arg6[%c0_13, %c0_14] : memref<1x160xf32, #tpu.memory_space<vmem>>, vector<1x160xf32>
    %47 = vector.broadcast %46 : vector<1x160xf32> to vector<256x160xf32>
    %48 = arith.addf %45, %47 : vector<256x160xf32>
    %49 = vector.shape_cast %48 : vector<256x160xf32> to vector<4x64x160xf32>
    %50 = vector.extract_strided_slice %49 {offsets = [0, 0, 0], sizes = [4, 32, 160], strides = [1, 1, 1]} : vector<4x64x160xf32> to vector<4x32x160xf32>
    %51 = vector.extract_strided_slice %49 {offsets = [0, 32, 0], sizes = [4, 32, 160], strides = [1, 1, 1]} : vector<4x64x160xf32> to vector<4x32x160xf32>
    %52 = arith.maximumf %50, %51 : vector<4x32x160xf32>
    %53 = vector.shape_cast %52 : vector<4x32x160xf32> to vector<128x160xf32>
    %54 = arith.truncf %53 : vector<128x160xf32> to vector<128x160xbf16>
    %c0_15 = arith.constant 0 : index
    %c0_16 = arith.constant 0 : index
    %55 = vector.load %arg7[%c0_15, %c0_16] : memref<160x256xbf16, #tpu.memory_space<vmem>>, vector<160x256xbf16>
    %cst_17 = arith.constant dense<0.000000e+00> : vector<128x256xf32>
    %56 = tpu.matmul %54, %55, %cst_17 {dimension_numbers = #tpu.dot_dimension_numbers<[1], [0], [0], [1], [0, 0, 1, 1], [], []>} : vector<128x160xbf16>, vector<160x256xbf16>, vector<128x256xf32> -> vector<128x256xf32>
    %57 = vector.extract_strided_slice %56 {offsets = [0, 0], sizes = [128, 128], strides = [1, 1]} : vector<128x256xf32> to vector<128x128xf32>
    %58 = vector.extract_strided_slice %56 {offsets = [0, 128], sizes = [128, 128], strides = [1, 1]} : vector<128x256xf32> to vector<128x128xf32>
    %59 = arith.maximumf %57, %58 : vector<128x128xf32>
    %cst_18 = arith.constant 0.000000e+00 : f32
    %60 = vector.broadcast %cst_18 : f32 to vector<128x128xf32>
    %61 = arith.maximumf %59, %60 : vector<128x128xf32>
    %62 = arith.truncf %61 : vector<128x128xf32> to vector<128x128xbf16>
    %63 = vector.shape_cast %62 : vector<128x128xbf16> to vector<4x32x128xbf16>
    %64 = vector.extract_strided_slice %63 {offsets = [0, 0, 0], sizes = [1, 32, 128], strides = [1, 1, 1]} : vector<4x32x128xbf16> to vector<1x32x128xbf16>
    %65 = vector.shape_cast %64 : vector<1x32x128xbf16> to vector<32x128xbf16>
    %66 = vector.extract_strided_slice %63 {offsets = [1, 0, 0], sizes = [1, 32, 128], strides = [1, 1, 1]} : vector<4x32x128xbf16> to vector<1x32x128xbf16>
    %67 = vector.shape_cast %66 : vector<1x32x128xbf16> to vector<32x128xbf16>
    %68 = vector.extract_strided_slice %63 {offsets = [2, 0, 0], sizes = [1, 32, 128], strides = [1, 1, 1]} : vector<4x32x128xbf16> to vector<1x32x128xbf16>
    %69 = vector.shape_cast %68 : vector<1x32x128xbf16> to vector<32x128xbf16>
    %70 = vector.extract_strided_slice %63 {offsets = [3, 0, 0], sizes = [1, 32, 128], strides = [1, 1, 1]} : vector<4x32x128xbf16> to vector<1x32x128xbf16>
    %71 = vector.shape_cast %70 : vector<1x32x128xbf16> to vector<32x128xbf16>
    %72 = tpu.concatenate %65, %67, %69, %71 in 1 : vector<32x128xbf16>, vector<32x128xbf16>, vector<32x128xbf16>, vector<32x128xbf16> -> vector<32x512xbf16>
    %c0_19 = arith.constant 0 : index
    %c0_20 = arith.constant 0 : index
    %73 = vector.load %arg8[%c0_19, %c0_20] : memref<512x50xbf16, #tpu.memory_space<vmem>>, vector<512x50xbf16>
    %cst_21 = arith.constant dense<0.000000e+00> : vector<32x50xf32>
    %74 = tpu.matmul %72, %73, %cst_21 {dimension_numbers = #tpu.dot_dimension_numbers<[1], [0], [0], [1], [0, 0, 1, 1], [], []>} : vector<32x512xbf16>, vector<512x50xbf16>, vector<32x50xf32> -> vector<32x50xf32>
    %c0_22 = arith.constant 0 : index
    %c0_23 = arith.constant 0 : index
    %75 = vector.load %arg9[%c0_22, %c0_23] : memref<1x50xf32, #tpu.memory_space<vmem>>, vector<1x50xf32>
    %76 = vector.broadcast %75 : vector<1x50xf32> to vector<32x50xf32>
    %77 = arith.addf %74, %76 : vector<32x50xf32>
    %cst_24 = arith.constant 0.000000e+00 : f32
    %78 = vector.broadcast %cst_24 : f32 to vector<32x50xf32>
    %79 = arith.maximumf %77, %78 : vector<32x50xf32>
    %80 = arith.truncf %79 : vector<32x50xf32> to vector<32x50xbf16>
    %c0_25 = arith.constant 0 : index
    %c0_26 = arith.constant 0 : index
    %81 = vector.load %arg10[%c0_25, %c0_26] : memref<50x128xbf16, #tpu.memory_space<vmem>>, vector<50x128xbf16>
    %cst_27 = arith.constant dense<0.000000e+00> : vector<32x128xf32>
    %82 = tpu.matmul %80, %81, %cst_27 {dimension_numbers = #tpu.dot_dimension_numbers<[1], [0], [0], [1], [0, 0, 1, 1], [], []>} : vector<32x50xbf16>, vector<50x128xbf16>, vector<32x128xf32> -> vector<32x128xf32>
    %c0_28 = arith.constant 0 : index
    %c0_29 = arith.constant 0 : index
    %83 = vector.load %arg11[%c0_28, %c0_29] : memref<1x128xf32, #tpu.memory_space<vmem>>, vector<1x128xf32>
    %84 = vector.broadcast %83 : vector<1x128xf32> to vector<32x128xf32>
    %85 = arith.addf %82, %84 : vector<32x128xf32>
    %cst_30 = arith.constant dense<0xFF800000> : vector<32xf32>
    %86 = vector.multi_reduction <maximumf>, %85, %cst_30 [1] : vector<32x128xf32> to vector<32xf32>
    %87 = vector.shape_cast %86 : vector<32xf32> to vector<32x1xf32>
    %88 = vector.broadcast %87 : vector<32x1xf32> to vector<32x128xf32>
    %89 = arith.subf %85, %88 : vector<32x128xf32>
    %90 = math.exp %89 : vector<32x128xf32>
    %cst_31 = arith.constant dense<0.000000e+00> : vector<32xf32>
    %91 = vector.multi_reduction <add>, %90, %cst_31 [1] : vector<32x128xf32> to vector<32xf32>
    %92 = vector.shape_cast %91 : vector<32xf32> to vector<32x1xf32>
    %93 = math.log %92 : vector<32x1xf32>
    %94 = vector.broadcast %93 : vector<32x1xf32> to vector<32x128xf32>
    %95 = arith.subf %89, %94 : vector<32x128xf32>
    %c0_32 = arith.constant 0 : index
    %c0_33 = arith.constant 0 : index
    %96 = vector.load %arg12[%c0_32, %c0_33] : memref<32x128xf32, #tpu.memory_space<vmem>>, vector<32x128xf32>
    tpu.vector_store %arg12[%c0_32, %c0_33], %95 {strides = array<i32>} : memref<32x128xf32, #tpu.memory_space<vmem>>, vector<32x128xf32>,
    return
  }
  func.func @transform_0(%arg0: i32) -> (i32, i32, i32) {
    %c0_i32 = arith.constant 0 : i32
    %c0_i32_0 = arith.constant 0 : i32
    %c0_i32_1 = arith.constant 0 : i32
    return %c0_i32, %arg0, %c0_i32_0 : i32, i32, i32
  }
  func.func @transform_1(%arg0: i32) -> (i32, i32) {
    %c0_i32 = arith.constant 0 : i32
    %c0_i32_0 = arith.constant 0 : i32
    %c0_i32_1 = arith.constant 0 : i32
    return %c0_i32, %c0_i32_0 : i32, i32
  }
  func.func @transform_2(%arg0: i32) -> (i32, i32) {
    %c0_i32 = arith.constant 0 : i32
    %c0_i32_0 = arith.constant 0 : i32
    %c0_i32_1 = arith.constant 0 : i32
    return %c0_i32, %c0_i32_0 : i32, i32
  }
  func.func @transform_3(%arg0: i32) -> (i32, i32) {
    %c0_i32 = arith.constant 0 : i32
    %c0_i32_0 = arith.constant 0 : i32
    %c0_i32_1 = arith.constant 0 : i32
    return %c0_i32, %c0_i32_0 : i32, i32
  }
  func.func @transform_4(%arg0: i32) -> (i32, i32) {
    %c0_i32 = arith.constant 0 : i32
    %c0_i32_0 = arith.constant 0 : i32
    %c0_i32_1 = arith.constant 0 : i32
    return %c0_i32, %c0_i32_0 : i32, i32
  }
  func.func @transform_5(%arg0: i32) -> (i32, i32) {
    %c0_i32 = arith.constant 0 : i32
    %c0_i32_0 = arith.constant 0 : i32
    %c0_i32_1 = arith.constant 0 : i32
    return %c0_i32, %c0_i32_0 : i32, i32
  }
  func.func @transform_6(%arg0: i32) -> (i32, i32) {
    %c0_i32 = arith.constant 0 : i32
    %c0_i32_0 = arith.constant 0 : i32
    %c0_i32_1 = arith.constant 0 : i32
    return %c0_i32, %c0_i32_0 : i32, i32
  }
  func.func @transform_7(%arg0: i32) -> (i32, i32) {
    %c0_i32 = arith.constant 0 : i32
    %c0_i32_0 = arith.constant 0 : i32
    %c0_i32_1 = arith.constant 0 : i32
    return %c0_i32, %c0_i32_0 : i32, i32
  }
  func.func @transform_8(%arg0: i32) -> (i32, i32) {
    %c0_i32 = arith.constant 0 : i32
    %c0_i32_0 = arith.constant 0 : i32
    %c0_i32_1 = arith.constant 0 : i32
    return %c0_i32, %c0_i32_0 : i32, i32
  }
  func.func @transform_9(%arg0: i32) -> (i32, i32) {
    %c0_i32 = arith.constant 0 : i32
    %c0_i32_0 = arith.constant 0 : i32
    %c0_i32_1 = arith.constant 0 : i32
    return %c0_i32, %c0_i32_0 : i32, i32
  }
  func.func @transform_10(%arg0: i32) -> (i32, i32) {
    %c0_i32 = arith.constant 0 : i32
    %c0_i32_0 = arith.constant 0 : i32
    %c0_i32_1 = arith.constant 0 : i32
    return %c0_i32, %c0_i32_0 : i32, i32
  }
  func.func @transform_11(%arg0: i32) -> (i32, i32) {
    %c0_i32 = arith.constant 0 : i32
    %c0_i32_0 = arith.constant 0 : i32
    return %arg0, %c0_i32 : i32, i32
  }
}

</mosaic_0001>

<llo_original>
// kernel: smallnet_forward.1
$region0: #{smallnet_forward.1}
  #allocation0 [shape = 'u32[]', space=smem, size = 0x4, offset = 0x4, fixed_abs, tag = 'smem constant byte address 0x4 - core index']
  #allocation1 [shape = 'u32[144,128]{1,0:T(1,128)}', space=vmem, size = 0x12000, scoped, tag = 'internal scratch']
  %s0 = inlined_call_operand.vmem [shape: f32[28,32,28], index: 0, kind: input, shape index: {}]
  %s1 = inlined_call_operand.vmem [shape: bf16[140,240], index: 1, kind: input, shape index: {}]
  %s2 = inlined_call_operand.vmem [shape: f32[1,240], index: 2, kind: input, shape index: {}]
  %s3 = inlined_call_operand.vmem [shape: bf16[240,256], index: 3, kind: input, shape index: {}]
  %s4 = inlined_call_operand.vmem [shape: bf16[640,160], index: 4, kind: input, shape index: {}]
  %s5 = inlined_call_operand.vmem [shape: f32[1,160], index: 5, kind: input, shape index: {}]
  %s6 = inlined_call_operand.vmem [shape: bf16[160,256], index: 6, kind: input, shape index: {}]
  %s7 = inlined_call_operand.vmem [shape: bf16[512,50], index: 7, kind: input, shape index: {}]
  %s8 = inlined_call_operand.vmem [shape: f32[1,50], index: 8, kind: input, shape index: {}]
  %s9 = inlined_call_operand.vmem [shape: bf16[50,128], index: 9, kind: input, shape index: {}]
  %s10 = inlined_call_operand.vmem [shape: f32[1,128], index: 10, kind: input, shape index: {}]
  %s11 = inlined_call_operand.vmem [shape: f32[32,128], index: 11, kind: output, shape index: {}]
  %s12 = sld [smem:[#allocation0]]
  $region54: #{smallnet_forward.1} parent=0
    _
  %s14 = ssub.s32 1, %s12
  %s15 = scalar_select 0, %s14, %s12
  // Predicated region
  $region2: #{smallnet_forward.1} parent=0 // pred_check
    _
  $region3: #{smallnet_forward.1} parent=0 // pred_check_branch
    %17 = sbr.rel (0) target = $region5
  $region4: #{smallnet_forward.1} parent=0 // pred_region
    _
  $region5: #{smallnet_forward.1} parent=0 // pred_fallthru
    _
  // Predicated region
  $region6: #{smallnet_forward.1} parent=0 // pred_check
    _
  $region7: #{smallnet_forward.1} parent=0 // pred_check_branch
    %19 = sbr.rel (0) target = $region9
  $region8: #{smallnet_forward.1} parent=0 // pred_region
    _
  $region9: #{smallnet_forward.1} parent=0 // pred_fallthru
    _
  // Predicated region
  $region10: #{smallnet_forward.1} parent=0 // pred_check
    _
  $region11: #{smallnet_forward.1} parent=0 // pred_check_branch
    %21 = sbr.rel (0) target = $region13
  $region12: #{smallnet_forward.1} parent=0 // pred_region
    _
  $region13: #{smallnet_forward.1} parent=0 // pred_fallthru
    _
  // Predicated region
  $region14: #{smallnet_forward.1} parent=0 // pred_check
    _
  $region15: #{smallnet_forward.1} parent=0 // pred_check_branch
    %23 = sbr.rel (0) target = $region17
  $region16: #{smallnet_forward.1} parent=0 // pred_region
    _
  $region17: #{smallnet_forward.1} parent=0 // pred_fallthru
    _
  // Predicated region
  $region18: #{smallnet_forward.1} parent=0 // pred_check
    _
  $region19: #{smallnet_forward.1} parent=0 // pred_check_branch
    %25 = sbr.rel (0) target = $region21
  $region20: #{smallnet_forward.1} parent=0 // pred_region
    _
  $region21: #{smallnet_forward.1} parent=0 // pred_fallthru
    _
  // Predicated region
  $region22: #{smallnet_forward.1} parent=0 // pred_check
    _
  $region23: #{smallnet_forward.1} parent=0 // pred_check_branch
    %27 = sbr.rel (0) target = $region25
  $region24: #{smallnet_forward.1} parent=0 // pred_region
    _
  $region25: #{smallnet_forward.1} parent=0 // pred_fallthru
    _
  // Predicated region
  $region26: #{smallnet_forward.1} parent=0 // pred_check
    _
  $region27: #{smallnet_forward.1} parent=0 // pred_check_branch
    %29 = sbr.rel (0) target = $region29
  $region28: #{smallnet_forward.1} parent=0 // pred_region
    _
  $region29: #{smallnet_forward.1} parent=0 // pred_fallthru
    _
  // Predicated region
  $region30: #{smallnet_forward.1} parent=0 // pred_check
    _
  $region31: #{smallnet_forward.1} parent=0 // pred_check_branch
    %31 = sbr.rel (0) target = $region33
  $region32: #{smallnet_forward.1} parent=0 // pred_region
    _
  $region33: #{smallnet_forward.1} parent=0 // pred_fallthru
    _
  // Predicated region
  $region34: #{smallnet_forward.1} parent=0 // pred_check
    _
  $region35: #{smallnet_forward.1} parent=0 // pred_check_branch
    %33 = sbr.rel (0) target = $region37
  $region36: #{smallnet_forward.1} parent=0 // pred_region
    _
  $region37: #{smallnet_forward.1} parent=0 // pred_fallthru
    _
  // Predicated region
  $region38: #{smallnet_forward.1} parent=0 // pred_check
    _
  $region39: #{smallnet_forward.1} parent=0 // pred_check_branch
    %35 = sbr.rel (0) target = $region41
  $region40: #{smallnet_forward.1} parent=0 // pred_region
    _
  $region41: #{smallnet_forward.1} parent=0 // pred_fallthru
    _
  // Predicated region
  $region42: #{smallnet_forward.1} parent=0 // pred_check
    _
  $region43: #{smallnet_forward.1} parent=0 // pred_check_branch
    %37 = sbr.rel (0) target = $region45
  $region44: #{smallnet_forward.1} parent=0 // pred_region
    _
  $region45: #{smallnet_forward.1} parent=0 // pred_fallthru
    _
  %v39 = vld [vmem:[%s0] sm:$0xff]
  %v40 = vld [vmem:[%s0 + $0x8] sm:$0xff]
  %v41 = vld [vmem:[%s0 + $0x10] sm:$0xff]
  %v42 = vld [vmem:[%s0 + $0x18] sm:$0xff]
  %v43 = vld [vmem:[%s0 + $0x20] sm:$0xff]
  %v44 = vld [vmem:[%s0 + $0x28] sm:$0xff]
  %v45 = vld [vmem:[%s0 + $0x30] sm:$0xff]
  %v46 = vld [vmem:[%s0 + $0x38] sm:$0xff]
  %v47 = vld [vmem:[%s0 + $0x40] sm:$0xff]
  %v48 = vld [vmem:[%s0 + $0x48] sm:$0xff]
  %v49 = vld [vmem:[%s0 + $0x50] sm:$0xff]
  %v50 = vld [vmem:[%s0 + $0x58] sm:$0xff]
  %v51 = vld [vmem:[%s0 + $0x60] sm:$0xff]
  %v52 = vld [vmem:[%s0 + $0x68] sm:$0xff]
  %v53 = vld [vmem:[%s0 + $0x70] sm:$0xff]
  %v54 = vld [vmem:[%s0 + $0x78] sm:$0xff]
  %v55 = vld [vmem:[%s0 + $0x80] sm:$0xff]
  %v56 = vld [vmem:[%s0 + $0x88] sm:$0xff]
  %v57 = vld [vmem:[%s0 + $0x90] sm:$0xff]
  %v58 = vld [vmem:[%s0 + $0x98] sm:$0xff]
  %v59 = vld [vmem:[%s0 + $0xa0] sm:$0xff]
  %v60 = vld [vmem:[%s0 + $0xa8] sm:$0xff]
  %v61 = vld [vmem:[%s0 + $0xb0] sm:$0xff]
  %v62 = vld [vmem:[%s0 + $0xb8] sm:$0xff]
  %v63 = vld [vmem:[%s0 + $0xc0] sm:$0xff]
  %v64 = vld [vmem:[%s0 + $0xc8] sm:$0xff]
  %v65 = vld [vmem:[%s0 + $0xd0] sm:$0xff]
  %v66 = vld [vmem:[%s0 + $0xd8] sm:$0xff]
  %v67 = vld [vmem:[%s0 + $0xe0] sm:$0xff]
  %v68 = vld [vmem:[%s0 + $0xe8] sm:$0xff]
  %v69 = vld [vmem:[%s0 + $0xf0] sm:$0xff]
  %v70 = vld [vmem:[%s0 + $0xf8] sm:$0xff]
  %v71 = vld [vmem:[%s0 + $0x100] sm:$0xff]
  %v72 = vld [vmem:[%s0 + $0x108] sm:$0xff]
  %v73 = vld [vmem:[%s0 + $0x110] sm:$0xff]
  %v74 = vld [vmem:[%s0 + $0x118] sm:$0xff]
  %v75 = vld [vmem:[%s0 + $0x120] sm:$0xff]
  %v76 = vld [vmem:[%s0 + $0x128] sm:$0xff]
  %v77 = vld [vmem:[%s0 + $0x130] sm:$0xff]
  %v78 = vld [vmem:[%s0 + $0x138] sm:$0xff]
  %v79 = vld [vmem:[%s0 + $0x140] sm:$0xff]
  %v80 = vld [vmem:[%s0 + $0x148] sm:$0xff]
  %v81 = vld [vmem:[%s0 + $0x150] sm:$0xff]
  %v82 = vld [vmem:[%s0 + $0x158] sm:$0xff]
  %v83 = vld [vmem:[%s0 + $0x160] sm:$0xff]
  %v84 = vld [vmem:[%s0 + $0x168] sm:$0xff]
  %v85 = vld [vmem:[%s0 + $0x170] sm:$0xff]
  %v86 = vld [vmem:[%s0 + $0x178] sm:$0xff]
  %v87 = vld [vmem:[%s0 + $0x180] sm:$0xff]
  %v88 = vld [vmem:[%s0 + $0x188] sm:$0xff]
  %v89 = vld [vmem:[%s0 + $0x190] sm:$0xff]
  %v90 = vld [vmem:[%s0 + $0x198] sm:$0xff]
  %v91 = vld [vmem:[%s0 + $0x1a0] sm:$0xff]
  %v92 = vld [vmem:[%s0 + $0x1a8] sm:$0xff]
  %v93 = vld [vmem:[%s0 + $0x1b0] sm:$0xff]
  %v94 = vld [vmem:[%s0 + $0x1b8] sm:$0xff]
  %v95 = vld [vmem:[%s0 + $0x1c0] sm:$0xff]
  %v96 = vld [vmem:[%s0 + $0x1c8] sm:$0xff]
  %v97 = vld [vmem:[%s0 + $0x1d0] sm:$0xff]
  %v98 = vld [vmem:[%s0 + $0x1d8] sm:$0xff]
  %v99 = vld [vmem:[%s0 + $0x1e0] sm:$0xff]
  %v100 = vld [vmem:[%s0 + $0x1e8] sm:$0xff]
  %v101 = vld [vmem:[%s0 + $0x1f0] sm:$0xff]
  %v102 = vld [vmem:[%s0 + $0x1f8] sm:$0xff]
  %v103 = vld [vmem:[%s0 + $0x200] sm:$0xff]
  %v104 = vld [vmem:[%s0 + $0x208] sm:$0xff]
  %v105 = vld [vmem:[%s0 + $0x210] sm:$0xff]
  %v106 = vld [vmem:[%s0 + $0x218] sm:$0xff]
  %v107 = vld [vmem:[%s0 + $0x220] sm:$0xff]
  %v108 = vld [vmem:[%s0 + $0x228] sm:$0xff]
  %v109 = vld [vmem:[%s0 + $0x230] sm:$0xff]
  %v110 = vld [vmem:[%s0 + $0x238] sm:$0xff]
  %v111 = vld [vmem:[%s0 + $0x240] sm:$0xff]
  %v112 = vld [vmem:[%s0 + $0x248] sm:$0xff]
  %v113 = vld [vmem:[%s0 + $0x250] sm:$0xff]
  %v114 = vld [vmem:[%s0 + $0x258] sm:$0xff]
  %v115 = vld [vmem:[%s0 + $0x260] sm:$0xff]
  %v116 = vld [vmem:[%s0 + $0x268] sm:$0xff]
  %v117 = vld [vmem:[%s0 + $0x270] sm:$0xff]
  %v118 = vld [vmem:[%s0 + $0x278] sm:$0xff]
  %v119 = vld [vmem:[%s0 + $0x280] sm:$0xff]
  %v120 = vld [vmem:[%s0 + $0x288] sm:$0xff]
  %v121 = vld [vmem:[%s0 + $0x290] sm:$0xff]
  %v122 = vld [vmem:[%s0 + $0x298] sm:$0xff]
  %v123 = vld [vmem:[%s0 + $0x2a0] sm:$0xff]
  %v124 = vld [vmem:[%s0 + $0x2a8] sm:$0xff]
  %v125 = vld [vmem:[%s0 + $0x2b0] sm:$0xff]
  %v126 = vld [vmem:[%s0 + $0x2b8] sm:$0xff]
  %v127 = vld [vmem:[%s0 + $0x2c0] sm:$0xff]
  %v128 = vld [vmem:[%s0 + $0x2c8] sm:$0xff]
  %v129 = vld [vmem:[%s0 + $0x2d0] sm:$0xff]
  %v130 = vld [vmem:[%s0 + $0x2d8] sm:$0xff]
  %v131 = vld [vmem:[%s0 + $0x2e0] sm:$0xff]
  %v132 = vld [vmem:[%s0 + $0x2e8] sm:$0xff]
  %v133 = vld [vmem:[%s0 + $0x2f0] sm:$0xff]
  %v134 = vld [vmem:[%s0 + $0x2f8] sm:$0xff]
  %v135 = vld [vmem:[%s0 + $0x300] sm:$0xff]
  %v136 = vld [vmem:[%s0 + $0x308] sm:$0xff]
  %v137 = vld [vmem:[%s0 + $0x310] sm:$0xff]
  %v138 = vld [vmem:[%s0 + $0x318] sm:$0xff]
  %v139 = vld [vmem:[%s0 + $0x320] sm:$0xff]
  %v140 = vld [vmem:[%s0 + $0x328] sm:$0xff]
  %v141 = vld [vmem:[%s0 + $0x330] sm:$0xff]
  %v142 = vld [vmem:[%s0 + $0x338] sm:$0xff]
  %v143 = vld [vmem:[%s0 + $0x340] sm:$0xff]
  %v144 = vld [vmem:[%s0 + $0x348] sm:$0xff]
  %v145 = vld [vmem:[%s0 + $0x350] sm:$0xff]
  %v146 = vld [vmem:[%s0 + $0x358] sm:$0xff]
  %v147 = vld [vmem:[%s0 + $0x360] sm:$0xff]
  %v148 = vld [vmem:[%s0 + $0x368] sm:$0xff]
  %v149 = vld [vmem:[%s0 + $0x370] sm:$0xff]
  %v150 = vld [vmem:[%s0 + $0x378] sm:$0xff]
  %247 = vrot.lane.b32.xlu0 %v43, 28
  %v248 = vpop.permute.xlu0 %247
  %249 = vrot.lane.b32.xlu0 %v44, 28
  %v250 = vpop.permute.xlu0 %249
  %251 = vrot.lane.b32.xlu0 %v45, 28
  %v252 = vpop.permute.xlu0 %251
  %253 = vrot.lane.b32.xlu0 %v46, 28
  %v254 = vpop.permute.xlu0 %253
  %255 = vrot.lane.b32.xlu0 %v47, 28
  %v256 = vpop.permute.xlu0 %255
  %257 = vrot.lane.b32.xlu0 %v48, 28
  %v258 = vpop.permute.xlu0 %257
  %259 = vrot.lane.b32.xlu0 %v49, 28
  %v260 = vpop.permute.xlu0 %259
  %261 = vrot.lane.b32.xlu0 %v50, 28
  %v262 = vpop.permute.xlu0 %261
  %263 = vrot.lane.b32.xlu0 %v51, 28
  %v264 = vpop.permute.xlu0 %263
  %265 = vrot.lane.b32.xlu0 %v52, 28
  %v266 = vpop.permute.xlu0 %265
  %267 = vrot.lane.b32.xlu0 %v53, 28
  %v268 = vpop.permute.xlu0 %267
  %269 = vrot.lane.b32.xlu0 %v54, 28
  %v270 = vpop.permute.xlu0 %269
  %271 = vrot.lane.b32.xlu0 %v55, 28
  %v272 = vpop.permute.xlu0 %271
  %273 = vrot.lane.b32.xlu0 %v56, 28
  %v274 = vpop.permute.xlu0 %273
  %275 = vrot.lane.b32.xlu0 %v57, 28
  %v276 = vpop.permute.xlu0 %275
  %277 = vrot.lane.b32.xlu0 %v58, 28
  %v278 = vpop.permute.xlu0 %277
  %279 = vrot.lane.b32.xlu0 %v59, 28
  %v280 = vpop.permute.xlu0 %279
  %281 = vrot.lane.b32.xlu0 %v60, 28
  %v282 = vpop.permute.xlu0 %281
  %283 = vrot.lane.b32.xlu0 %v61, 28
  %v284 = vpop.permute.xlu0 %283
  %285 = vrot.lane.b32.xlu0 %v62, 28
  %v286 = vpop.permute.xlu0 %285
  %287 = vrot.lane.b32.xlu0 %v63, 28
  %v288 = vpop.permute.xlu0 %287
  %289 = vrot.lane.b32.xlu0 %v64, 28
  %v290 = vpop.permute.xlu0 %289
  %291 = vrot.lane.b32.xlu0 %v65, 28
  %v292 = vpop.permute.xlu0 %291
  %293 = vrot.lane.b32.xlu0 %v66, 28
  %v294 = vpop.permute.xlu0 %293
  %295 = vrot.lane.b32.xlu0 %v67, 28
  %v296 = vpop.permute.xlu0 %295
  %297 = vrot.lane.b32.xlu0 %v68, 28
  %v298 = vpop.permute.xlu0 %297
  %299 = vrot.lane.b32.xlu0 %v69, 28
  %v300 = vpop.permute.xlu0 %299
  %301 = vrot.lane.b32.xlu0 %v70, 28
  %v302 = vpop.permute.xlu0 %301
  %303 = vrot.lane.b32.xlu0 %v71, 28
  %v304 = vpop.permute.xlu0 %303
  %305 = vrot.lane.b32.xlu0 %v72, 28
  %v306 = vpop.permute.xlu0 %305
  %307 = vrot.lane.b32.xlu0 %v73, 28
  %v308 = vpop.permute.xlu0 %307
  %309 = vrot.lane.b32.xlu0 %v74, 28
  %v310 = vpop.permute.xlu0 %309
  %311 = vrot.lane.b32.xlu0 %v75, 28
  %v312 = vpop.permute.xlu0 %311
  %313 = vrot.lane.b32.xlu0 %v76, 28
  %v314 = vpop.permute.xlu0 %313
  %315 = vrot.lane.b32.xlu0 %v77, 28
  %v316 = vpop.permute.xlu0 %315
  %317 = vrot.lane.b32.xlu0 %v78, 28
  %v318 = vpop.permute.xlu0 %317
  %319 = vrot.lane.b32.xlu0 %v79, 28
  %v320 = vpop.permute.xlu0 %319
  %321 = vrot.lane.b32.xlu0 %v80, 28
  %v322 = vpop.permute.xlu0 %321
  %323 = vrot.lane.b32.xlu0 %v81, 28
  %v324 = vpop.permute.xlu0 %323
  %325 = vrot.lane.b32.xlu0 %v82, 28
  %v326 = vpop.permute.xlu0 %325
  %327 = vrot.lane.b32.xlu0 %v83, 28
  %v328 = vpop.permute.xlu0 %327
  %329 = vrot.lane.b32.xlu0 %v84, 28
  %v330 = vpop.permute.xlu0 %329
  %331 = vrot.lane.b32.xlu0 %v85, 28
  %v332 = vpop.permute.xlu0 %331
  %333 = vrot.lane.b32.xlu0 %v86, 28
  %v334 = vpop.permute.xlu0 %333
  %335 = vrot.lane.b32.xlu0 %v87, 28
  %v336 = vpop.permute.xlu0 %335
  %337 = vrot.lane.b32.xlu0 %v88, 28
  %v338 = vpop.permute.xlu0 %337
  %339 = vrot.lane.b32.xlu0 %v89, 28
  %v340 = vpop.permute.xlu0 %339
  %341 = vrot.lane.b32.xlu0 %v90, 28
  %v342 = vpop.permute.xlu0 %341
  %343 = vrot.lane.b32.xlu0 %v91, 28
  %v344 = vpop.permute.xlu0 %343
  %345 = vrot.lane.b32.xlu0 %v92, 28
  %v346 = vpop.permute.xlu0 %345
  %347 = vrot.lane.b32.xlu0 %v93, 28
  %v348 = vpop.permute.xlu0 %347
  %349 = vrot.lane.b32.xlu0 %v94, 28
  %v350 = vpop.permute.xlu0 %349
  %351 = vrot.lane.b32.xlu0 %v95, 28
  %v352 = vpop.permute.xlu0 %351
  %353 = vrot.lane.b32.xlu0 %v96, 28
  %v354 = vpop.permute.xlu0 %353
  %355 = vrot.lane.b32.xlu0 %v97, 28
  %v356 = vpop.permute.xlu0 %355
  %357 = vrot.lane.b32.xlu0 %v98, 28
  %v358 = vpop.permute.xlu0 %357
  %359 = vrot.lane.b32.xlu0 %v99, 28
  %v360 = vpop.permute.xlu0 %359
  %361 = vrot.lane.b32.xlu0 %v100, 28
  %v362 = vpop.permute.xlu0 %361
  %363 = vrot.lane.b32.xlu0 %v101, 28
  %v364 = vpop.permute.xlu0 %363
  %365 = vrot.lane.b32.xlu0 %v102, 28
  %v366 = vpop.permute.xlu0 %365
  %367 = vrot.lane.b32.xlu0 %v103, 28
  %v368 = vpop.permute.xlu0 %367
  %369 = vrot.lane.b32.xlu0 %v104, 28
  %v370 = vpop.permute.xlu0 %369
  %371 = vrot.lane.b32.xlu0 %v105, 28
  %v372 = vpop.permute.xlu0 %371
  %373 = vrot.lane.b32.xlu0 %v106, 28
  %v374 = vpop.permute.xlu0 %373
  %375 = vrot.lane.b32.xlu0 %v107, 28
  %v376 = vpop.permute.xlu0 %375
  %377 = vrot.lane.b32.xlu0 %v108, 28
  %v378 = vpop.permute.xlu0 %377
  %379 = vrot.lane.b32.xlu0 %v109, 28
  %v380 = vpop.permute.xlu0 %379
  %381 = vrot.lane.b32.xlu0 %v110, 28
  %v382 = vpop.permute.xlu0 %381
  %383 = vrot.lane.b32.xlu0 %v111, 28
  %v384 = vpop.permute.xlu0 %383
  %385 = vrot.lane.b32.xlu0 %v112, 28
  %v386 = vpop.permute.xlu0 %385
  %387 = vrot.lane.b32.xlu0 %v113, 28
  %v388 = vpop.permute.xlu0 %387
  %389 = vrot.lane.b32.xlu0 %v114, 28
  %v390 = vpop.permute.xlu0 %389
  %391 = vrot.lane.b32.xlu0 %v115, 28
  %v392 = vpop.permute.xlu0 %391
  %393 = vrot.lane.b32.xlu0 %v116, 28
  %v394 = vpop.permute.xlu0 %393
  %395 = vrot.lane.b32.xlu0 %v117, 28
  %v396 = vpop.permute.xlu0 %395
  %397 = vrot.lane.b32.xlu0 %v118, 28
  %v398 = vpop.permute.xlu0 %397
  %399 = vrot.lane.b32.xlu0 %v119, 28
  %v400 = vpop.permute.xlu0 %399
  %401 = vrot.lane.b32.xlu0 %v120, 28
  %v402 = vpop.permute.xlu0 %401
  %403 = vrot.lane.b32.xlu0 %v121, 28
  %v404 = vpop.permute.xlu0 %403
  %405 = vrot.lane.b32.xlu0 %v122, 28
  %v406 = vpop.permute.xlu0 %405
  %407 = vrot.lane.b32.xlu0 %v123, 28
  %v408 = vpop.permute.xlu0 %407
  %409 = vrot.lane.b32.xlu0 %v124, 28
  %v410 = vpop.permute.xlu0 %409
  %411 = vrot.lane.b32.xlu0 %v125, 28
  %v412 = vpop.permute.xlu0 %411
  %413 = vrot.lane.b32.xlu0 %v126, 28
  %v414 = vpop.permute.xlu0 %413
  %415 = vrot.lane.b32.xlu0 %v127, 28
  %v416 = vpop.permute.xlu0 %415
  %417 = vrot.lane.b32.xlu0 %v128, 28
  %v418 = vpop.permute.xlu0 %417
  %419 = vrot.lane.b32.xlu0 %v129, 28
  %v420 = vpop.permute.xlu0 %419
  %421 = vrot.lane.b32.xlu0 %v130, 28
  %v422 = vpop.permute.xlu0 %421
  %423 = vrot.lane.b32.xlu0 %v131, 28
  %v424 = vpop.permute.xlu0 %423
  %425 = vrot.lane.b32.xlu0 %v132, 28
  %v426 = vpop.permute.xlu0 %425
  %427 = vrot.lane.b32.xlu0 %v133, 28
  %v428 = vpop.permute.xlu0 %427
  %429 = vrot.lane.b32.xlu0 %v134, 28
  %v430 = vpop.permute.xlu0 %429
  %431 = vrot.lane.b32.xlu0 %v135, 28
  %v432 = vpop.permute.xlu0 %431
  %433 = vrot.lane.b32.xlu0 %v136, 28
  %v434 = vpop.permute.xlu0 %433
  %435 = vrot.lane.b32.xlu0 %v137, 28
  %v436 = vpop.permute.xlu0 %435
  %437 = vrot.lane.b32.xlu0 %v138, 28
  %v438 = vpop.permute.xlu0 %437
  %539 = vrot.lane.b32.xlu0 %v47, 56
  %v540 = vpop.permute.xlu0 %539
  %541 = vrot.lane.b32.xlu0 %v48, 56
  %v542 = vpop.permute.xlu0 %541
  %543 = vrot.lane.b32.xlu0 %v49, 56
  %v544 = vpop.permute.xlu0 %543
  %545 = vrot.lane.b32.xlu0 %v50, 56
  %v546 = vpop.permute.xlu0 %545
  %547 = vrot.lane.b32.xlu0 %v51, 56
  %v548 = vpop.permute.xlu0 %547
  %549 = vrot.lane.b32.xlu0 %v52, 56
  %v550 = vpop.permute.xlu0 %549
  %551 = vrot.lane.b32.xlu0 %v53, 56
  %v552 = vpop.permute.xlu0 %551
  %553 = vrot.lane.b32.xlu0 %v54, 56
  %v554 = vpop.permute.xlu0 %553
  %555 = vrot.lane.b32.xlu0 %v55, 56
  %v556 = vpop.permute.xlu0 %555
  %557 = vrot.lane.b32.xlu0 %v56, 56
  %v558 = vpop.permute.xlu0 %557
  %559 = vrot.lane.b32.xlu0 %v57, 56
  %v560 = vpop.permute.xlu0 %559
  %561 = vrot.lane.b32.xlu0 %v58, 56
  %v562 = vpop.permute.xlu0 %561
  %563 = vrot.lane.b32.xlu0 %v59, 56
  %v564 = vpop.permute.xlu0 %563
  %565 = vrot.lane.b32.xlu0 %v60, 56
  %v566 = vpop.permute.xlu0 %565
  %567 = vrot.lane.b32.xlu0 %v61, 56
  %v568 = vpop.permute.xlu0 %567
  %569 = vrot.lane.b32.xlu0 %v62, 56
  %v570 = vpop.permute.xlu0 %569
  %571 = vrot.lane.b32.xlu0 %v63, 56
  %v572 = vpop.permute.xlu0 %571
  %573 = vrot.lane.b32.xlu0 %v64, 56
  %v574 = vpop.permute.xlu0 %573
  %575 = vrot.lane.b32.xlu0 %v65, 56
  %v576 = vpop.permute.xlu0 %575
  %577 = vrot.lane.b32.xlu0 %v66, 56
  %v578 = vpop.permute.xlu0 %577
  %579 = vrot.lane.b32.xlu0 %v67, 56
  %v580 = vpop.permute.xlu0 %579
  %581 = vrot.lane.b32.xlu0 %v68, 56
  %v582 = vpop.permute.xlu0 %581
  %583 = vrot.lane.b32.xlu0 %v69, 56
  %v584 = vpop.permute.xlu0 %583
  %585 = vrot.lane.b32.xlu0 %v70, 56
  %v586 = vpop.permute.xlu0 %585
  %587 = vrot.lane.b32.xlu0 %v71, 56
  %v588 = vpop.permute.xlu0 %587
  %589 = vrot.lane.b32.xlu0 %v72, 56
  %v590 = vpop.permute.xlu0 %589
  %591 = vrot.lane.b32.xlu0 %v73, 56
  %v592 = vpop.permute.xlu0 %591
  %593 = vrot.lane.b32.xlu0 %v74, 56
  %v594 = vpop.permute.xlu0 %593
  %595 = vrot.lane.b32.xlu0 %v75, 56
  %v596 = vpop.permute.xlu0 %595
  %597 = vrot.lane.b32.xlu0 %v76, 56
  %v598 = vpop.permute.xlu0 %597
  %599 = vrot.lane.b32.xlu0 %v77, 56
  %v600 = vpop.permute.xlu0 %599
  %601 = vrot.lane.b32.xlu0 %v78, 56
  %v602 = vpop.permute.xlu0 %601
  %603 = vrot.lane.b32.xlu0 %v79, 56
  %v604 = vpop.permute.xlu0 %603
  %605 = vrot.lane.b32.xlu0 %v80, 56
  %v606 = vpop.permute.xlu0 %605
  %607 = vrot.lane.b32.xlu0 %v81, 56
  %v608 = vpop.permute.xlu0 %607
  %609 = vrot.lane.b32.xlu0 %v82, 56
  %v610 = vpop.permute.xlu0 %609
  %611 = vrot.lane.b32.xlu0 %v83, 56
  %v612 = vpop.permute.xlu0 %611
  %613 = vrot.lane.b32.xlu0 %v84, 56
  %v614 = vpop.permute.xlu0 %613
  %615 = vrot.lane.b32.xlu0 %v85, 56
  %v616 = vpop.permute.xlu0 %615
  %617 = vrot.lane.b32.xlu0 %v86, 56
  %v618 = vpop.permute.xlu0 %617
  %619 = vrot.lane.b32.xlu0 %v87, 56
  %v620 = vpop.permute.xlu0 %619
  %621 = vrot.lane.b32.xlu0 %v88, 56
  %v622 = vpop.permute.xlu0 %621
  %623 = vrot.lane.b32.xlu0 %v89, 56
  %v624 = vpop.permute.xlu0 %623
  %625 = vrot.lane.b32.xlu0 %v90, 56
  %v626 = vpop.permute.xlu0 %625
  %627 = vrot.lane.b32.xlu0 %v91, 56
  %v628 = vpop.permute.xlu0 %627
  %629 = vrot.lane.b32.xlu0 %v92, 56
  %v630 = vpop.permute.xlu0 %629
  %631 = vrot.lane.b32.xlu0 %v93, 56
  %v632 = vpop.permute.xlu0 %631
  %633 = vrot.lane.b32.xlu0 %v94, 56
  %v634 = vpop.permute.xlu0 %633
  %635 = vrot.lane.b32.xlu0 %v95, 56
  %v636 = vpop.permute.xlu0 %635
  %637 = vrot.lane.b32.xlu0 %v96, 56
  %v638 = vpop.permute.xlu0 %637
  %639 = vrot.lane.b32.xlu0 %v97, 56
  %v640 = vpop.permute.xlu0 %639
  %641 = vrot.lane.b32.xlu0 %v98, 56
  %v642 = vpop.permute.xlu0 %641
  %643 = vrot.lane.b32.xlu0 %v99, 56
  %v644 = vpop.permute.xlu0 %643
  %645 = vrot.lane.b32.xlu0 %v100, 56
  %v646 = vpop.permute.xlu0 %645
  %647 = vrot.lane.b32.xlu0 %v101, 56
  %v648 = vpop.permute.xlu0 %647
  %649 = vrot.lane.b32.xlu0 %v102, 56
  %v650 = vpop.permute.xlu0 %649
  %651 = vrot.lane.b32.xlu0 %v103, 56
  %v652 = vpop.permute.xlu0 %651
  %653 = vrot.lane.b32.xlu0 %v104, 56
  %v654 = vpop.permute.xlu0 %653
  %655 = vrot.lane.b32.xlu0 %v105, 56
  %v656 = vpop.permute.xlu0 %655
  %657 = vrot.lane.b32.xlu0 %v106, 56
  %v658 = vpop.permute.xlu0 %657
  %659 = vrot.lane.b32.xlu0 %v107, 56
  %v660 = vpop.permute.xlu0 %659
  %661 = vrot.lane.b32.xlu0 %v108, 56
  %v662 = vpop.permute.xlu0 %661
  %663 = vrot.lane.b32.xlu0 %v109, 56
  %v664 = vpop.permute.xlu0 %663
  %665 = vrot.lane.b32.xlu0 %v110, 56
  %v666 = vpop.permute.xlu0 %665
  %667 = vrot.lane.b32.xlu0 %v111, 56
  %v668 = vpop.permute.xlu0 %667
  %669 = vrot.lane.b32.xlu0 %v112, 56
  %v670 = vpop.permute.xlu0 %669
  %671 = vrot.lane.b32.xlu0 %v113, 56
  %v672 = vpop.permute.xlu0 %671
  %673 = vrot.lane.b32.xlu0 %v114, 56
  %v674 = vpop.permute.xlu0 %673
  %675 = vrot.lane.b32.xlu0 %v115, 56
  %v676 = vpop.permute.xlu0 %675
  %677 = vrot.lane.b32.xlu0 %v116, 56
  %v678 = vpop.permute.xlu0 %677
  %679 = vrot.lane.b32.xlu0 %v117, 56
  %v680 = vpop.permute.xlu0 %679
  %681 = vrot.lane.b32.xlu0 %v118, 56
  %v682 = vpop.permute.xlu0 %681
  %683 = vrot.lane.b32.xlu0 %v119, 56
  %v684 = vpop.permute.xlu0 %683
  %685 = vrot.lane.b32.xlu0 %v120, 56
  %v686 = vpop.permute.xlu0 %685
  %687 = vrot.lane.b32.xlu0 %v121, 56
  %v688 = vpop.permute.xlu0 %687
  %689 = vrot.lane.b32.xlu0 %v122, 56
  %v690 = vpop.permute.xlu0 %689
  %691 = vrot.lane.b32.xlu0 %v123, 56
  %v692 = vpop.permute.xlu0 %691
  %693 = vrot.lane.b32.xlu0 %v124, 56
  %v694 = vpop.permute.xlu0 %693
  %695 = vrot.lane.b32.xlu0 %v125, 56
  %v696 = vpop.permute.xlu0 %695
  %697 = vrot.lane.b32.xlu0 %v126, 56
  %v698 = vpop.permute.xlu0 %697
  %699 = vrot.lane.b32.xlu0 %v127, 56
  %v700 = vpop.permute.xlu0 %699
  %701 = vrot.lane.b32.xlu0 %v128, 56
  %v702 = vpop.permute.xlu0 %701
  %703 = vrot.lane.b32.xlu0 %v129, 56
  %v704 = vpop.permute.xlu0 %703
  %705 = vrot.lane.b32.xlu0 %v130, 56
  %v706 = vpop.permute.xlu0 %705
  %707 = vrot.lane.b32.xlu0 %v131, 56
  %v708 = vpop.permute.xlu0 %707
  %709 = vrot.lane.b32.xlu0 %v132, 56
  %v710 = vpop.permute.xlu0 %709
  %711 = vrot.lane.b32.xlu0 %v133, 56
  %v712 = vpop.permute.xlu0 %711
  %713 = vrot.lane.b32.xlu0 %v134, 56
  %v714 = vpop.permute.xlu0 %713
  %715 = vrot.lane.b32.xlu0 %v135, 56
  %v716 = vpop.permute.xlu0 %715
  %717 = vrot.lane.b32.xlu0 %v136, 56
  %v718 = vpop.permute.xlu0 %717
  %719 = vrot.lane.b32.xlu0 %v137, 56
  %v720 = vpop.permute.xlu0 %719
  %721 = vrot.lane.b32.xlu0 %v138, 56
  %v722 = vpop.permute.xlu0 %721
  %723 = vrot.lane.b32.xlu0 %v139, 56
  %v724 = vpop.permute.xlu0 %723
  %725 = vrot.lane.b32.xlu0 %v140, 56
  %v726 = vpop.permute.xlu0 %725
  %727 = vrot.lane.b32.xlu0 %v141, 56
  %v728 = vpop.permute.xlu0 %727
  %729 = vrot.lane.b32.xlu0 %v142, 56
  %v730 = vpop.permute.xlu0 %729
  %831 = vrot.lane.b32.xlu0 %v51, 84
  %v832 = vpop.permute.xlu0 %831
  %833 = vrot.lane.b32.xlu0 %v52, 84
  %v834 = vpop.permute.xlu0 %833
  %835 = vrot.lane.b32.xlu0 %v53, 84
  %v836 = vpop.permute.xlu0 %835
  %837 = vrot.lane.b32.xlu0 %v54, 84
  %v838 = vpop.permute.xlu0 %837
  %839 = vrot.lane.b32.xlu0 %v55, 84
  %v840 = vpop.permute.xlu0 %839
  %841 = vrot.lane.b32.xlu0 %v56, 84
  %v842 = vpop.permute.xlu0 %841
  %843 = vrot.lane.b32.xlu0 %v57, 84
  %v844 = vpop.permute.xlu0 %843
  %845 = vrot.lane.b32.xlu0 %v58, 84
  %v846 = vpop.permute.xlu0 %845
  %847 = vrot.lane.b32.xlu0 %v59, 84
  %v848 = vpop.permute.xlu0 %847
  %849 = vrot.lane.b32.xlu0 %v60, 84
  %v850 = vpop.permute.xlu0 %849
  %851 = vrot.lane.b32.xlu0 %v61, 84
  %v852 = vpop.permute.xlu0 %851
  %853 = vrot.lane.b32.xlu0 %v62, 84
  %v854 = vpop.permute.xlu0 %853
  %855 = vrot.lane.b32.xlu0 %v63, 84
  %v856 = vpop.permute.xlu0 %855
  %857 = vrot.lane.b32.xlu0 %v64, 84
  %v858 = vpop.permute.xlu0 %857
  %859 = vrot.lane.b32.xlu0 %v65, 84
  %v860 = vpop.permute.xlu0 %859
  %861 = vrot.lane.b32.xlu0 %v66, 84
  %v862 = vpop.permute.xlu0 %861
  %863 = vrot.lane.b32.xlu0 %v67, 84
  %v864 = vpop.permute.xlu0 %863
  %865 = vrot.lane.b32.xlu0 %v68, 84
  %v866 = vpop.permute.xlu0 %865
  %867 = vrot.lane.b32.xlu0 %v69, 84
  %v868 = vpop.permute.xlu0 %867
  %869 = vrot.lane.b32.xlu0 %v70, 84
  %v870 = vpop.permute.xlu0 %869
  %871 = vrot.lane.b32.xlu0 %v71, 84
  %v872 = vpop.permute.xlu0 %871
  %873 = vrot.lane.b32.xlu0 %v72, 84
  %v874 = vpop.permute.xlu0 %873
  %875 = vrot.lane.b32.xlu0 %v73, 84
  %v876 = vpop.permute.xlu0 %875
  %877 = vrot.lane.b32.xlu0 %v74, 84
  %v878 = vpop.permute.xlu0 %877
  %879 = vrot.lane.b32.xlu0 %v75, 84
  %v880 = vpop.permute.xlu0 %879
  %881 = vrot.lane.b32.xlu0 %v76, 84
  %v882 = vpop.permute.xlu0 %881
  %883 = vrot.lane.b32.xlu0 %v77, 84
  %v884 = vpop.permute.xlu0 %883
  %885 = vrot.lane.b32.xlu0 %v78, 84
  %v886 = vpop.permute.xlu0 %885
  %887 = vrot.lane.b32.xlu0 %v79, 84
  %v888 = vpop.permute.xlu0 %887
  %889 = vrot.lane.b32.xlu0 %v80, 84
  %v890 = vpop.permute.xlu0 %889
  %891 = vrot.lane.b32.xlu0 %v81, 84
  %v892 = vpop.permute.xlu0 %891
  %893 = vrot.lane.b32.xlu0 %v82, 84
  %v894 = vpop.permute.xlu0 %893
  %895 = vrot.lane.b32.xlu0 %v83, 84
  %v896 = vpop.permute.xlu0 %895
  %897 = vrot.lane.b32.xlu0 %v84, 84
  %v898 = vpop.permute.xlu0 %897
  %899 = vrot.lane.b32.xlu0 %v85, 84
  %v900 = vpop.permute.xlu0 %899
  %901 = vrot.lane.b32.xlu0 %v86, 84
  %v902 = vpop.permute.xlu0 %901
  %903 = vrot.lane.b32.xlu0 %v87, 84
  %v904 = vpop.permute.xlu0 %903
  %905 = vrot.lane.b32.xlu0 %v88, 84
  %v906 = vpop.permute.xlu0 %905
  %907 = vrot.lane.b32.xlu0 %v89, 84
  %v908 = vpop.permute.xlu0 %907
  %909 = vrot.lane.b32.xlu0 %v90, 84
  %v910 = vpop.permute.xlu0 %909
  %911 = vrot.lane.b32.xlu0 %v91, 84
  %v912 = vpop.permute.xlu0 %911
  %913 = vrot.lane.b32.xlu0 %v92, 84
  %v914 = vpop.permute.xlu0 %913
  %915 = vrot.lane.b32.xlu0 %v93, 84
  %v916 = vpop.permute.xlu0 %915
  %917 = vrot.lane.b32.xlu0 %v94, 84
  %v918 = vpop.permute.xlu0 %917
  %919 = vrot.lane.b32.xlu0 %v95, 84
  %v920 = vpop.permute.xlu0 %919
  %921 = vrot.lane.b32.xlu0 %v96, 84
  %v922 = vpop.permute.xlu0 %921
  %923 = vrot.lane.b32.xlu0 %v97, 84
  %v924 = vpop.permute.xlu0 %923
  %925 = vrot.lane.b32.xlu0 %v98, 84
  %v926 = vpop.permute.xlu0 %925
  %927 = vrot.lane.b32.xlu0 %v99, 84
  %v928 = vpop.permute.xlu0 %927
  %929 = vrot.lane.b32.xlu0 %v100, 84
  %v930 = vpop.permute.xlu0 %929
  %931 = vrot.lane.b32.xlu0 %v101, 84
  %v932 = vpop.permute.xlu0 %931
  %933 = vrot.lane.b32.xlu0 %v102, 84
  %v934 = vpop.permute.xlu0 %933
  %935 = vrot.lane.b32.xlu0 %v103, 84
  %v936 = vpop.permute.xlu0 %935
  %937 = vrot.lane.b32.xlu0 %v104, 84
  %v938 = vpop.permute.xlu0 %937
  %939 = vrot.lane.b32.xlu0 %v105, 84
  %v940 = vpop.permute.xlu0 %939
  %941 = vrot.lane.b32.xlu0 %v106, 84
  %v942 = vpop.permute.xlu0 %941
  %943 = vrot.lane.b32.xlu0 %v107, 84
  %v944 = vpop.permute.xlu0 %943
  %945 = vrot.lane.b32.xlu0 %v108, 84
  %v946 = vpop.permute.xlu0 %945
  %947 = vrot.lane.b32.xlu0 %v109, 84
  %v948 = vpop.permute.xlu0 %947
  %949 = vrot.lane.b32.xlu0 %v110, 84
  %v950 = vpop.permute.xlu0 %949
  %951 = vrot.lane.b32.xlu0 %v111, 84
  %v952 = vpop.permute.xlu0 %951
  %953 = vrot.lane.b32.xlu0 %v112, 84
  %v954 = vpop.permute.xlu0 %953
  %955 = vrot.lane.b32.xlu0 %v113, 84
  %v956 = vpop.permute.xlu0 %955
  %957 = vrot.lane.b32.xlu0 %v114, 84
  %v958 = vpop.permute.xlu0 %957
  %959 = vrot.lane.b32.xlu0 %v115, 84
  %v960 = vpop.permute.xlu0 %959
  %961 = vrot.lane.b32.xlu0 %v116, 84
  %v962 = vpop.permute.xlu0 %961
  %963 = vrot.lane.b32.xlu0 %v117, 84
  %v964 = vpop.permute.xlu0 %963
  %965 = vrot.lane.b32.xlu0 %v118, 84
  %v966 = vpop.permute.xlu0 %965
  %967 = vrot.lane.b32.xlu0 %v119, 84
  %v968 = vpop.permute.xlu0 %967
  %969 = vrot.lane.b32.xlu0 %v120, 84
  %v970 = vpop.permute.xlu0 %969
  %971 = vrot.lane.b32.xlu0 %v121, 84
  %v972 = vpop.permute.xlu0 %971
  %973 = vrot.lane.b32.xlu0 %v122, 84
  %v974 = vpop.permute.xlu0 %973
  %975 = vrot.lane.b32.xlu0 %v123, 84
  %v976 = vpop.permute.xlu0 %975
  %977 = vrot.lane.b32.xlu0 %v124, 84
  %v978 = vpop.permute.xlu0 %977
  %979 = vrot.lane.b32.xlu0 %v125, 84
  %v980 = vpop.permute.xlu0 %979
  %981 = vrot.lane.b32.xlu0 %v126, 84
  %v982 = vpop.permute.xlu0 %981
  %983 = vrot.lane.b32.xlu0 %v127, 84
  %v984 = vpop.permute.xlu0 %983
  %985 = vrot.lane.b32.xlu0 %v128, 84
  %v986 = vpop.permute.xlu0 %985
  %987 = vrot.lane.b32.xlu0 %v129, 84
  %v988 = vpop.permute.xlu0 %987
  %989 = vrot.lane.b32.xlu0 %v130, 84
  %v990 = vpop.permute.xlu0 %989
  %991 = vrot.lane.b32.xlu0 %v131, 84
  %v992 = vpop.permute.xlu0 %991
  %993 = vrot.lane.b32.xlu0 %v132, 84
  %v994 = vpop.permute.xlu0 %993
  %995 = vrot.lane.b32.xlu0 %v133, 84
  %v996 = vpop.permute.xlu0 %995
  %997 = vrot.lane.b32.xlu0 %v134, 84
  %v998 = vpop.permute.xlu0 %997
  %999 = vrot.lane.b32.xlu0 %v135, 84
  %v1000 = vpop.permute.xlu0 %999
  %1001 = vrot.lane.b32.xlu0 %v136, 84
  %v1002 = vpop.permute.xlu0 %1001
  %1003 = vrot.lane.b32.xlu0 %v137, 84
  %v1004 = vpop.permute.xlu0 %1003
  %1005 = vrot.lane.b32.xlu0 %v138, 84
  %v1006 = vpop.permute.xlu0 %1005
  %1007 = vrot.lane.b32.xlu0 %v139, 84
  %v1008 = vpop.permute.xlu0 %1007
  %1009 = vrot.lane.b32.xlu0 %v140, 84
  %v1010 = vpop.permute.xlu0 %1009
  %1011 = vrot.lane.b32.xlu0 %v141, 84
  %v1012 = vpop.permute.xlu0 %1011
  %1013 = vrot.lane.b32.xlu0 %v142, 84
  %v1014 = vpop.permute.xlu0 %1013
  %1015 = vrot.lane.b32.xlu0 %v143, 84
  %v1016 = vpop.permute.xlu0 %1015
  %1017 = vrot.lane.b32.xlu0 %v144, 84
  %v1018 = vpop.permute.xlu0 %1017
  %1019 = vrot.lane.b32.xlu0 %v145, 84
  %v1020 = vpop.permute.xlu0 %1019
  %1021 = vrot.lane.b32.xlu0 %v146, 84
  %v1022 = vpop.permute.xlu0 %1021
  %1123 = vrot.lane.b32.xlu0 %v55, 112
  %v1124 = vpop.permute.xlu0 %1123
  %1125 = vrot.lane.b32.xlu0 %v56, 112
  %v1126 = vpop.permute.xlu0 %1125
  %1127 = vrot.lane.b32.xlu0 %v57, 112
  %v1128 = vpop.permute.xlu0 %1127
  %1129 = vrot.lane.b32.xlu0 %v58, 112
  %v1130 = vpop.permute.xlu0 %1129
  %1131 = vrot.lane.b32.xlu0 %v59, 112
  %v1132 = vpop.permute.xlu0 %1131
  %1133 = vrot.lane.b32.xlu0 %v60, 112
  %v1134 = vpop.permute.xlu0 %1133
  %1135 = vrot.lane.b32.xlu0 %v61, 112
  %v1136 = vpop.permute.xlu0 %1135
  %1137 = vrot.lane.b32.xlu0 %v62, 112
  %v1138 = vpop.permute.xlu0 %1137
  %1139 = vrot.lane.b32.xlu0 %v63, 112
  %v1140 = vpop.permute.xlu0 %1139
  %1141 = vrot.lane.b32.xlu0 %v64, 112
  %v1142 = vpop.permute.xlu0 %1141
  %1143 = vrot.lane.b32.xlu0 %v65, 112
  %v1144 = vpop.permute.xlu0 %1143
  %1145 = vrot.lane.b32.xlu0 %v66, 112
  %v1146 = vpop.permute.xlu0 %1145
  %1147 = vrot.lane.b32.xlu0 %v67, 112
  %v1148 = vpop.permute.xlu0 %1147
  %1149 = vrot.lane.b32.xlu0 %v68, 112
  %v1150 = vpop.permute.xlu0 %1149
  %1151 = vrot.lane.b32.xlu0 %v69, 112
  %v1152 = vpop.permute.xlu0 %1151
  %1153 = vrot.lane.b32.xlu0 %v70, 112
  %v1154 = vpop.permute.xlu0 %1153
  %1155 = vrot.lane.b32.xlu0 %v71, 112
  %v1156 = vpop.permute.xlu0 %1155
  %1157 = vrot.lane.b32.xlu0 %v72, 112
  %v1158 = vpop.permute.xlu0 %1157
  %1159 = vrot.lane.b32.xlu0 %v73, 112
  %v1160 = vpop.permute.xlu0 %1159
  %1161 = vrot.lane.b32.xlu0 %v74, 112
  %v1162 = vpop.permute.xlu0 %1161
  %1163 = vrot.lane.b32.xlu0 %v75, 112
  %v1164 = vpop.permute.xlu0 %1163
  %1165 = vrot.lane.b32.xlu0 %v76, 112
  %v1166 = vpop.permute.xlu0 %1165
  %1167 = vrot.lane.b32.xlu0 %v77, 112
  %v1168 = vpop.permute.xlu0 %1167
  %1169 = vrot.lane.b32.xlu0 %v78, 112
  %v1170 = vpop.permute.xlu0 %1169
  %1171 = vrot.lane.b32.xlu0 %v79, 112
  %v1172 = vpop.permute.xlu0 %1171
  %1173 = vrot.lane.b32.xlu0 %v80, 112
  %v1174 = vpop.permute.xlu0 %1173
  %1175 = vrot.lane.b32.xlu0 %v81, 112
  %v1176 = vpop.permute.xlu0 %1175
  %1177 = vrot.lane.b32.xlu0 %v82, 112
  %v1178 = vpop.permute.xlu0 %1177
  %1179 = vrot.lane.b32.xlu0 %v83, 112
  %v1180 = vpop.permute.xlu0 %1179
  %1181 = vrot.lane.b32.xlu0 %v84, 112
  %v1182 = vpop.permute.xlu0 %1181
  %1183 = vrot.lane.b32.xlu0 %v85, 112
  %v1184 = vpop.permute.xlu0 %1183
  %1185 = vrot.lane.b32.xlu0 %v86, 112
  %v1186 = vpop.permute.xlu0 %1185
  %1187 = vrot.lane.b32.xlu0 %v87, 112
  %v1188 = vpop.permute.xlu0 %1187
  %1189 = vrot.lane.b32.xlu0 %v88, 112
  %v1190 = vpop.permute.xlu0 %1189
  %1191 = vrot.lane.b32.xlu0 %v89, 112
  %v1192 = vpop.permute.xlu0 %1191
  %1193 = vrot.lane.b32.xlu0 %v90, 112
  %v1194 = vpop.permute.xlu0 %1193
  %1195 = vrot.lane.b32.xlu0 %v91, 112
  %v1196 = vpop.permute.xlu0 %1195
  %1197 = vrot.lane.b32.xlu0 %v92, 112
  %v1198 = vpop.permute.xlu0 %1197
  %1199 = vrot.lane.b32.xlu0 %v93, 112
  %v1200 = vpop.permute.xlu0 %1199
  %1201 = vrot.lane.b32.xlu0 %v94, 112
  %v1202 = vpop.permute.xlu0 %1201
  %1203 = vrot.lane.b32.xlu0 %v95, 112
  %v1204 = vpop.permute.xlu0 %1203
  %1205 = vrot.lane.b32.xlu0 %v96, 112
  %v1206 = vpop.permute.xlu0 %1205
  %1207 = vrot.lane.b32.xlu0 %v97, 112
  %v1208 = vpop.permute.xlu0 %1207
  %1209 = vrot.lane.b32.xlu0 %v98, 112
  %v1210 = vpop.permute.xlu0 %1209
  %1211 = vrot.lane.b32.xlu0 %v99, 112
  %v1212 = vpop.permute.xlu0 %1211
  %1213 = vrot.lane.b32.xlu0 %v100, 112
  %v1214 = vpop.permute.xlu0 %1213
  %1215 = vrot.lane.b32.xlu0 %v101, 112
  %v1216 = vpop.permute.xlu0 %1215
  %1217 = vrot.lane.b32.xlu0 %v102, 112
  %v1218 = vpop.permute.xlu0 %1217
  %1219 = vrot.lane.b32.xlu0 %v103, 112
  %v1220 = vpop.permute.xlu0 %1219
  %1221 = vrot.lane.b32.xlu0 %v104, 112
  %v1222 = vpop.permute.xlu0 %1221
  %1223 = vrot.lane.b32.xlu0 %v105, 112
  %v1224 = vpop.permute.xlu0 %1223
  %1225 = vrot.lane.b32.xlu0 %v106, 112
  %v1226 = vpop.permute.xlu0 %1225
  %1227 = vrot.lane.b32.xlu0 %v107, 112
  %v1228 = vpop.permute.xlu0 %1227
  %1229 = vrot.lane.b32.xlu0 %v108, 112
  %v1230 = vpop.permute.xlu0 %1229
  %1231 = vrot.lane.b32.xlu0 %v109, 112
  %v1232 = vpop.permute.xlu0 %1231
  %1233 = vrot.lane.b32.xlu0 %v110, 112
  %v1234 = vpop.permute.xlu0 %1233
  %1235 = vrot.lane.b32.xlu0 %v111, 112
  %v1236 = vpop.permute.xlu0 %1235
  %1237 = vrot.lane.b32.xlu0 %v112, 112
  %v1238 = vpop.permute.xlu0 %1237
  %1239 = vrot.lane.b32.xlu0 %v113, 112
  %v1240 = vpop.permute.xlu0 %1239
  %1241 = vrot.lane.b32.xlu0 %v114, 112
  %v1242 = vpop.permute.xlu0 %1241
  %1243 = vrot.lane.b32.xlu0 %v115, 112
  %v1244 = vpop.permute.xlu0 %1243
  %1245 = vrot.lane.b32.xlu0 %v116, 112
  %v1246 = vpop.permute.xlu0 %1245
  %1247 = vrot.lane.b32.xlu0 %v117, 112
  %v1248 = vpop.permute.xlu0 %1247
  %1249 = vrot.lane.b32.xlu0 %v118, 112
  %v1250 = vpop.permute.xlu0 %1249
  %1251 = vrot.lane.b32.xlu0 %v119, 112
  %v1252 = vpop.permute.xlu0 %1251
  %1253 = vrot.lane.b32.xlu0 %v120, 112
  %v1254 = vpop.permute.xlu0 %1253
  %1255 = vrot.lane.b32.xlu0 %v121, 112
  %v1256 = vpop.permute.xlu0 %1255
  %1257 = vrot.lane.b32.xlu0 %v122, 112
  %v1258 = vpop.permute.xlu0 %1257
  %1259 = vrot.lane.b32.xlu0 %v123, 112
  %v1260 = vpop.permute.xlu0 %1259
  %1261 = vrot.lane.b32.xlu0 %v124, 112
  %v1262 = vpop.permute.xlu0 %1261
  %1263 = vrot.lane.b32.xlu0 %v125, 112
  %v1264 = vpop.permute.xlu0 %1263
  %1265 = vrot.lane.b32.xlu0 %v126, 112
  %v1266 = vpop.permute.xlu0 %1265
  %1267 = vrot.lane.b32.xlu0 %v127, 112
  %v1268 = vpop.permute.xlu0 %1267
  %1269 = vrot.lane.b32.xlu0 %v128, 112
  %v1270 = vpop.permute.xlu0 %1269
  %1271 = vrot.lane.b32.xlu0 %v129, 112
  %v1272 = vpop.permute.xlu0 %1271
  %1273 = vrot.lane.b32.xlu0 %v130, 112
  %v1274 = vpop.permute.xlu0 %1273
  %1275 = vrot.lane.b32.xlu0 %v131, 112
  %v1276 = vpop.permute.xlu0 %1275
  %1277 = vrot.lane.b32.xlu0 %v132, 112
  %v1278 = vpop.permute.xlu0 %1277
  %1279 = vrot.lane.b32.xlu0 %v133, 112
  %v1280 = vpop.permute.xlu0 %1279
  %1281 = vrot.lane.b32.xlu0 %v134, 112
  %v1282 = vpop.permute.xlu0 %1281
  %1283 = vrot.lane.b32.xlu0 %v135, 112
  %v1284 = vpop.permute.xlu0 %1283
  %1285 = vrot.lane.b32.xlu0 %v136, 112
  %v1286 = vpop.permute.xlu0 %1285
  %1287 = vrot.lane.b32.xlu0 %v137, 112
  %v1288 = vpop.permute.xlu0 %1287
  %1289 = vrot.lane.b32.xlu0 %v138, 112
  %v1290 = vpop.permute.xlu0 %1289
  %1291 = vrot.lane.b32.xlu0 %v139, 112
  %v1292 = vpop.permute.xlu0 %1291
  %1293 = vrot.lane.b32.xlu0 %v140, 112
  %v1294 = vpop.permute.xlu0 %1293
  %1295 = vrot.lane.b32.xlu0 %v141, 112
  %v1296 = vpop.permute.xlu0 %1295
  %1297 = vrot.lane.b32.xlu0 %v142, 112
  %v1298 = vpop.permute.xlu0 %1297
  %1299 = vrot.lane.b32.xlu0 %v143, 112
  %v1300 = vpop.permute.xlu0 %1299
  %1301 = vrot.lane.b32.xlu0 %v144, 112
  %v1302 = vpop.permute.xlu0 %1301
  %1303 = vrot.lane.b32.xlu0 %v145, 112
  %v1304 = vpop.permute.xlu0 %1303
  %1305 = vrot.lane.b32.xlu0 %v146, 112
  %v1306 = vpop.permute.xlu0 %1305
  %1307 = vrot.lane.b32.xlu0 %v147, 112
  %v1308 = vpop.permute.xlu0 %1307
  %1309 = vrot.lane.b32.xlu0 %v148, 112
  %v1310 = vpop.permute.xlu0 %1309
  %1311 = vrot.lane.b32.xlu0 %v149, 112
  %v1312 = vpop.permute.xlu0 %1311
  %1313 = vrot.lane.b32.xlu0 %v150, 112
  %v1314 = vpop.permute.xlu0 %1313
  %vm1411 = vcmask 228352
  %v1412 = vsel %vm1411, %v39, %v248
  %v1413 = vsel %vm1411, %v40, %v250
  %v1414 = vsel %vm1411, %v41, %v252
  %v1415 = vsel %vm1411, %v42, %v254
  %v1416 = vsel %vm1411, %v43, %v256
  %v1417 = vsel %vm1411, %v44, %v258
  %v1418 = vsel %vm1411, %v45, %v260
  %v1419 = vsel %vm1411, %v46, %v262
  %v1420 = vsel %vm1411, %v47, %v264
  %v1421 = vsel %vm1411, %v48, %v266
  %v1422 = vsel %vm1411, %v49, %v268
  %v1423 = vsel %vm1411, %v50, %v270
  %v1424 = vsel %vm1411, %v51, %v272
  %v1425 = vsel %vm1411, %v52, %v274
  %v1426 = vsel %vm1411, %v53, %v276
  %v1427 = vsel %vm1411, %v54, %v278
  %v1428 = vsel %vm1411, %v55, %v280
  %v1429 = vsel %vm1411, %v56, %v282
  %v1430 = vsel %vm1411, %v57, %v284
  %v1431 = vsel %vm1411, %v58, %v286
  %v1432 = vsel %vm1411, %v59, %v288
  %v1433 = vsel %vm1411, %v60, %v290
  %v1434 = vsel %vm1411, %v61, %v292
  %v1435 = vsel %vm1411, %v62, %v294
  %v1436 = vsel %vm1411, %v63, %v296
  %v1437 = vsel %vm1411, %v64, %v298
  %v1438 = vsel %vm1411, %v65, %v300
  %v1439 = vsel %vm1411, %v66, %v302
  %v1440 = vsel %vm1411, %v67, %v304
  %v1441 = vsel %vm1411, %v68, %v306
  %v1442 = vsel %vm1411, %v69, %v308
  %v1443 = vsel %vm1411, %v70, %v310
  %v1444 = vsel %vm1411, %v71, %v312
  %v1445 = vsel %vm1411, %v72, %v314
  %v1446 = vsel %vm1411, %v73, %v316
  %v1447 = vsel %vm1411, %v74, %v318
  %v1448 = vsel %vm1411, %v75, %v320
  %v1449 = vsel %vm1411, %v76, %v322
  %v1450 = vsel %vm1411, %v77, %v324
  %v1451 = vsel %vm1411, %v78, %v326
  %v1452 = vsel %vm1411, %v79, %v328
  %v1453 = vsel %vm1411, %v80, %v330
  %v1454 = vsel %vm1411, %v81, %v332
  %v1455 = vsel %vm1411, %v82, %v334
  %v1456 = vsel %vm1411, %v83, %v336
  %v1457 = vsel %vm1411, %v84, %v338
  %v1458 = vsel %vm1411, %v85, %v340
  %v1459 = vsel %vm1411, %v86, %v342
  %v1460 = vsel %vm1411, %v87, %v344
  %v1461 = vsel %vm1411, %v88, %v346
  %v1462 = vsel %vm1411, %v89, %v348
  %v1463 = vsel %vm1411, %v90, %v350
  %v1464 = vsel %vm1411, %v91, %v352
  %v1465 = vsel %vm1411, %v92, %v354
  %v1466 = vsel %vm1411, %v93, %v356
  %v1467 = vsel %vm1411, %v94, %v358
  %v1468 = vsel %vm1411, %v95, %v360
  %v1469 = vsel %vm1411, %v96, %v362
  %v1470 = vsel %vm1411, %v97, %v364
  %v1471 = vsel %vm1411, %v98, %v366
  %v1472 = vsel %vm1411, %v99, %v368
  %v1473 = vsel %vm1411, %v100, %v370
  %v1474 = vsel %vm1411, %v101, %v372
  %v1475 = vsel %vm1411, %v102, %v374
  %v1476 = vsel %vm1411, %v103, %v376
  %v1477 = vsel %vm1411, %v104, %v378
  %v1478 = vsel %vm1411, %v105, %v380
  %v1479 = vsel %vm1411, %v106, %v382
  %v1480 = vsel %vm1411, %v107, %v384
  %v1481 = vsel %vm1411, %v108, %v386
  %v1482 = vsel %vm1411, %v109, %v388
  %v1483 = vsel %vm1411, %v110, %v390
  %v1484 = vsel %vm1411, %v111, %v392
  %v1485 = vsel %vm1411, %v112, %v394
  %v1486 = vsel %vm1411, %v113, %v396
  %v1487 = vsel %vm1411, %v114, %v398
  %v1488 = vsel %vm1411, %v115, %v400
  %v1489 = vsel %vm1411, %v116, %v402
  %v1490 = vsel %vm1411, %v117, %v404
  %v1491 = vsel %vm1411, %v118, %v406
  %v1492 = vsel %vm1411, %v119, %v408
  %v1493 = vsel %vm1411, %v120, %v410
  %v1494 = vsel %vm1411, %v121, %v412
  %v1495 = vsel %vm1411, %v122, %v414
  %v1496 = vsel %vm1411, %v123, %v416
  %v1497 = vsel %vm1411, %v124, %v418
  %v1498 = vsel %vm1411, %v125, %v420
  %v1499 = vsel %vm1411, %v126, %v422
  %v1500 = vsel %vm1411, %v127, %v424
  %v1501 = vsel %vm1411, %v128, %v426
  %v1502 = vsel %vm1411, %v129, %v428
  %v1503 = vsel %vm1411, %v130, %v430
  %v1504 = vsel %vm1411, %v131, %v432
  %v1505 = vsel %vm1411, %v132, %v434
  %v1506 = vsel %vm1411, %v133, %v436
  %v1507 = vsel %vm1411, %v134, %v438
  %vm1508 = vcmask 457728
  %v1509 = vsel %vm1508, %v1412, %v540
  %v1510 = vsel %vm1508, %v1413, %v542
  %v1511 = vsel %vm1508, %v1414, %v544
  %v1512 = vsel %vm1508, %v1415, %v546
  %v1513 = vsel %vm1508, %v1416, %v548
  %v1514 = vsel %vm1508, %v1417, %v550
  %v1515 = vsel %vm1508, %v1418, %v552
  %v1516 = vsel %vm1508, %v1419, %v554
  %v1517 = vsel %vm1508, %v1420, %v556
  %v1518 = vsel %vm1508, %v1421, %v558
  %v1519 = vsel %vm1508, %v1422, %v560
  %v1520 = vsel %vm1508, %v1423, %v562
  %v1521 = vsel %vm1508, %v1424, %v564
  %v1522 = vsel %vm1508, %v1425, %v566
  %v1523 = vsel %vm1508, %v1426, %v568
  %v1524 = vsel %vm1508, %v1427, %v570
  %v1525 = vsel %vm1508, %v1428, %v572
  %v1526 = vsel %vm1508, %v1429, %v574
  %v1527 = vsel %vm1508, %v1430, %v576
  %v1528 = vsel %vm1508, %v1431, %v578
  %v1529 = vsel %vm1508, %v1432, %v580
  %v1530 = vsel %vm1508, %v1433, %v582
  %v1531 = vsel %vm1508, %v1434, %v584
  %v1532 = vsel %vm1508, %v1435, %v586
  %v1533 = vsel %vm1508, %v1436, %v588
  %v1534 = vsel %vm1508, %v1437, %v590
  %v1535 = vsel %vm1508, %v1438, %v592
  %v1536 = vsel %vm1508, %v1439, %v594
  %v1537 = vsel %vm1508, %v1440, %v596
  %v1538 = vsel %vm1508, %v1441, %v598
  %v1539 = vsel %vm1508, %v1442, %v600
  %v1540 = vsel %vm1508, %v1443, %v602
  %v1541 = vsel %vm1508, %v1444, %v604
  %v1542 = vsel %vm1508, %v1445, %v606
  %v1543 = vsel %vm1508, %v1446, %v608
  %v1544 = vsel %vm1508, %v1447, %v610
  %v1545 = vsel %vm1508, %v1448, %v612
  %v1546 = vsel %vm1508, %v1449, %v614
  %v1547 = vsel %vm1508, %v1450, %v616
  %v1548 = vsel %vm1508, %v1451, %v618
  %v1549 = vsel %vm1508, %v1452, %v620
  %v1550 = vsel %vm1508, %v1453, %v622
  %v1551 = vsel %vm1508, %v1454, %v624
  %v1552 = vsel %vm1508, %v1455, %v626
  %v1553 = vsel %vm1508, %v1456, %v628
  %v1554 = vsel %vm1508, %v1457, %v630
  %v1555 = vsel %vm1508, %v1458, %v632
  %v1556 = vsel %vm1508, %v1459, %v634
  %v1557 = vsel %vm1508, %v1460, %v636
  %v1558 = vsel %vm1508, %v1461, %v638
  %v1559 = vsel %vm1508, %v1462, %v640
  %v1560 = vsel %vm1508, %v1463, %v642
  %v1561 = vsel %vm1508, %v1464, %v644
  %v1562 = vsel %vm1508, %v1465, %v646
  %v1563 = vsel %vm1508, %v1466, %v648
  %v1564 = vsel %vm1508, %v1467, %v650
  %v1565 = vsel %vm1508, %v1468, %v652
  %v1566 = vsel %vm1508, %v1469, %v654
  %v1567 = vsel %vm1508, %v1470, %v656
  %v1568 = vsel %vm1508, %v1471, %v658
  %v1569 = vsel %vm1508, %v1472, %v660
  %v1570 = vsel %vm1508, %v1473, %v662
  %v1571 = vsel %vm1508, %v1474, %v664
  %v1572 = vsel %vm1508, %v1475, %v666
  %v1573 = vsel %vm1508, %v1476, %v668
  %v1574 = vsel %vm1508, %v1477, %v670
  %v1575 = vsel %vm1508, %v1478, %v672
  %v1576 = vsel %vm1508, %v1479, %v674
  %v1577 = vsel %vm1508, %v1480, %v676
  %v1578 = vsel %vm1508, %v1481, %v678
  %v1579 = vsel %vm1508, %v1482, %v680
  %v1580 = vsel %vm1508, %v1483, %v682
  %v1581 = vsel %vm1508, %v1484, %v684
  %v1582 = vsel %vm1508, %v1485, %v686
  %v1583 = vsel %vm1508, %v1486, %v688
  %v1584 = vsel %vm1508, %v1487, %v690
  %v1585 = vsel %vm1508, %v1488, %v692
  %v1586 = vsel %vm1508, %v1489, %v694
  %v1587 = vsel %vm1508, %v1490, %v696
  %v1588 = vsel %vm1508, %v1491, %v698
  %v1589 = vsel %vm1508, %v1492, %v700
  %v1590 = vsel %vm1508, %v1493, %v702
  %v1591 = vsel %vm1508, %v1494, %v704
  %v1592 = vsel %vm1508, %v1495, %v706
  %v1593 = vsel %vm1508, %v1496, %v708
  %v1594 = vsel %vm1508, %v1497, %v710
  %v1595 = vsel %vm1508, %v1498, %v712
  %v1596 = vsel %vm1508, %v1499, %v714
  %v1597 = vsel %vm1508, %v1500, %v716
  %v1598 = vsel %vm1508, %v1501, %v718
  %v1599 = vsel %vm1508, %v1502, %v720
  %v1600 = vsel %vm1508, %v1503, %v722
  %v1601 = vsel %vm1508, %v1504, %v724
  %v1602 = vsel %vm1508, %v1505, %v726
  %v1603 = vsel %vm1508, %v1506, %v728
  %v1604 = vsel %vm1508, %v1507, %v730
  %vm1605 = vcmask 687104
  %v1606 = vsel %vm1605, %v1509, %v832
  %v1607 = vsel %vm1605, %v1510, %v834
  %v1608 = vsel %vm1605, %v1511, %v836
  %v1609 = vsel %vm1605, %v1512, %v838
  %v1610 = vsel %vm1605, %v1513, %v840
  %v1611 = vsel %vm1605, %v1514, %v842
  %v1612 = vsel %vm1605, %v1515, %v844
  %v1613 = vsel %vm1605, %v1516, %v846
  %v1614 = vsel %vm1605, %v1517, %v848
  %v1615 = vsel %vm1605, %v1518, %v850
  %v1616 = vsel %vm1605, %v1519, %v852
  %v1617 = vsel %vm1605, %v1520, %v854
  %v1618 = vsel %vm1605, %v1521, %v856
  %v1619 = vsel %vm1605, %v1522, %v858
  %v1620 = vsel %vm1605, %v1523, %v860
  %v1621 = vsel %vm1605, %v1524, %v862
  %v1622 = vsel %vm1605, %v1525, %v864
  %v1623 = vsel %vm1605, %v1526, %v866
  %v1624 = vsel %vm1605, %v1527, %v868
  %v1625 = vsel %vm1605, %v1528, %v870
  %v1626 = vsel %vm1605, %v1529, %v872
  %v1627 = vsel %vm1605, %v1530, %v874
  %v1628 = vsel %vm1605, %v1531, %v876
  %v1629 = vsel %vm1605, %v1532, %v878
  %v1630 = vsel %vm1605, %v1533, %v880
  %v1631 = vsel %vm1605, %v1534, %v882
  %v1632 = vsel %vm1605, %v1535, %v884
  %v1633 = vsel %vm1605, %v1536, %v886
  %v1634 = vsel %vm1605, %v1537, %v888
  %v1635 = vsel %vm1605, %v1538, %v890
  %v1636 = vsel %vm1605, %v1539, %v892
  %v1637 = vsel %vm1605, %v1540, %v894
  %v1638 = vsel %vm1605, %v1541, %v896
  %v1639 = vsel %vm1605, %v1542, %v898
  %v1640 = vsel %vm1605, %v1543, %v900
  %v1641 = vsel %vm1605, %v1544, %v902
  %v1642 = vsel %vm1605, %v1545, %v904
  %v1643 = vsel %vm1605, %v1546, %v906
  %v1644 = vsel %vm1605, %v1547, %v908
  %v1645 = vsel %vm1605, %v1548, %v910
  %v1646 = vsel %vm1605, %v1549, %v912
  %v1647 = vsel %vm1605, %v1550, %v914
  %v1648 = vsel %vm1605, %v1551, %v916
  %v1649 = vsel %vm1605, %v1552, %v918
  %v1650 = vsel %vm1605, %v1553, %v920
  %v1651 = vsel %vm1605, %v1554, %v922
  %v1652 = vsel %vm1605, %v1555, %v924
  %v1653 = vsel %vm1605, %v1556, %v926
  %v1654 = vsel %vm1605, %v1557, %v928
  %v1655 = vsel %vm1605, %v1558, %v930
  %v1656 = vsel %vm1605, %v1559, %v932
  %v1657 = vsel %vm1605, %v1560, %v934
  %v1658 = vsel %vm1605, %v1561, %v936
  %v1659 = vsel %vm1605, %v1562, %v938
  %v1660 = vsel %vm1605, %v1563, %v940
  %v1661 = vsel %vm1605, %v1564, %v942
  %v1662 = vsel %vm1605, %v1565, %v944
  %v1663 = vsel %vm1605, %v1566, %v946
  %v1664 = vsel %vm1605, %v1567, %v948
  %v1665 = vsel %vm1605, %v1568, %v950
  %v1666 = vsel %vm1605, %v1569, %v952
  %v1667 = vsel %vm1605, %v1570, %v954
  %v1668 = vsel %vm1605, %v1571, %v956
  %v1669 = vsel %vm1605, %v1572, %v958
  %v1670 = vsel %vm1605, %v1573, %v960
  %v1671 = vsel %vm1605, %v1574, %v962
  %v1672 = vsel %vm1605, %v1575, %v964
  %v1673 = vsel %vm1605, %v1576, %v966
  %v1674 = vsel %vm1605, %v1577, %v968
  %v1675 = vsel %vm1605, %v1578, %v970
  %v1676 = vsel %vm1605, %v1579, %v972
  %v1677 = vsel %vm1605, %v1580, %v974
  %v1678 = vsel %vm1605, %v1581, %v976
  %v1679 = vsel %vm1605, %v1582, %v978
  %v1680 = vsel %vm1605, %v1583, %v980
  %v1681 = vsel %vm1605, %v1584, %v982
  %v1682 = vsel %vm1605, %v1585, %v984
  %v1683 = vsel %vm1605, %v1586, %v986
  %v1684 = vsel %vm1605, %v1587, %v988
  %v1685 = vsel %vm1605, %v1588, %v990
  %v1686 = vsel %vm1605, %v1589, %v992
  %v1687 = vsel %vm1605, %v1590, %v994
  %v1688 = vsel %vm1605, %v1591, %v996
  %v1689 = vsel %vm1605, %v1592, %v998
  %v1690 = vsel %vm1605, %v1593, %v1000
  %v1691 = vsel %vm1605, %v1594, %v1002
  %v1692 = vsel %vm1605, %v1595, %v1004
  %v1693 = vsel %vm1605, %v1596, %v1006
  %v1694 = vsel %vm1605, %v1597, %v1008
  %v1695 = vsel %vm1605, %v1598, %v1010
  %v1696 = vsel %vm1605, %v1599, %v1012
  %v1697 = vsel %vm1605, %v1600, %v1014
  %v1698 = vsel %vm1605, %v1601, %v1016
  %v1699 = vsel %vm1605, %v1602, %v1018
  %v1700 = vsel %vm1605, %v1603, %v1020
  %v1701 = vsel %vm1605, %v1604, %v1022
  %vm1702 = vcmask 916480
  %v1703 = vsel %vm1702, %v1606, %v1124
  %v1704 = vsel %vm1702, %v1607, %v1126
  %v1705 = vsel %vm1702, %v1608, %v1128
  %v1706 = vsel %vm1702, %v1609, %v1130
  %v1707 = vsel %vm1702, %v1610, %v1132
  %v1708 = vsel %vm1702, %v1611, %v1134
  %v1709 = vsel %vm1702, %v1612, %v1136
  %v1710 = vsel %vm1702, %v1613, %v1138
  %v1711 = vsel %vm1702, %v1614, %v1140
  %v1712 = vsel %vm1702, %v1615, %v1142
  %v1713 = vsel %vm1702, %v1616, %v1144
  %v1714 = vsel %vm1702, %v1617, %v1146
  %v1715 = vsel %vm1702, %v1618, %v1148
  %v1716 = vsel %vm1702, %v1619, %v1150
  %v1717 = vsel %vm1702, %v1620, %v1152
  %v1718 = vsel %vm1702, %v1621, %v1154
  %v1719 = vsel %vm1702, %v1622, %v1156
  %v1720 = vsel %vm1702, %v1623, %v1158
  %v1721 = vsel %vm1702, %v1624, %v1160
  %v1722 = vsel %vm1702, %v1625, %v1162
  %v1723 = vsel %vm1702, %v1626, %v1164
  %v1724 = vsel %vm1702, %v1627, %v1166
  %v1725 = vsel %vm1702, %v1628, %v1168
  %v1726 = vsel %vm1702, %v1629, %v1170
  %v1727 = vsel %vm1702, %v1630, %v1172
  %v1728 = vsel %vm1702, %v1631, %v1174
  %v1729 = vsel %vm1702, %v1632, %v1176
  %v1730 = vsel %vm1702, %v1633, %v1178
  %v1731 = vsel %vm1702, %v1634, %v1180
  %v1732 = vsel %vm1702, %v1635, %v1182
  %v1733 = vsel %vm1702, %v1636, %v1184
  %v1734 = vsel %vm1702, %v1637, %v1186
  %v1735 = vsel %vm1702, %v1638, %v1188
  %v1736 = vsel %vm1702, %v1639, %v1190
  %v1737 = vsel %vm1702, %v1640, %v1192
  %v1738 = vsel %vm1702, %v1641, %v1194
  %v1739 = vsel %vm1702, %v1642, %v1196
  %v1740 = vsel %vm1702, %v1643, %v1198
  %v1741 = vsel %vm1702, %v1644, %v1200
  %v1742 = vsel %vm1702, %v1645, %v1202
  %v1743 = vsel %vm1702, %v1646, %v1204
  %v1744 = vsel %vm1702, %v1647, %v1206
  %v1745 = vsel %vm1702, %v1648, %v1208
  %v1746 = vsel %vm1702, %v1649, %v1210
  %v1747 = vsel %vm1702, %v1650, %v1212
  %v1748 = vsel %vm1702, %v1651, %v1214
  %v1749 = vsel %vm1702, %v1652, %v1216
  %v1750 = vsel %vm1702, %v1653, %v1218
  %v1751 = vsel %vm1702, %v1654, %v1220
  %v1752 = vsel %vm1702, %v1655, %v1222
  %v1753 = vsel %vm1702, %v1656, %v1224
  %v1754 = vsel %vm1702, %v1657, %v1226
  %v1755 = vsel %vm1702, %v1658, %v1228
  %v1756 = vsel %vm1702, %v1659, %v1230
  %v1757 = vsel %vm1702, %v1660, %v1232
  %v1758 = vsel %vm1702, %v1661, %v1234
  %v1759 = vsel %vm1702, %v1662, %v1236
  %v1760 = vsel %vm1702, %v1663, %v1238
  %v1761 = vsel %vm1702, %v1664, %v1240
  %v1762 = vsel %vm1702, %v1665, %v1242
  %v1763 = vsel %vm1702, %v1666, %v1244
  %v1764 = vsel %vm1702, %v1667, %v1246
  %v1765 = vsel %vm1702, %v1668, %v1248
  %v1766 = vsel %vm1702, %v1669, %v1250
  %v1767 = vsel %vm1702, %v1670, %v1252
  %v1768 = vsel %vm1702, %v1671, %v1254
  %v1769 = vsel %vm1702, %v1672, %v1256
  %v1770 = vsel %vm1702, %v1673, %v1258
  %v1771 = vsel %vm1702, %v1674, %v1260
  %v1772 = vsel %vm1702, %v1675, %v1262
  %v1773 = vsel %vm1702, %v1676, %v1264
  %v1774 = vsel %vm1702, %v1677, %v1266
  %v1775 = vsel %vm1702, %v1678, %v1268
  %v1776 = vsel %vm1702, %v1679, %v1270
  %v1777 = vsel %vm1702, %v1680, %v1272
  %v1778 = vsel %vm1702, %v1681, %v1274
  %v1779 = vsel %vm1702, %v1682, %v1276
  %v1780 = vsel %vm1702, %v1683, %v1278
  %v1781 = vsel %vm1702, %v1684, %v1280
  %v1782 = vsel %vm1702, %v1685, %v1282
  %v1783 = vsel %vm1702, %v1686, %v1284
  %v1784 = vsel %vm1702, %v1687, %v1286
  %v1785 = vsel %vm1702, %v1688, %v1288
  %v1786 = vsel %vm1702, %v1689, %v1290
  %v1787 = vsel %vm1702, %v1690, %v1292
  %v1788 = vsel %vm1702, %v1691, %v1294
  %v1789 = vsel %vm1702, %v1692, %v1296
  %v1790 = vsel %vm1702, %v1693, %v1298
  %v1791 = vsel %vm1702, %v1694, %v1300
  %v1792 = vsel %vm1702, %v1695, %v1302
  %v1793 = vsel %vm1702, %v1696, %v1304
  %v1794 = vsel %vm1702, %v1697, %v1306
  %v1795 = vsel %vm1702, %v1698, %v1308
  %v1796 = vsel %vm1702, %v1699, %v1310
  %v1797 = vsel %vm1702, %v1700, %v1312
  %v1798 = vsel %vm1702, %v1701, %v1314
  %v1799 = vpack.c.bf16 %v1704, %v1703
  %v1800 = vpack.c.bf16 %v1126, %v1124
  %v1801 = vpack.c.bf16 %v1706, %v1705
  %v1802 = vpack.c.bf16 %v1130, %v1128
  %v1803 = vpack.c.bf16 %v1708, %v1707
  %v1804 = vpack.c.bf16 %v1134, %v1132
  %v1805 = vpack.c.bf16 %v1710, %v1709
  %v1806 = vpack.c.bf16 %v1138, %v1136
  %v1807 = vpack.c.bf16 %v1712, %v1711
  %v1808 = vpack.c.bf16 %v1142, %v1140
  %v1809 = vpack.c.bf16 %v1714, %v1713
  %v1810 = vpack.c.bf16 %v1146, %v1144
  %v1811 = vpack.c.bf16 %v1716, %v1715
  %v1812 = vpack.c.bf16 %v1150, %v1148
  %v1813 = vpack.c.bf16 %v1718, %v1717
  %v1814 = vpack.c.bf16 %v1154, %v1152
  %v1815 = vpack.c.bf16 %v1720, %v1719
  %v1816 = vpack.c.bf16 %v1158, %v1156
  %v1817 = vpack.c.bf16 %v1722, %v1721
  %v1818 = vpack.c.bf16 %v1162, %v1160
  %v1819 = vpack.c.bf16 %v1724, %v1723
  %v1820 = vpack.c.bf16 %v1166, %v1164
  %v1821 = vpack.c.bf16 %v1726, %v1725
  %v1822 = vpack.c.bf16 %v1170, %v1168
  %v1823 = vpack.c.bf16 %v1728, %v1727
  %v1824 = vpack.c.bf16 %v1174, %v1172
  %v1825 = vpack.c.bf16 %v1730, %v1729
  %v1826 = vpack.c.bf16 %v1178, %v1176
  %v1827 = vpack.c.bf16 %v1732, %v1731
  %v1828 = vpack.c.bf16 %v1182, %v1180
  %v1829 = vpack.c.bf16 %v1734, %v1733
  %v1830 = vpack.c.bf16 %v1186, %v1184
  %v1831 = vpack.c.bf16 %v1736, %v1735
  %v1832 = vpack.c.bf16 %v1190, %v1188
  %v1833 = vpack.c.bf16 %v1738, %v1737
  %v1834 = vpack.c.bf16 %v1194, %v1192
  %v1835 = vpack.c.bf16 %v1740, %v1739
  %v1836 = vpack.c.bf16 %v1198, %v1196
  %v1837 = vpack.c.bf16 %v1742, %v1741
  %v1838 = vpack.c.bf16 %v1202, %v1200
  %v1839 = vpack.c.bf16 %v1744, %v1743
  %v1840 = vpack.c.bf16 %v1206, %v1204
  %v1841 = vpack.c.bf16 %v1746, %v1745
  %v1842 = vpack.c.bf16 %v1210, %v1208
  %v1843 = vpack.c.bf16 %v1748, %v1747
  %v1844 = vpack.c.bf16 %v1214, %v1212
  %v1845 = vpack.c.bf16 %v1750, %v1749
  %v1846 = vpack.c.bf16 %v1218, %v1216
  %v1847 = vpack.c.bf16 %v1752, %v1751
  %v1848 = vpack.c.bf16 %v1222, %v1220
  %v1849 = vpack.c.bf16 %v1754, %v1753
  %v1850 = vpack.c.bf16 %v1226, %v1224
  %v1851 = vpack.c.bf16 %v1756, %v1755
  %v1852 = vpack.c.bf16 %v1230, %v1228
  %v1853 = vpack.c.bf16 %v1758, %v1757
  %v1854 = vpack.c.bf16 %v1234, %v1232
  %v1855 = vpack.c.bf16 %v1760, %v1759
  %v1856 = vpack.c.bf16 %v1238, %v1236
  %v1857 = vpack.c.bf16 %v1762, %v1761
  %v1858 = vpack.c.bf16 %v1242, %v1240
  %v1859 = vpack.c.bf16 %v1764, %v1763
  %v1860 = vpack.c.bf16 %v1246, %v1244
  %v1861 = vpack.c.bf16 %v1766, %v1765
  %v1862 = vpack.c.bf16 %v1250, %v1248
  %v1863 = vpack.c.bf16 %v1768, %v1767
  %v1864 = vpack.c.bf16 %v1254, %v1252
  %v1865 = vpack.c.bf16 %v1770, %v1769
  %v1866 = vpack.c.bf16 %v1258, %v1256
  %v1867 = vpack.c.bf16 %v1772, %v1771
  %v1868 = vpack.c.bf16 %v1262, %v1260
  %v1869 = vpack.c.bf16 %v1774, %v1773
  %v1870 = vpack.c.bf16 %v1266, %v1264
  %v1871 = vpack.c.bf16 %v1776, %v1775
  %v1872 = vpack.c.bf16 %v1270, %v1268
  %v1873 = vpack.c.bf16 %v1778, %v1777
  %v1874 = vpack.c.bf16 %v1274, %v1272
  %v1875 = vpack.c.bf16 %v1780, %v1779
  %v1876 = vpack.c.bf16 %v1278, %v1276
  %v1877 = vpack.c.bf16 %v1782, %v1781
  %v1878 = vpack.c.bf16 %v1282, %v1280
  %v1879 = vpack.c.bf16 %v1784, %v1783
  %v1880 = vpack.c.bf16 %v1286, %v1284
  %v1881 = vpack.c.bf16 %v1786, %v1785
  %v1882 = vpack.c.bf16 %v1290, %v1288
  %v1883 = vpack.c.bf16 %v1788, %v1787
  %v1884 = vpack.c.bf16 %v1294, %v1292
  %v1885 = vpack.c.bf16 %v1790, %v1789
  %v1886 = vpack.c.bf16 %v1298, %v1296
  %v1887 = vpack.c.bf16 %v1792, %v1791
  %v1888 = vpack.c.bf16 %v1302, %v1300
  %v1889 = vpack.c.bf16 %v1794, %v1793
  %v1890 = vpack.c.bf16 %v1306, %v1304
  %v1891 = vpack.c.bf16 %v1796, %v1795
  %v1892 = vpack.c.bf16 %v1310, %v1308
  %v1893 = vpack.c.bf16 %v1798, %v1797
  %v1894 = vpack.c.bf16 %v1314, %v1312
  %v1895 = vld [vmem:[%s1] sm:$0xff]
  %v1896 = vld [vmem:[%s1 + $0x8] sm:$0xff]
  %v1897 = vld [vmem:[%s1 + $0x10] sm:$0xff]
  %v1898 = vld [vmem:[%s1 + $0x18] sm:$0xff]
  %v1899 = vld [vmem:[%s1 + $0x20] sm:$0xff]
  %v1900 = vld [vmem:[%s1 + $0x28] sm:$0xff]
  %v1901 = vld [vmem:[%s1 + $0x30] sm:$0xff]
  %v1902 = vld [vmem:[%s1 + $0x38] sm:$0xff]
  %v1903 = vld [vmem:[%s1 + $0x40] sm:$0xff]
  %v1904 = vld [vmem:[%s1 + $0x48] sm:$0xff]
  %v1905 = vld [vmem:[%s1 + $0x50] sm:$0xff]
  %v1906 = vld [vmem:[%s1 + $0x58] sm:$0xff]
  %v1907 = vld [vmem:[%s1 + $0x60] sm:$0xff]
  %v1908 = vld [vmem:[%s1 + $0x68] sm:$0xff]
  %v1909 = vld [vmem:[%s1 + $0x70] sm:$0xff]
  %v1910 = vld [vmem:[%s1 + $0x78] sm:$0xff]
  %v1911 = vld [vmem:[%s1 + $0x80] sm:$0xff]
  %v1912 = vld [vmem:[%s1 + $0x88] sm:$0x33]
  %v1913 = vld [vmem:[%s2] sm:$0x3]
  %v1915 = vlaneseq
  %v1916 = vshrl.u32 %v1915, 7
  %v1917 = vsub.s32 0, %v1916
  %v1918 = vrot.slane %v1913, %v1917
  %v1919 = vlaneseq
  %v1920 = vshrl.u32 %v1919, 7
  %v1921 = vsub.s32 1, %v1920
  %v1922 = vrot.slane %v1913, %v1921
  %v1943 = vunpack.c.l.b16 %v1895
  %v1944 = vunpack.c.h.b16 %v1895
  %v1945 = vunpack.c.l.b16 %v1896
  %v1946 = vunpack.c.h.b16 %v1896
  %v1947 = vunpack.c.l.b16 %v1897
  %v1948 = vunpack.c.h.b16 %v1897
  %v1949 = vunpack.c.l.b16 %v1898
  %v1950 = vunpack.c.h.b16 %v1898
  %v1951 = vunpack.c.l.b16 %v1899
  %v1952 = vunpack.c.h.b16 %v1899
  %v1953 = vunpack.c.l.b16 %v1900
  %v1954 = vunpack.c.h.b16 %v1900
  %v1955 = vunpack.c.l.b16 %v1901
  %v1956 = vunpack.c.h.b16 %v1901
  %v1957 = vunpack.c.l.b16 %v1902
  %v1958 = vunpack.c.h.b16 %v1902
  %v1959 = vunpack.c.l.b16 %v1903
  %v1960 = vunpack.c.h.b16 %v1903
  %v1961 = vunpack.c.l.b16 %v1904
  %v1962 = vunpack.c.h.b16 %v1904
  %v1963 = vunpack.c.l.b16 %v1905
  %v1964 = vunpack.c.h.b16 %v1905
  %v1965 = vunpack.c.l.b16 %v1906
  %v1966 = vunpack.c.h.b16 %v1906
  %v1967 = vunpack.c.l.b16 %v1907
  %v1968 = vunpack.c.h.b16 %v1907
  %v1969 = vunpack.c.l.b16 %v1908
  %v1970 = vunpack.c.h.b16 %v1908
  %v1971 = vunpack.c.l.b16 %v1909
  %v1972 = vunpack.c.h.b16 %v1909
  %v1973 = vunpack.c.l.b16 %v1910
  %v1974 = vunpack.c.h.b16 %v1910
  %v1975 = vunpack.c.l.b16 %v1911
  %v1976 = vunpack.c.h.b16 %v1911
  %v1977 = vunpack.c.l.b16 %v1912
  %v1978 = vunpack.c.h.b16 %v1912
  %v1979 = vpack.c.b16 %v1945, %v1943
  %v1980 = vpack.c.b16 %v1946, %v1944
  %v1981 = vpack.c.b16 %v1949, %v1947
  %v1982 = vpack.c.b16 %v1950, %v1948
  %v1983 = vpack.c.b16 %v1953, %v1951
  %v1984 = vpack.c.b16 %v1954, %v1952
  %v1985 = vpack.c.b16 %v1957, %v1955
  %v1986 = vpack.c.b16 %v1958, %v1956
  %v1987 = vpack.c.b16 %v1961, %v1959
  %v1988 = vpack.c.b16 %v1962, %v1960
  %v1989 = vpack.c.b16 %v1965, %v1963
  %v1990 = vpack.c.b16 %v1966, %v1964
  %v1991 = vpack.c.b16 %v1969, %v1967
  %v1992 = vpack.c.b16 %v1970, %v1968
  %v1993 = vpack.c.b16 %v1973, %v1971
  %v1994 = vpack.c.b16 %v1974, %v1972
  %v1995 = vpack.c.b16 %v1977, %v1975
  %v1996 = vpack.c.b16 %v1978, %v1976
  %vm2013 = vcmask 97280
  %v2015 = vsel %vm2013, %v1800, 0
  %v2018 = vsel %vm2013, %v1802, 0
  %v2021 = vsel %vm2013, %v1804, 0
  %v2024 = vsel %vm2013, %v1806, 0
  %v2027 = vsel %vm2013, %v1808, 0
  %v2030 = vsel %vm2013, %v1810, 0
  %v2033 = vsel %vm2013, %v1812, 0
  %v2036 = vsel %vm2013, %v1814, 0
  %v2039 = vsel %vm2013, %v1816, 0
  %v2042 = vsel %vm2013, %v1818, 0
  %v2045 = vsel %vm2013, %v1820, 0
  %v2048 = vsel %vm2013, %v1822, 0
  %v2051 = vsel %vm2013, %v1824, 0
  %v2054 = vsel %vm2013, %v1826, 0
  %v2057 = vsel %vm2013, %v1828, 0
  %v2060 = vsel %vm2013, %v1830, 0
  %v2063 = vsel %vm2013, %v1832, 0
  %v2066 = vsel %vm2013, %v1834, 0
  %v2069 = vsel %vm2013, %v1836, 0
  %v2072 = vsel %vm2013, %v1838, 0
  %v2075 = vsel %vm2013, %v1840, 0
  %v2078 = vsel %vm2013, %v1842, 0
  %v2081 = vsel %vm2013, %v1844, 0
  %v2084 = vsel %vm2013, %v1846, 0
  %v2087 = vsel %vm2013, %v1848, 0
  %v2090 = vsel %vm2013, %v1850, 0
  %v2093 = vsel %vm2013, %v1852, 0
  %v2096 = vsel %vm2013, %v1854, 0
  %v2099 = vsel %vm2013, %v1856, 0
  %v2102 = vsel %vm2013, %v1858, 0
  %v2105 = vsel %vm2013, %v1860, 0
  %v2108 = vsel %vm2013, %v1862, 0
  %v2111 = vsel %vm2013, %v1864, 0
  %v2114 = vsel %vm2013, %v1866, 0
  %v2117 = vsel %vm2013, %v1868, 0
  %v2120 = vsel %vm2013, %v1870, 0
  %v2123 = vsel %vm2013, %v1872, 0
  %v2126 = vsel %vm2013, %v1874, 0
  %v2129 = vsel %vm2013, %v1876, 0
  %v2132 = vsel %vm2013, %v1878, 0
  %v2135 = vsel %vm2013, %v1880, 0
  %v2138 = vsel %vm2013, %v1882, 0
  %v2141 = vsel %vm2013, %v1884, 0
  %v2144 = vsel %vm2013, %v1886, 0
  %v2147 = vsel %vm2013, %v1888, 0
  %v2150 = vsel %vm2013, %v1890, 0
  %v2153 = vsel %vm2013, %v1892, 0
  %v2156 = vsel %vm2013, %v1894, 0
  %vm2158 = vcmask 1045504
  %v2160 = vsel %vm2158, %v1995, 0
  %v2163 = vsel %vm2158, %v1996, 0
  %2165 = vmatprep.subr.bf16.mxu0 %v1980
  %2166 = vmatpush1.bf16.msra.mxu0 %v1979
  %2167 = vmatprep.subr.bf16.mxu0 %v1982
  %2168 = vmatpush1.bf16.msra.mxu0 %v1981
  %2169 = vmatprep.subr.bf16.mxu0 %v1984
  %2170 = vmatpush1.bf16.msra.mxu0 %v1983
  %2171 = vmatprep.subr.bf16.mxu0 %v1986
  %2172 = vmatpush1.bf16.msra.mxu0 %v1985
  %2173 = vmatprep.subr.bf16.mxu0 %v1988
  %2174 = vmatpush1.bf16.msra.mxu0 %v1987
  %2175 = vmatprep.subr.bf16.mxu0 %v1990
  %2176 = vmatpush1.bf16.msra.mxu0 %v1989
  %2177 = vmatprep.subr.bf16.mxu0 %v1992
  %2178 = vmatpush1.bf16.msra.mxu0 %v1991
  %2179 = vmatprep.subr.bf16.mxu0 %v1994
  %2180 = vmatpush1.bf16.msra.mxu0 %v1993
  %2181 = vmatprep.subr.bf16.mxu0 %v2163
  %2182 = vmatpush1.bf16.msra.mxu0 %v2160
  %2183 = vmatprep.subr.bf16.mxu0 0
  %2184 = vmatpush1.bf16.msra.mxu0 0
  %2185 = vmatprep.subr.bf16.mxu0 0
  %2186 = vmatpush1.bf16.msra.mxu0 0
  %2187 = vmatprep.subr.bf16.mxu0 0
  %2188 = vmatpush1.bf16.msra.mxu0 0
  %2189 = vmatprep.subr.bf16.mxu0 0
  %2190 = vmatpush1.bf16.msra.mxu0 0
  %2191 = vmatprep.subr.bf16.mxu0 0
  %2192 = vmatpush1.bf16.msra.mxu0 0
  %2193 = vmatprep.subr.bf16.mxu0 0
  %2194 = vmatpush1.bf16.msra.mxu0 0
  %2195 = vmatprep.subr.bf16.mxu0 0
  %2196 = vmatpush1.bf16.msra.mxu0 0
  %2197 = vmatprep.mubr.bf16.mxu0 %v2015
  %2198 = vmatmul.mubr.bf16.gmra.mrb[0].mxu0 %v1799
  %v2199 = vpop.f32.mrb[0].mxu0
  %v2200 = vadd.f32 %v1918, %v2199
  %v2201 = vpop.f32.mrb[0].mxu0
  %v2202 = vadd.f32 %v1922, %v2201
  %v2203 = vpop.f32.mrb[0].mxu0
  %v2204 = vadd.f32 %v1918, %v2203
  %v2205 = vpop.f32.mrb[0].mxu0
  %v2206 = vadd.f32 %v1922, %v2205
  %2207 = vmatprep.mubr.bf16.mxu0 %v2018
  %2208 = vmatmul.mubr.bf16.gmra.mrb[0].mxu0 %v1801
  %v2209 = vpop.f32.mrb[0].mxu0
  %v2210 = vadd.f32 %v1918, %v2209
  %v2211 = vpop.f32.mrb[0].mxu0
  %v2212 = vadd.f32 %v1922, %v2211
  %v2213 = vpop.f32.mrb[0].mxu0
  %v2214 = vadd.f32 %v1918, %v2213
  %v2215 = vpop.f32.mrb[0].mxu0
  %v2216 = vadd.f32 %v1922, %v2215
  %2217 = vmatprep.mubr.bf16.mxu0 %v2021
  %2218 = vmatmul.mubr.bf16.gmra.mrb[0].mxu0 %v1803
  %v2219 = vpop.f32.mrb[0].mxu0
  %v2220 = vadd.f32 %v1918, %v2219
  %v2221 = vpop.f32.mrb[0].mxu0
  %v2222 = vadd.f32 %v1922, %v2221
  %v2223 = vpop.f32.mrb[0].mxu0
  %v2224 = vadd.f32 %v1918, %v2223
  %v2225 = vpop.f32.mrb[0].mxu0
  %v2226 = vadd.f32 %v1922, %v2225
  %2227 = vmatprep.mubr.bf16.mxu0 %v2024
  %2228 = vmatmul.mubr.bf16.gmra.mrb[0].mxu0 %v1805
  %v2229 = vpop.f32.mrb[0].mxu0
  %v2230 = vadd.f32 %v1918, %v2229
  %v2231 = vpop.f32.mrb[0].mxu0
  %v2232 = vadd.f32 %v1922, %v2231
  %v2233 = vpop.f32.mrb[0].mxu0
  %v2234 = vadd.f32 %v1918, %v2233
  %v2235 = vpop.f32.mrb[0].mxu0
  %v2236 = vadd.f32 %v1922, %v2235
  %2237 = vmatprep.mubr.bf16.mxu0 %v2027
  %2238 = vmatmul.mubr.bf16.gmra.mrb[0].mxu0 %v1807
  %v2239 = vpop.f32.mrb[0].mxu0
  %v2240 = vadd.f32 %v1918, %v2239
  %v2241 = vpop.f32.mrb[0].mxu0
  %v2242 = vadd.f32 %v1922, %v2241
  %v2243 = vpop.f32.mrb[0].mxu0
  %v2244 = vadd.f32 %v1918, %v2243
  %v2245 = vpop.f32.mrb[0].mxu0
  %v2246 = vadd.f32 %v1922, %v2245
  %2247 = vmatprep.mubr.bf16.mxu0 %v2030
  %2248 = vmatmul.mubr.bf16.gmra.mrb[0].mxu0 %v1809
  %v2249 = vpop.f32.mrb[0].mxu0
  %v2250 = vadd.f32 %v1918, %v2249
  %v2251 = vpop.f32.mrb[0].mxu0
  %v2252 = vadd.f32 %v1922, %v2251
  %v2253 = vpop.f32.mrb[0].mxu0
  %v2254 = vadd.f32 %v1918, %v2253
  %v2255 = vpop.f32.mrb[0].mxu0
  %v2256 = vadd.f32 %v1922, %v2255
  %2257 = vmatprep.mubr.bf16.mxu0 %v2033
  %2258 = vmatmul.mubr.bf16.gmra.mrb[0].mxu0 %v1811
  %v2259 = vpop.f32.mrb[0].mxu0
  %v2260 = vadd.f32 %v1918, %v2259
  %v2261 = vpop.f32.mrb[0].mxu0
  %v2262 = vadd.f32 %v1922, %v2261
  %v2263 = vpop.f32.mrb[0].mxu0
  %v2264 = vadd.f32 %v1918, %v2263
  %v2265 = vpop.f32.mrb[0].mxu0
  %v2266 = vadd.f32 %v1922, %v2265
  %2267 = vmatprep.mubr.bf16.mxu0 %v2036
  %2268 = vmatmul.mubr.bf16.gmra.mrb[0].mxu0 %v1813
  %v2269 = vpop.f32.mrb[0].mxu0
  %v2270 = vadd.f32 %v1918, %v2269
  %v2271 = vpop.f32.mrb[0].mxu0
  %v2272 = vadd.f32 %v1922, %v2271
  %v2273 = vpop.f32.mrb[0].mxu0
  %v2274 = vadd.f32 %v1918, %v2273
  %v2275 = vpop.f32.mrb[0].mxu0
  %v2276 = vadd.f32 %v1922, %v2275
  %2277 = vmatprep.mubr.bf16.mxu0 %v2039
  %2278 = vmatmul.mubr.bf16.gmra.mrb[0].mxu0 %v1815
  %v2279 = vpop.f32.mrb[0].mxu0
  %v2280 = vadd.f32 %v1918, %v2279
  %v2281 = vpop.f32.mrb[0].mxu0
  %v2282 = vadd.f32 %v1922, %v2281
  %v2283 = vpop.f32.mrb[0].mxu0
  %v2284 = vadd.f32 %v1918, %v2283
  %v2285 = vpop.f32.mrb[0].mxu0
  %v2286 = vadd.f32 %v1922, %v2285
  %2287 = vmatprep.mubr.bf16.mxu0 %v2042
  %2288 = vmatmul.mubr.bf16.gmra.mrb[0].mxu0 %v1817
  %v2289 = vpop.f32.mrb[0].mxu0
  %v2290 = vadd.f32 %v1918, %v2289
  %v2291 = vpop.f32.mrb[0].mxu0
  %v2292 = vadd.f32 %v1922, %v2291
  %v2293 = vpop.f32.mrb[0].mxu0
  %v2294 = vadd.f32 %v1918, %v2293
  %v2295 = vpop.f32.mrb[0].mxu0
  %v2296 = vadd.f32 %v1922, %v2295
  %2297 = vmatprep.mubr.bf16.mxu0 %v2045
  %2298 = vmatmul.mubr.bf16.gmra.mrb[0].mxu0 %v1819
  %v2299 = vpop.f32.mrb[0].mxu0
  %v2300 = vadd.f32 %v1918, %v2299
  %v2301 = vpop.f32.mrb[0].mxu0
  %v2302 = vadd.f32 %v1922, %v2301
  %v2303 = vpop.f32.mrb[0].mxu0
  %v2304 = vadd.f32 %v1918, %v2303
  %v2305 = vpop.f32.mrb[0].mxu0
  %v2306 = vadd.f32 %v1922, %v2305
  %2307 = vmatprep.mubr.bf16.mxu0 %v2048
  %2308 = vmatmul.mubr.bf16.gmra.mrb[0].mxu0 %v1821
  %v2309 = vpop.f32.mrb[0].mxu0
  %v2310 = vadd.f32 %v1918, %v2309
  %v2311 = vpop.f32.mrb[0].mxu0
  %v2312 = vadd.f32 %v1922, %v2311
  %v2313 = vpop.f32.mrb[0].mxu0
  %v2314 = vadd.f32 %v1918, %v2313
  %v2315 = vpop.f32.mrb[0].mxu0
  %v2316 = vadd.f32 %v1922, %v2315
  %2317 = vmatprep.mubr.bf16.mxu0 %v2051
  %2318 = vmatmul.mubr.bf16.gmra.mrb[0].mxu0 %v1823
  %v2319 = vpop.f32.mrb[0].mxu0
  %v2320 = vadd.f32 %v1918, %v2319
  %v2321 = vpop.f32.mrb[0].mxu0
  %v2322 = vadd.f32 %v1922, %v2321
  %v2323 = vpop.f32.mrb[0].mxu0
  %v2324 = vadd.f32 %v1918, %v2323
  %v2325 = vpop.f32.mrb[0].mxu0
  %v2326 = vadd.f32 %v1922, %v2325
  %2327 = vmatprep.mubr.bf16.mxu0 %v2054
  %2328 = vmatmul.mubr.bf16.gmra.mrb[0].mxu0 %v1825
  %v2329 = vpop.f32.mrb[0].mxu0
  %v2330 = vadd.f32 %v1918, %v2329
  %v2331 = vpop.f32.mrb[0].mxu0
  %v2332 = vadd.f32 %v1922, %v2331
  %v2333 = vpop.f32.mrb[0].mxu0
  %v2334 = vadd.f32 %v1918, %v2333
  %v2335 = vpop.f32.mrb[0].mxu0
  %v2336 = vadd.f32 %v1922, %v2335
  %2337 = vmatprep.mubr.bf16.mxu0 %v2057
  %2338 = vmatmul.mubr.bf16.gmra.mrb[0].mxu0 %v1827
  %v2339 = vpop.f32.mrb[0].mxu0
  %v2340 = vadd.f32 %v1918, %v2339
  %v2341 = vpop.f32.mrb[0].mxu0
  %v2342 = vadd.f32 %v1922, %v2341
  %v2343 = vpop.f32.mrb[0].mxu0
  %v2344 = vadd.f32 %v1918, %v2343
  %v2345 = vpop.f32.mrb[0].mxu0
  %v2346 = vadd.f32 %v1922, %v2345
  %2347 = vmatprep.mubr.bf16.mxu0 %v2060
  %2348 = vmatmul.mubr.bf16.gmra.mrb[0].mxu0 %v1829
  %v2349 = vpop.f32.mrb[0].mxu0
  %v2350 = vadd.f32 %v1918, %v2349
  %v2351 = vpop.f32.mrb[0].mxu0
  %v2352 = vadd.f32 %v1922, %v2351
  %v2353 = vpop.f32.mrb[0].mxu0
  %v2354 = vadd.f32 %v1918, %v2353
  %v2355 = vpop.f32.mrb[0].mxu0
  %v2356 = vadd.f32 %v1922, %v2355
  %2357 = vmatprep.mubr.bf16.mxu0 %v2063
  %2358 = vmatmul.mubr.bf16.gmra.mrb[0].mxu0 %v1831
  %v2359 = vpop.f32.mrb[0].mxu0
  %v2360 = vadd.f32 %v1918, %v2359
  %v2361 = vpop.f32.mrb[0].mxu0
  %v2362 = vadd.f32 %v1922, %v2361
  %v2363 = vpop.f32.mrb[0].mxu0
  %v2364 = vadd.f32 %v1918, %v2363
  %v2365 = vpop.f32.mrb[0].mxu0
  %v2366 = vadd.f32 %v1922, %v2365
  %2367 = vmatprep.mubr.bf16.mxu0 %v2066
  %2368 = vmatmul.mubr.bf16.gmra.mrb[0].mxu0 %v1833
  %v2369 = vpop.f32.mrb[0].mxu0
  %v2370 = vadd.f32 %v1918, %v2369
  %v2371 = vpop.f32.mrb[0].mxu0
  %v2372 = vadd.f32 %v1922, %v2371
  %v2373 = vpop.f32.mrb[0].mxu0
  %v2374 = vadd.f32 %v1918, %v2373
  %v2375 = vpop.f32.mrb[0].mxu0
  %v2376 = vadd.f32 %v1922, %v2375
  %2377 = vmatprep.mubr.bf16.mxu0 %v2069
  %2378 = vmatmul.mubr.bf16.gmra.mrb[0].mxu0 %v1835
  %v2379 = vpop.f32.mrb[0].mxu0
  %v2380 = vadd.f32 %v1918, %v2379
  %v2381 = vpop.f32.mrb[0].mxu0
  %v2382 = vadd.f32 %v1922, %v2381
  %v2383 = vpop.f32.mrb[0].mxu0
  %v2384 = vadd.f32 %v1918, %v2383
  %v2385 = vpop.f32.mrb[0].mxu0
  %v2386 = vadd.f32 %v1922, %v2385
  %2387 = vmatprep.mubr.bf16.mxu0 %v2072
  %2388 = vmatmul.mubr.bf16.gmra.mrb[0].mxu0 %v1837
  %v2389 = vpop.f32.mrb[0].mxu0
  %v2390 = vadd.f32 %v1918, %v2389
  %v2391 = vpop.f32.mrb[0].mxu0
  %v2392 = vadd.f32 %v1922, %v2391
  %v2393 = vpop.f32.mrb[0].mxu0
  %v2394 = vadd.f32 %v1918, %v2393
  %v2395 = vpop.f32.mrb[0].mxu0
  %v2396 = vadd.f32 %v1922, %v2395
  %2397 = vmatprep.mubr.bf16.mxu0 %v2075
  %2398 = vmatmul.mubr.bf16.gmra.mrb[0].mxu0 %v1839
  %v2399 = vpop.f32.mrb[0].mxu0
  %v2400 = vadd.f32 %v1918, %v2399
  %v2401 = vpop.f32.mrb[0].mxu0
  %v2402 = vadd.f32 %v1922, %v2401
  %v2403 = vpop.f32.mrb[0].mxu0
  %v2404 = vadd.f32 %v1918, %v2403
  %v2405 = vpop.f32.mrb[0].mxu0
  %v2406 = vadd.f32 %v1922, %v2405
  %2407 = vmatprep.mubr.bf16.mxu0 %v2078
  %2408 = vmatmul.mubr.bf16.gmra.mrb[0].mxu0 %v1841
  %v2409 = vpop.f32.mrb[0].mxu0
  %v2410 = vadd.f32 %v1918, %v2409
  %v2411 = vpop.f32.mrb[0].mxu0
  %v2412 = vadd.f32 %v1922, %v2411
  %v2413 = vpop.f32.mrb[0].mxu0
  %v2414 = vadd.f32 %v1918, %v2413
  %v2415 = vpop.f32.mrb[0].mxu0
  %v2416 = vadd.f32 %v1922, %v2415
  %2417 = vmatprep.mubr.bf16.mxu0 %v2081
  %2418 = vmatmul.mubr.bf16.gmra.mrb[0].mxu0 %v1843
  %v2419 = vpop.f32.mrb[0].mxu0
  %v2420 = vadd.f32 %v1918, %v2419
  %v2421 = vpop.f32.mrb[0].mxu0
  %v2422 = vadd.f32 %v1922, %v2421
  %v2423 = vpop.f32.mrb[0].mxu0
  %v2424 = vadd.f32 %v1918, %v2423
  %v2425 = vpop.f32.mrb[0].mxu0
  %v2426 = vadd.f32 %v1922, %v2425
  %2427 = vmatprep.mubr.bf16.mxu0 %v2084
  %2428 = vmatmul.mubr.bf16.gmra.mrb[0].mxu0 %v1845
  %v2429 = vpop.f32.mrb[0].mxu0
  %v2430 = vadd.f32 %v1918, %v2429
  %v2431 = vpop.f32.mrb[0].mxu0
  %v2432 = vadd.f32 %v1922, %v2431
  %v2433 = vpop.f32.mrb[0].mxu0
  %v2434 = vadd.f32 %v1918, %v2433
  %v2435 = vpop.f32.mrb[0].mxu0
  %v2436 = vadd.f32 %v1922, %v2435
  %2437 = vmatprep.mubr.bf16.mxu0 %v2087
  %2438 = vmatmul.mubr.bf16.gmra.mrb[0].mxu0 %v1847
  %v2439 = vpop.f32.mrb[0].mxu0
  %v2440 = vadd.f32 %v1918, %v2439
  %v2441 = vpop.f32.mrb[0].mxu0
  %v2442 = vadd.f32 %v1922, %v2441
  %v2443 = vpop.f32.mrb[0].mxu0
  %v2444 = vadd.f32 %v1918, %v2443
  %v2445 = vpop.f32.mrb[0].mxu0
  %v2446 = vadd.f32 %v1922, %v2445
  %2447 = vmatprep.mubr.bf16.mxu0 %v2090
  %2448 = vmatmul.mubr.bf16.gmra.mrb[0].mxu0 %v1849
  %v2449 = vpop.f32.mrb[0].mxu0
  %v2450 = vadd.f32 %v1918, %v2449
  %v2451 = vpop.f32.mrb[0].mxu0
  %v2452 = vadd.f32 %v1922, %v2451
  %v2453 = vpop.f32.mrb[0].mxu0
  %v2454 = vadd.f32 %v1918, %v2453
  %v2455 = vpop.f32.mrb[0].mxu0
  %v2456 = vadd.f32 %v1922, %v2455
  %2457 = vmatprep.mubr.bf16.mxu0 %v2093
  %2458 = vmatmul.mubr.bf16.gmra.mrb[0].mxu0 %v1851
  %v2459 = vpop.f32.mrb[0].mxu0
  %v2460 = vadd.f32 %v1918, %v2459
  %v2461 = vpop.f32.mrb[0].mxu0
  %v2462 = vadd.f32 %v1922, %v2461
  %v2463 = vpop.f32.mrb[0].mxu0
  %v2464 = vadd.f32 %v1918, %v2463
  %v2465 = vpop.f32.mrb[0].mxu0
  %v2466 = vadd.f32 %v1922, %v2465
  %2467 = vmatprep.mubr.bf16.mxu0 %v2096
  %2468 = vmatmul.mubr.bf16.gmra.mrb[0].mxu0 %v1853
  %v2469 = vpop.f32.mrb[0].mxu0
  %v2470 = vadd.f32 %v1918, %v2469
  %v2471 = vpop.f32.mrb[0].mxu0
  %v2472 = vadd.f32 %v1922, %v2471
  %v2473 = vpop.f32.mrb[0].mxu0
  %v2474 = vadd.f32 %v1918, %v2473
  %v2475 = vpop.f32.mrb[0].mxu0
  %v2476 = vadd.f32 %v1922, %v2475
  %2477 = vmatprep.mubr.bf16.mxu0 %v2099
  %2478 = vmatmul.mubr.bf16.gmra.mrb[0].mxu0 %v1855
  %v2479 = vpop.f32.mrb[0].mxu0
  %v2480 = vadd.f32 %v1918, %v2479
  %v2481 = vpop.f32.mrb[0].mxu0
  %v2482 = vadd.f32 %v1922, %v2481
  %v2483 = vpop.f32.mrb[0].mxu0
  %v2484 = vadd.f32 %v1918, %v2483
  %v2485 = vpop.f32.mrb[0].mxu0
  %v2486 = vadd.f32 %v1922, %v2485
  %2487 = vmatprep.mubr.bf16.mxu0 %v2102
  %2488 = vmatmul.mubr.bf16.gmra.mrb[0].mxu0 %v1857
  %v2489 = vpop.f32.mrb[0].mxu0
  %v2490 = vadd.f32 %v1918, %v2489
  %v2491 = vpop.f32.mrb[0].mxu0
  %v2492 = vadd.f32 %v1922, %v2491
  %v2493 = vpop.f32.mrb[0].mxu0
  %v2494 = vadd.f32 %v1918, %v2493
  %v2495 = vpop.f32.mrb[0].mxu0
  %v2496 = vadd.f32 %v1922, %v2495
  %2497 = vmatprep.mubr.bf16.mxu0 %v2105
  %2498 = vmatmul.mubr.bf16.gmra.mrb[0].mxu0 %v1859
  %v2499 = vpop.f32.mrb[0].mxu0
  %v2500 = vadd.f32 %v1918, %v2499
  %v2501 = vpop.f32.mrb[0].mxu0
  %v2502 = vadd.f32 %v1922, %v2501
  %v2503 = vpop.f32.mrb[0].mxu0
  %v2504 = vadd.f32 %v1918, %v2503
  %v2505 = vpop.f32.mrb[0].mxu0
  %v2506 = vadd.f32 %v1922, %v2505
  %2507 = vmatprep.mubr.bf16.mxu0 %v2108
  %2508 = vmatmul.mubr.bf16.gmra.mrb[0].mxu0 %v1861
  %v2509 = vpop.f32.mrb[0].mxu0
  %v2510 = vadd.f32 %v1918, %v2509
  %v2511 = vpop.f32.mrb[0].mxu0
  %v2512 = vadd.f32 %v1922, %v2511
  %v2513 = vpop.f32.mrb[0].mxu0
  %v2514 = vadd.f32 %v1918, %v2513
  %v2515 = vpop.f32.mrb[0].mxu0
  %v2516 = vadd.f32 %v1922, %v2515
  %2517 = vmatprep.mubr.bf16.mxu0 %v2111
  %2518 = vmatmul.mubr.bf16.gmra.mrb[0].mxu0 %v1863
  %v2519 = vpop.f32.mrb[0].mxu0
  %v2520 = vadd.f32 %v1918, %v2519
  %v2521 = vpop.f32.mrb[0].mxu0
  %v2522 = vadd.f32 %v1922, %v2521
  %v2523 = vpop.f32.mrb[0].mxu0
  %v2524 = vadd.f32 %v1918, %v2523
  %v2525 = vpop.f32.mrb[0].mxu0
  %v2526 = vadd.f32 %v1922, %v2525
  %2527 = vmatprep.mubr.bf16.mxu0 %v2114
  %2528 = vmatmul.mubr.bf16.gmra.mrb[0].mxu0 %v1865
  %v2529 = vpop.f32.mrb[0].mxu0
  %v2530 = vadd.f32 %v1918, %v2529
  %v2531 = vpop.f32.mrb[0].mxu0
  %v2532 = vadd.f32 %v1922, %v2531
  %v2533 = vpop.f32.mrb[0].mxu0
  %v2534 = vadd.f32 %v1918, %v2533
  %v2535 = vpop.f32.mrb[0].mxu0
  %v2536 = vadd.f32 %v1922, %v2535
  %2537 = vmatprep.mubr.bf16.mxu0 %v2117
  %2538 = vmatmul.mubr.bf16.gmra.mrb[0].mxu0 %v1867
  %v2539 = vpop.f32.mrb[0].mxu0
  %v2540 = vadd.f32 %v1918, %v2539
  %v2541 = vpop.f32.mrb[0].mxu0
  %v2542 = vadd.f32 %v1922, %v2541
  %v2543 = vpop.f32.mrb[0].mxu0
  %v2544 = vadd.f32 %v1918, %v2543
  %v2545 = vpop.f32.mrb[0].mxu0
  %v2546 = vadd.f32 %v1922, %v2545
  %2547 = vmatprep.mubr.bf16.mxu0 %v2120
  %2548 = vmatmul.mubr.bf16.gmra.mrb[0].mxu0 %v1869
  %v2549 = vpop.f32.mrb[0].mxu0
  %v2550 = vadd.f32 %v1918, %v2549
  %v2551 = vpop.f32.mrb[0].mxu0
  %v2552 = vadd.f32 %v1922, %v2551
  %v2553 = vpop.f32.mrb[0].mxu0
  %v2554 = vadd.f32 %v1918, %v2553
  %v2555 = vpop.f32.mrb[0].mxu0
  %v2556 = vadd.f32 %v1922, %v2555
  %2557 = vmatprep.mubr.bf16.mxu0 %v2123
  %2558 = vmatmul.mubr.bf16.gmra.mrb[0].mxu0 %v1871
  %v2559 = vpop.f32.mrb[0].mxu0
  %v2560 = vadd.f32 %v1918, %v2559
  %v2561 = vpop.f32.mrb[0].mxu0
  %v2562 = vadd.f32 %v1922, %v2561
  %v2563 = vpop.f32.mrb[0].mxu0
  %v2564 = vadd.f32 %v1918, %v2563
  %v2565 = vpop.f32.mrb[0].mxu0
  %v2566 = vadd.f32 %v1922, %v2565
  %2567 = vmatprep.mubr.bf16.mxu0 %v2126
  %2568 = vmatmul.mubr.bf16.gmra.mrb[0].mxu0 %v1873
  %v2569 = vpop.f32.mrb[0].mxu0
  %v2570 = vadd.f32 %v1918, %v2569
  %v2571 = vpop.f32.mrb[0].mxu0
  %v2572 = vadd.f32 %v1922, %v2571
  %v2573 = vpop.f32.mrb[0].mxu0
  %v2574 = vadd.f32 %v1918, %v2573
  %v2575 = vpop.f32.mrb[0].mxu0
  %v2576 = vadd.f32 %v1922, %v2575
  %2577 = vmatprep.mubr.bf16.mxu0 %v2129
  %2578 = vmatmul.mubr.bf16.gmra.mrb[0].mxu0 %v1875
  %v2579 = vpop.f32.mrb[0].mxu0
  %v2580 = vadd.f32 %v1918, %v2579
  %v2581 = vpop.f32.mrb[0].mxu0
  %v2582 = vadd.f32 %v1922, %v2581
  %v2583 = vpop.f32.mrb[0].mxu0
  %v2584 = vadd.f32 %v1918, %v2583
  %v2585 = vpop.f32.mrb[0].mxu0
  %v2586 = vadd.f32 %v1922, %v2585
  %2587 = vmatprep.mubr.bf16.mxu0 %v2132
  %2588 = vmatmul.mubr.bf16.gmra.mrb[0].mxu0 %v1877
  %v2589 = vpop.f32.mrb[0].mxu0
  %v2590 = vadd.f32 %v1918, %v2589
  %v2591 = vpop.f32.mrb[0].mxu0
  %v2592 = vadd.f32 %v1922, %v2591
  %v2593 = vpop.f32.mrb[0].mxu0
  %v2594 = vadd.f32 %v1918, %v2593
  %v2595 = vpop.f32.mrb[0].mxu0
  %v2596 = vadd.f32 %v1922, %v2595
  %2597 = vmatprep.mubr.bf16.mxu0 %v2135
  %2598 = vmatmul.mubr.bf16.gmra.mrb[0].mxu0 %v1879
  %v2599 = vpop.f32.mrb[0].mxu0
  %v2600 = vadd.f32 %v1918, %v2599
  %v2601 = vpop.f32.mrb[0].mxu0
  %v2602 = vadd.f32 %v1922, %v2601
  %v2603 = vpop.f32.mrb[0].mxu0
  %v2604 = vadd.f32 %v1918, %v2603
  %v2605 = vpop.f32.mrb[0].mxu0
  %v2606 = vadd.f32 %v1922, %v2605
  %2607 = vmatprep.mubr.bf16.mxu0 %v2138
  %2608 = vmatmul.mubr.bf16.gmra.mrb[0].mxu0 %v1881
  %v2609 = vpop.f32.mrb[0].mxu0
  %v2610 = vadd.f32 %v1918, %v2609
  %v2611 = vpop.f32.mrb[0].mxu0
  %v2612 = vadd.f32 %v1922, %v2611
  %v2613 = vpop.f32.mrb[0].mxu0
  %v2614 = vadd.f32 %v1918, %v2613
  %v2615 = vpop.f32.mrb[0].mxu0
  %v2616 = vadd.f32 %v1922, %v2615
  %2617 = vmatprep.mubr.bf16.mxu0 %v2141
  %2618 = vmatmul.mubr.bf16.gmra.mrb[0].mxu0 %v1883
  %v2619 = vpop.f32.mrb[0].mxu0
  %v2620 = vadd.f32 %v1918, %v2619
  %v2621 = vpop.f32.mrb[0].mxu0
  %v2622 = vadd.f32 %v1922, %v2621
  %v2623 = vpop.f32.mrb[0].mxu0
  %v2624 = vadd.f32 %v1918, %v2623
  %v2625 = vpop.f32.mrb[0].mxu0
  %v2626 = vadd.f32 %v1922, %v2625
  %2627 = vmatprep.mubr.bf16.mxu0 %v2144
  %2628 = vmatmul.mubr.bf16.gmra.mrb[0].mxu0 %v1885
  %v2629 = vpop.f32.mrb[0].mxu0
  %v2630 = vadd.f32 %v1918, %v2629
  %v2631 = vpop.f32.mrb[0].mxu0
  %v2632 = vadd.f32 %v1922, %v2631
  %v2633 = vpop.f32.mrb[0].mxu0
  %v2634 = vadd.f32 %v1918, %v2633
  %v2635 = vpop.f32.mrb[0].mxu0
  %v2636 = vadd.f32 %v1922, %v2635
  %2637 = vmatprep.mubr.bf16.mxu0 %v2147
  %2638 = vmatmul.mubr.bf16.gmra.mrb[0].mxu0 %v1887
  %v2639 = vpop.f32.mrb[0].mxu0
  %v2640 = vadd.f32 %v1918, %v2639
  %v2641 = vpop.f32.mrb[0].mxu0
  %v2642 = vadd.f32 %v1922, %v2641
  %v2643 = vpop.f32.mrb[0].mxu0
  %v2644 = vadd.f32 %v1918, %v2643
  %v2645 = vpop.f32.mrb[0].mxu0
  %v2646 = vadd.f32 %v1922, %v2645
  %2647 = vmatprep.mubr.bf16.mxu0 %v2150
  %2648 = vmatmul.mubr.bf16.gmra.mrb[0].mxu0 %v1889
  %v2649 = vpop.f32.mrb[0].mxu0
  %v2650 = vadd.f32 %v1918, %v2649
  %v2651 = vpop.f32.mrb[0].mxu0
  %v2652 = vadd.f32 %v1922, %v2651
  %v2653 = vpop.f32.mrb[0].mxu0
  %v2654 = vadd.f32 %v1918, %v2653
  %v2655 = vpop.f32.mrb[0].mxu0
  %v2656 = vadd.f32 %v1922, %v2655
  %2657 = vmatprep.mubr.bf16.mxu0 %v2153
  %2658 = vmatmul.mubr.bf16.gmra.mrb[0].mxu0 %v1891
  %v2659 = vpop.f32.mrb[0].mxu0
  %v2660 = vadd.f32 %v1918, %v2659
  %v2661 = vpop.f32.mrb[0].mxu0
  %v2662 = vadd.f32 %v1922, %v2661
  %v2663 = vpop.f32.mrb[0].mxu0
  %v2664 = vadd.f32 %v1918, %v2663
  %v2665 = vpop.f32.mrb[0].mxu0
  %v2666 = vadd.f32 %v1922, %v2665
  %2667 = vmatprep.mubr.bf16.mxu0 %v2156
  %2668 = vmatmul.mubr.bf16.gmra.mrb[0].mxu0 %v1893
  %v2669 = vpop.f32.mrb[0].mxu0
  %v2670 = vadd.f32 %v1918, %v2669
  %v2671 = vpop.f32.mrb[0].mxu0
  %v2672 = vadd.f32 %v1922, %v2671
  %v2673 = vpop.f32.mrb[0].mxu0
  %v2674 = vadd.f32 %v1918, %v2673
  %v2675 = vpop.f32.mrb[0].mxu0
  %v2676 = vadd.f32 %v1922, %v2675
  %2677 = vdwg.mxu0
  %v2678 = vmax.f32 %v2200, %v2220
  %v2679 = vmax.f32 %v2202, %v2222
  %v2680 = vmax.f32 %v2204, %v2224
  %v2681 = vmax.f32 %v2206, %v2226
  %v2682 = vmax.f32 %v2210, %v2230
  %v2683 = vmax.f32 %v2212, %v2232
  %v2684 = vmax.f32 %v2214, %v2234
  %v2685 = vmax.f32 %v2216, %v2236
  %v2686 = vmax.f32 %v2240, %v2260
  %v2687 = vmax.f32 %v2242, %v2262
  %v2688 = vmax.f32 %v2244, %v2264
  %v2689 = vmax.f32 %v2246, %v2266
  %v2690 = vmax.f32 %v2250, %v2270
  %v2691 = vmax.f32 %v2252, %v2272
  %v2692 = vmax.f32 %v2254, %v2274
  %v2693 = vmax.f32 %v2256, %v2276
  %v2694 = vmax.f32 %v2280, %v2300
  %v2695 = vmax.f32 %v2282, %v2302
  %v2696 = vmax.f32 %v2284, %v2304
  %v2697 = vmax.f32 %v2286, %v2306
  %v2698 = vmax.f32 %v2290, %v2310
  %v2699 = vmax.f32 %v2292, %v2312
  %v2700 = vmax.f32 %v2294, %v2314
  %v2701 = vmax.f32 %v2296, %v2316
  %v2702 = vmax.f32 %v2320, %v2340
  %v2703 = vmax.f32 %v2322, %v2342
  %v2704 = vmax.f32 %v2324, %v2344
  %v2705 = vmax.f32 %v2326, %v2346
  %v2706 = vmax.f32 %v2330, %v2350
  %v2707 = vmax.f32 %v2332, %v2352
  %v2708 = vmax.f32 %v2334, %v2354
  %v2709 = vmax.f32 %v2336, %v2356
  %v2710 = vmax.f32 %v2360, %v2380
  %v2711 = vmax.f32 %v2362, %v2382
  %v2712 = vmax.f32 %v2364, %v2384
  %v2713 = vmax.f32 %v2366, %v2386
  %v2714 = vmax.f32 %v2370, %v2390
  %v2715 = vmax.f32 %v2372, %v2392
  %v2716 = vmax.f32 %v2374, %v2394
  %v2717 = vmax.f32 %v2376, %v2396
  %v2718 = vmax.f32 %v2400, %v2420
  %v2719 = vmax.f32 %v2402, %v2422
  %v2720 = vmax.f32 %v2404, %v2424
  %v2721 = vmax.f32 %v2406, %v2426
  %v2722 = vmax.f32 %v2410, %v2430
  %v2723 = vmax.f32 %v2412, %v2432
  %v2724 = vmax.f32 %v2414, %v2434
  %v2725 = vmax.f32 %v2416, %v2436
  %v2726 = vmax.f32 %v2440, %v2460
  %v2727 = vmax.f32 %v2442, %v2462
  %v2728 = vmax.f32 %v2444, %v2464
  %v2729 = vmax.f32 %v2446, %v2466
  %v2730 = vmax.f32 %v2450, %v2470
  %v2731 = vmax.f32 %v2452, %v2472
  %v2732 = vmax.f32 %v2454, %v2474
  %v2733 = vmax.f32 %v2456, %v2476
  %v2734 = vmax.f32 %v2480, %v2500
  %v2735 = vmax.f32 %v2482, %v2502
  %v2736 = vmax.f32 %v2484, %v2504
  %v2737 = vmax.f32 %v2486, %v2506
  %v2738 = vmax.f32 %v2490, %v2510
  %v2739 = vmax.f32 %v2492, %v2512
  %v2740 = vmax.f32 %v2494, %v2514
  %v2741 = vmax.f32 %v2496, %v2516
  %v2742 = vmax.f32 %v2520, %v2540
  %v2743 = vmax.f32 %v2522, %v2542
  %v2744 = vmax.f32 %v2524, %v2544
  %v2745 = vmax.f32 %v2526, %v2546
  %v2746 = vmax.f32 %v2530, %v2550
  %v2747 = vmax.f32 %v2532, %v2552
  %v2748 = vmax.f32 %v2534, %v2554
  %v2749 = vmax.f32 %v2536, %v2556
  %v2750 = vmax.f32 %v2560, %v2580
  %v2751 = vmax.f32 %v2562, %v2582
  %v2752 = vmax.f32 %v2564, %v2584
  %v2753 = vmax.f32 %v2566, %v2586
  %v2754 = vmax.f32 %v2570, %v2590
  %v2755 = vmax.f32 %v2572, %v2592
  %v2756 = vmax.f32 %v2574, %v2594
  %v2757 = vmax.f32 %v2576, %v2596
  %v2758 = vmax.f32 %v2600, %v2620
  %v2759 = vmax.f32 %v2602, %v2622
  %v2760 = vmax.f32 %v2604, %v2624
  %v2761 = vmax.f32 %v2606, %v2626
  %v2762 = vmax.f32 %v2610, %v2630
  %v2763 = vmax.f32 %v2612, %v2632
  %v2764 = vmax.f32 %v2614, %v2634
  %v2765 = vmax.f32 %v2616, %v2636
  %v2766 = vmax.f32 %v2640, %v2660
  %v2767 = vmax.f32 %v2642, %v2662
  %v2768 = vmax.f32 %v2644, %v2664
  %v2769 = vmax.f32 %v2646, %v2666
  %v2770 = vmax.f32 %v2650, %v2670
  %v2771 = vmax.f32 %v2652, %v2672
  %v2772 = vmax.f32 %v2654, %v2674
  %v2773 = vmax.f32 %v2656, %v2676
  %v2774 = vpack.c.bf16 %v2680, %v2678
  %v2775 = vpack.c.bf16 %v2681, %v2679
  %v2776 = vpack.c.bf16 %v2684, %v2682
  %v2777 = vpack.c.bf16 %v2685, %v2683
  %v2778 = vpack.c.bf16 %v2688, %v2686
  %v2779 = vpack.c.bf16 %v2689, %v2687
  %v2780 = vpack.c.bf16 %v2692, %v2690
  %v2781 = vpack.c.bf16 %v2693, %v2691
  %v2782 = vpack.c.bf16 %v2696, %v2694
  %v2783 = vpack.c.bf16 %v2697, %v2695
  %v2784 = vpack.c.bf16 %v2700, %v2698
  %v2785 = vpack.c.bf16 %v2701, %v2699
  %v2786 = vpack.c.bf16 %v2704, %v2702
  %v2787 = vpack.c.bf16 %v2705, %v2703
  %v2788 = vpack.c.bf16 %v2708, %v2706
  %v2789 = vpack.c.bf16 %v2709, %v2707
  %v2790 = vpack.c.bf16 %v2712, %v2710
  %v2791 = vpack.c.bf16 %v2713, %v2711
  %v2792 = vpack.c.bf16 %v2716, %v2714
  %v2793 = vpack.c.bf16 %v2717, %v2715
  %v2794 = vpack.c.bf16 %v2720, %v2718
  %v2795 = vpack.c.bf16 %v2721, %v2719
  %v2796 = vpack.c.bf16 %v2724, %v2722
  %v2797 = vpack.c.bf16 %v2725, %v2723
  %v2798 = vpack.c.bf16 %v2728, %v2726
  %v2799 = vpack.c.bf16 %v2729, %v2727
  %v2800 = vpack.c.bf16 %v2732, %v2730
  %v2801 = vpack.c.bf16 %v2733, %v2731
  %v2802 = vpack.c.bf16 %v2736, %v2734
  %v2803 = vpack.c.bf16 %v2737, %v2735
  %v2804 = vpack.c.bf16 %v2740, %v2738
  %v2805 = vpack.c.bf16 %v2741, %v2739
  %v2806 = vpack.c.bf16 %v2744, %v2742
  %v2807 = vpack.c.bf16 %v2745, %v2743
  %v2808 = vpack.c.bf16 %v2748, %v2746
  %v2809 = vpack.c.bf16 %v2749, %v2747
  %v2810 = vpack.c.bf16 %v2752, %v2750
  %v2811 = vpack.c.bf16 %v2753, %v2751
  %v2812 = vpack.c.bf16 %v2756, %v2754
  %v2813 = vpack.c.bf16 %v2757, %v2755
  %v2814 = vpack.c.bf16 %v2760, %v2758
  %v2815 = vpack.c.bf16 %v2761, %v2759
  %v2816 = vpack.c.bf16 %v2764, %v2762
  %v2817 = vpack.c.bf16 %v2765, %v2763
  %v2818 = vpack.c.bf16 %v2768, %v2766
  %v2819 = vpack.c.bf16 %v2769, %v2767
  %v2820 = vpack.c.bf16 %v2772, %v2770
  %v2821 = vpack.c.bf16 %v2773, %v2771
  %v2822 = vld [vmem:[%s3] sm:$0xff]
  %v2823 = vld [vmem:[%s3 + $0x8] sm:$0xff]
  %v2824 = vld [vmem:[%s3 + $0x10] sm:$0xff]
  %v2825 = vld [vmem:[%s3 + $0x18] sm:$0xff]
  %v2826 = vld [vmem:[%s3 + $0x20] sm:$0xff]
  %v2827 = vld [vmem:[%s3 + $0x28] sm:$0xff]
  %v2828 = vld [vmem:[%s3 + $0x30] sm:$0xff]
  %v2829 = vld [vmem:[%s3 + $0x38] sm:$0xff]
  %v2830 = vld [vmem:[%s3 + $0x40] sm:$0xff]
  %v2831 = vld [vmem:[%s3 + $0x48] sm:$0xff]
  %v2832 = vld [vmem:[%s3 + $0x50] sm:$0xff]
  %v2833 = vld [vmem:[%s3 + $0x58] sm:$0xff]
  %v2834 = vld [vmem:[%s3 + $0x60] sm:$0xff]
  %v2835 = vld [vmem:[%s3 + $0x68] sm:$0xff]
  %v2836 = vld [vmem:[%s3 + $0x70] sm:$0xff]
  %v2837 = vld [vmem:[%s3 + $0x78] sm:$0xff]
  %v2838 = vld [vmem:[%s3 + $0x80] sm:$0xff]
  %v2839 = vld [vmem:[%s3 + $0x88] sm:$0xff]
  %v2840 = vld [vmem:[%s3 + $0x90] sm:$0xff]
  %v2841 = vld [vmem:[%s3 + $0x98] sm:$0xff]
  %v2842 = vld [vmem:[%s3 + $0xa0] sm:$0xff]
  %v2843 = vld [vmem:[%s3 + $0xa8] sm:$0xff]
  %v2844 = vld [vmem:[%s3 + $0xb0] sm:$0xff]
  %v2845 = vld [vmem:[%s3 + $0xb8] sm:$0xff]
  %v2846 = vld [vmem:[%s3 + $0xc0] sm:$0xff]
  %v2847 = vld [vmem:[%s3 + $0xc8] sm:$0xff]
  %v2848 = vld [vmem:[%s3 + $0xd0] sm:$0xff]
  %v2849 = vld [vmem:[%s3 + $0xd8] sm:$0xff]
  %v2850 = vld [vmem:[%s3 + $0xe0] sm:$0xff]
  %v2851 = vld [vmem:[%s3 + $0xe8] sm:$0xff]
  %v2882 = vunpack.c.l.b16 %v2822
  %v2883 = vunpack.c.h.b16 %v2822
  %v2884 = vunpack.c.l.b16 %v2823
  %v2885 = vunpack.c.h.b16 %v2823
  %v2886 = vunpack.c.l.b16 %v2824
  %v2887 = vunpack.c.h.b16 %v2824
  %v2888 = vunpack.c.l.b16 %v2825
  %v2889 = vunpack.c.h.b16 %v2825
  %v2890 = vunpack.c.l.b16 %v2826
  %v2891 = vunpack.c.h.b16 %v2826
  %v2892 = vunpack.c.l.b16 %v2827
  %v2893 = vunpack.c.h.b16 %v2827
  %v2894 = vunpack.c.l.b16 %v2828
  %v2895 = vunpack.c.h.b16 %v2828
  %v2896 = vunpack.c.l.b16 %v2829
  %v2897 = vunpack.c.h.b16 %v2829
  %v2898 = vunpack.c.l.b16 %v2830
  %v2899 = vunpack.c.h.b16 %v2830
  %v2900 = vunpack.c.l.b16 %v2831
  %v2901 = vunpack.c.h.b16 %v2831
  %v2902 = vunpack.c.l.b16 %v2832
  %v2903 = vunpack.c.h.b16 %v2832
  %v2904 = vunpack.c.l.b16 %v2833
  %v2905 = vunpack.c.h.b16 %v2833
  %v2906 = vunpack.c.l.b16 %v2834
  %v2907 = vunpack.c.h.b16 %v2834
  %v2908 = vunpack.c.l.b16 %v2835
  %v2909 = vunpack.c.h.b16 %v2835
  %v2910 = vunpack.c.l.b16 %v2836
  %v2911 = vunpack.c.h.b16 %v2836
  %v2912 = vunpack.c.l.b16 %v2837
  %v2913 = vunpack.c.h.b16 %v2837
  %v2914 = vunpack.c.l.b16 %v2838
  %v2915 = vunpack.c.h.b16 %v2838
  %v2916 = vunpack.c.l.b16 %v2839
  %v2917 = vunpack.c.h.b16 %v2839
  %v2918 = vunpack.c.l.b16 %v2840
  %v2919 = vunpack.c.h.b16 %v2840
  %v2920 = vunpack.c.l.b16 %v2841
  %v2921 = vunpack.c.h.b16 %v2841
  %v2922 = vunpack.c.l.b16 %v2842
  %v2923 = vunpack.c.h.b16 %v2842
  %v2924 = vunpack.c.l.b16 %v2843
  %v2925 = vunpack.c.h.b16 %v2843
  %v2926 = vunpack.c.l.b16 %v2844
  %v2927 = vunpack.c.h.b16 %v2844
  %v2928 = vunpack.c.l.b16 %v2845
  %v2929 = vunpack.c.h.b16 %v2845
  %v2930 = vunpack.c.l.b16 %v2846
  %v2931 = vunpack.c.h.b16 %v2846
  %v2932 = vunpack.c.l.b16 %v2847
  %v2933 = vunpack.c.h.b16 %v2847
  %v2934 = vunpack.c.l.b16 %v2848
  %v2935 = vunpack.c.h.b16 %v2848
  %v2936 = vunpack.c.l.b16 %v2849
  %v2937 = vunpack.c.h.b16 %v2849
  %v2938 = vunpack.c.l.b16 %v2850
  %v2939 = vunpack.c.h.b16 %v2850
  %v2940 = vunpack.c.l.b16 %v2851
  %v2941 = vunpack.c.h.b16 %v2851
  %v2942 = vpack.c.b16 %v2884, %v2882
  %v2943 = vpack.c.b16 %v2885, %v2883
  %v2944 = vpack.c.b16 %v2888, %v2886
  %v2945 = vpack.c.b16 %v2889, %v2887
  %v2946 = vpack.c.b16 %v2892, %v2890
  %v2947 = vpack.c.b16 %v2893, %v2891
  %v2948 = vpack.c.b16 %v2896, %v2894
  %v2949 = vpack.c.b16 %v2897, %v2895
  %v2950 = vpack.c.b16 %v2900, %v2898
  %v2951 = vpack.c.b16 %v2901, %v2899
  %v2952 = vpack.c.b16 %v2904, %v2902
  %v2953 = vpack.c.b16 %v2905, %v2903
  %v2954 = vpack.c.b16 %v2908, %v2906
  %v2955 = vpack.c.b16 %v2909, %v2907
  %v2956 = vpack.c.b16 %v2912, %v2910
  %v2957 = vpack.c.b16 %v2913, %v2911
  %v2958 = vpack.c.b16 %v2916, %v2914
  %v2959 = vpack.c.b16 %v2917, %v2915
  %v2960 = vpack.c.b16 %v2920, %v2918
  %v2961 = vpack.c.b16 %v2921, %v2919
  %v2962 = vpack.c.b16 %v2924, %v2922
  %v2963 = vpack.c.b16 %v2925, %v2923
  %v2964 = vpack.c.b16 %v2928, %v2926
  %v2965 = vpack.c.b16 %v2929, %v2927
  %v2966 = vpack.c.b16 %v2932, %v2930
  %v2967 = vpack.c.b16 %v2933, %v2931
  %v2968 = vpack.c.b16 %v2936, %v2934
  %v2969 = vpack.c.b16 %v2937, %v2935
  %v2970 = vpack.c.b16 %v2940, %v2938
  %v2971 = vpack.c.b16 %v2941, %v2939
  %v3003 = vsel %vm1702, %v2775, 0
  %v3006 = vsel %vm1702, %v2777, 0
  %v3009 = vsel %vm1702, %v2779, 0
  %v3012 = vsel %vm1702, %v2781, 0
  %v3015 = vsel %vm1702, %v2783, 0
  %v3018 = vsel %vm1702, %v2785, 0
  %v3021 = vsel %vm1702, %v2787, 0
  %v3024 = vsel %vm1702, %v2789, 0
  %v3027 = vsel %vm1702, %v2791, 0
  %v3030 = vsel %vm1702, %v2793, 0
  %v3033 = vsel %vm1702, %v2795, 0
  %v3036 = vsel %vm1702, %v2797, 0
  %v3039 = vsel %vm1702, %v2799, 0
  %v3042 = vsel %vm1702, %v2801, 0
  %v3045 = vsel %vm1702, %v2803, 0
  %v3048 = vsel %vm1702, %v2805, 0
  %v3051 = vsel %vm1702, %v2807, 0
  %v3054 = vsel %vm1702, %v2809, 0
  %v3057 = vsel %vm1702, %v2811, 0
  %v3060 = vsel %vm1702, %v2813, 0
  %v3063 = vsel %vm1702, %v2815, 0
  %v3066 = vsel %vm1702, %v2817, 0
  %v3069 = vsel %vm1702, %v2819, 0
  %v3072 = vsel %vm1702, %v2821, 0
  %3074 = vmatprep.subr.bf16.mxu0 %v2943
  %3075 = vmatpush1.bf16.msra.mxu0 %v2942
  %3076 = vmatprep.subr.bf16.mxu0 %v2945
  %3077 = vmatpush1.bf16.msra.mxu0 %v2944
  %3078 = vmatprep.subr.bf16.mxu0 %v2947
  %3079 = vmatpush1.bf16.msra.mxu0 %v2946
  %3080 = vmatprep.subr.bf16.mxu0 %v2949
  %3081 = vmatpush1.bf16.msra.mxu0 %v2948
  %3082 = vmatprep.subr.bf16.mxu0 %v2951
  %3083 = vmatpush1.bf16.msra.mxu0 %v2950
  %3084 = vmatprep.subr.bf16.mxu0 %v2953
  %3085 = vmatpush1.bf16.msra.mxu0 %v2952
  %3086 = vmatprep.subr.bf16.mxu0 %v2955
  %3087 = vmatpush1.bf16.msra.mxu0 %v2954
  %3088 = vmatprep.subr.bf16.mxu0 %v2957
  %3089 = vmatpush1.bf16.msra.mxu0 %v2956
  %3090 = vmatprep.subr.bf16.mxu0 %v2959
  %3091 = vmatpush1.bf16.msra.mxu0 %v2958
  %3092 = vmatprep.subr.bf16.mxu0 %v2961
  %3093 = vmatpush1.bf16.msra.mxu0 %v2960
  %3094 = vmatprep.subr.bf16.mxu0 %v2963
  %3095 = vmatpush1.bf16.msra.mxu0 %v2962
  %3096 = vmatprep.subr.bf16.mxu0 %v2965
  %3097 = vmatpush1.bf16.msra.mxu0 %v2964
  %3098 = vmatprep.subr.bf16.mxu0 %v2967
  %3099 = vmatpush1.bf16.msra.mxu0 %v2966
  %3100 = vmatprep.subr.bf16.mxu0 %v2969
  %3101 = vmatpush1.bf16.msra.mxu0 %v2968
  %3102 = vmatprep.subr.bf16.mxu0 %v2971
  %3103 = vmatpush1.bf16.msra.mxu0 %v2970
  %3104 = vmatprep.subr.bf16.mxu0 0
  %3105 = vmatpush1.bf16.msra.mxu0 0
  %3106 = vmatprep.mubr.bf16.mxu0 %v3003
  %3107 = vmatmul.mubr.bf16.gmra.mrb[0].mxu0 %v2774
  %v3108 = vpop.f32.mrb[0].mxu0
  %v3109 = vadd.f32 0.0, %v3108
  %v3110 = vpop.f32.mrb[0].mxu0
  %v3111 = vadd.f32 0.0, %v3110
  %v3112 = vpop.f32.mrb[0].mxu0
  %v3113 = vadd.f32 0.0, %v3112
  %v3114 = vpop.f32.mrb[0].mxu0
  %v3115 = vadd.f32 0.0, %v3114
  %3116 = vmatprep.mubr.bf16.mxu0 %v3006
  %3117 = vmatmul.mubr.bf16.gmra.mrb[0].mxu0 %v2776
  %v3118 = vpop.f32.mrb[0].mxu0
  %v3119 = vadd.f32 0.0, %v3118
  %v3120 = vpop.f32.mrb[0].mxu0
  %v3121 = vadd.f32 0.0, %v3120
  %v3122 = vpop.f32.mrb[0].mxu0
  %v3123 = vadd.f32 0.0, %v3122
  %v3124 = vpop.f32.mrb[0].mxu0
  %v3125 = vadd.f32 0.0, %v3124
  %3126 = vmatprep.mubr.bf16.mxu0 %v3009
  %3127 = vmatmul.mubr.bf16.gmra.mrb[0].mxu0 %v2778
  %v3128 = vpop.f32.mrb[0].mxu0
  %v3129 = vadd.f32 0.0, %v3128
  %v3130 = vpop.f32.mrb[0].mxu0
  %v3131 = vadd.f32 0.0, %v3130
  %v3132 = vpop.f32.mrb[0].mxu0
  %v3133 = vadd.f32 0.0, %v3132
  %v3134 = vpop.f32.mrb[0].mxu0
  %v3135 = vadd.f32 0.0, %v3134
  %3136 = vmatprep.mubr.bf16.mxu0 %v3012
  %3137 = vmatmul.mubr.bf16.gmra.mrb[0].mxu0 %v2780
  %v3138 = vpop.f32.mrb[0].mxu0
  %v3139 = vadd.f32 0.0, %v3138
  %v3140 = vpop.f32.mrb[0].mxu0
  %v3141 = vadd.f32 0.0, %v3140
  %v3142 = vpop.f32.mrb[0].mxu0
  %v3143 = vadd.f32 0.0, %v3142
  %v3144 = vpop.f32.mrb[0].mxu0
  %v3145 = vadd.f32 0.0, %v3144
  %3146 = vmatprep.mubr.bf16.mxu0 %v3015
  %3147 = vmatmul.mubr.bf16.gmra.mrb[0].mxu0 %v2782
  %v3148 = vpop.f32.mrb[0].mxu0
  %v3149 = vadd.f32 0.0, %v3148
  %v3150 = vpop.f32.mrb[0].mxu0
  %v3151 = vadd.f32 0.0, %v3150
  %v3152 = vpop.f32.mrb[0].mxu0
  %v3153 = vadd.f32 0.0, %v3152
  %v3154 = vpop.f32.mrb[0].mxu0
  %v3155 = vadd.f32 0.0, %v3154
  %3156 = vmatprep.mubr.bf16.mxu0 %v3018
  %3157 = vmatmul.mubr.bf16.gmra.mrb[0].mxu0 %v2784
  %v3158 = vpop.f32.mrb[0].mxu0
  %v3159 = vadd.f32 0.0, %v3158
  %v3160 = vpop.f32.mrb[0].mxu0
  %v3161 = vadd.f32 0.0, %v3160
  %v3162 = vpop.f32.mrb[0].mxu0
  %v3163 = vadd.f32 0.0, %v3162
  %v3164 = vpop.f32.mrb[0].mxu0
  %v3165 = vadd.f32 0.0, %v3164
  %3166 = vmatprep.mubr.bf16.mxu0 %v3021
  %3167 = vmatmul.mubr.bf16.gmra.mrb[0].mxu0 %v2786
  %v3168 = vpop.f32.mrb[0].mxu0
  %v3169 = vadd.f32 0.0, %v3168
  %v3170 = vpop.f32.mrb[0].mxu0
  %v3171 = vadd.f32 0.0, %v3170
  %v3172 = vpop.f32.mrb[0].mxu0
  %v3173 = vadd.f32 0.0, %v3172
  %v3174 = vpop.f32.mrb[0].mxu0
  %v3175 = vadd.f32 0.0, %v3174
  %3176 = vmatprep.mubr.bf16.mxu0 %v3024
  %3177 = vmatmul.mubr.bf16.gmra.mrb[0].mxu0 %v2788
  %v3178 = vpop.f32.mrb[0].mxu0
  %v3179 = vadd.f32 0.0, %v3178
  %v3180 = vpop.f32.mrb[0].mxu0
  %v3181 = vadd.f32 0.0, %v3180
  %v3182 = vpop.f32.mrb[0].mxu0
  %v3183 = vadd.f32 0.0, %v3182
  %v3184 = vpop.f32.mrb[0].mxu0
  %v3185 = vadd.f32 0.0, %v3184
  %3186 = vmatprep.mubr.bf16.mxu0 %v3027
  %3187 = vmatmul.mubr.bf16.gmra.mrb[0].mxu0 %v2790
  %v3188 = vpop.f32.mrb[0].mxu0
  %v3189 = vadd.f32 0.0, %v3188
  %v3190 = vpop.f32.mrb[0].mxu0
  %v3191 = vadd.f32 0.0, %v3190
  %v3192 = vpop.f32.mrb[0].mxu0
  %v3193 = vadd.f32 0.0, %v3192
  %v3194 = vpop.f32.mrb[0].mxu0
  %v3195 = vadd.f32 0.0, %v3194
  %3196 = vmatprep.mubr.bf16.mxu0 %v3030
  %3197 = vmatmul.mubr.bf16.gmra.mrb[0].mxu0 %v2792
  %v3198 = vpop.f32.mrb[0].mxu0
  %v3199 = vadd.f32 0.0, %v3198
  %v3200 = vpop.f32.mrb[0].mxu0
  %v3201 = vadd.f32 0.0, %v3200
  %v3202 = vpop.f32.mrb[0].mxu0
  %v3203 = vadd.f32 0.0, %v3202
  %v3204 = vpop.f32.mrb[0].mxu0
  %v3205 = vadd.f32 0.0, %v3204
  %3206 = vmatprep.mubr.bf16.mxu0 %v3033
  %3207 = vmatmul.mubr.bf16.gmra.mrb[0].mxu0 %v2794
  %v3208 = vpop.f32.mrb[0].mxu0
  %v3209 = vadd.f32 0.0, %v3208
  %v3210 = vpop.f32.mrb[0].mxu0
  %v3211 = vadd.f32 0.0, %v3210
  %v3212 = vpop.f32.mrb[0].mxu0
  %v3213 = vadd.f32 0.0, %v3212
  %v3214 = vpop.f32.mrb[0].mxu0
  %v3215 = vadd.f32 0.0, %v3214
  %3216 = vmatprep.mubr.bf16.mxu0 %v3036
  %3217 = vmatmul.mubr.bf16.gmra.mrb[0].mxu0 %v2796
  %v3218 = vpop.f32.mrb[0].mxu0
  %v3219 = vadd.f32 0.0, %v3218
  %v3220 = vpop.f32.mrb[0].mxu0
  %v3221 = vadd.f32 0.0, %v3220
  %v3222 = vpop.f32.mrb[0].mxu0
  %v3223 = vadd.f32 0.0, %v3222
  %v3224 = vpop.f32.mrb[0].mxu0
  %v3225 = vadd.f32 0.0, %v3224
  %3226 = vmatprep.mubr.bf16.mxu0 %v3039
  %3227 = vmatmul.mubr.bf16.gmra.mrb[0].mxu0 %v2798
  %v3228 = vpop.f32.mrb[0].mxu0
  %v3229 = vadd.f32 0.0, %v3228
  %v3230 = vpop.f32.mrb[0].mxu0
  %v3231 = vadd.f32 0.0, %v3230
  %v3232 = vpop.f32.mrb[0].mxu0
  %v3233 = vadd.f32 0.0, %v3232
  %v3234 = vpop.f32.mrb[0].mxu0
  %v3235 = vadd.f32 0.0, %v3234
  %3236 = vmatprep.mubr.bf16.mxu0 %v3042
  %3237 = vmatmul.mubr.bf16.gmra.mrb[0].mxu0 %v2800
  %v3238 = vpop.f32.mrb[0].mxu0
  %v3239 = vadd.f32 0.0, %v3238
  %v3240 = vpop.f32.mrb[0].mxu0
  %v3241 = vadd.f32 0.0, %v3240
  %v3242 = vpop.f32.mrb[0].mxu0
  %v3243 = vadd.f32 0.0, %v3242
  %v3244 = vpop.f32.mrb[0].mxu0
  %v3245 = vadd.f32 0.0, %v3244
  %3246 = vmatprep.mubr.bf16.mxu0 %v3045
  %3247 = vmatmul.mubr.bf16.gmra.mrb[0].mxu0 %v2802
  %v3248 = vpop.f32.mrb[0].mxu0
  %v3249 = vadd.f32 0.0, %v3248
  %v3250 = vpop.f32.mrb[0].mxu0
  %v3251 = vadd.f32 0.0, %v3250
  %v3252 = vpop.f32.mrb[0].mxu0
  %v3253 = vadd.f32 0.0, %v3252
  %v3254 = vpop.f32.mrb[0].mxu0
  %v3255 = vadd.f32 0.0, %v3254
  %3256 = vmatprep.mubr.bf16.mxu0 %v3048
  %3257 = vmatmul.mubr.bf16.gmra.mrb[0].mxu0 %v2804
  %v3258 = vpop.f32.mrb[0].mxu0
  %v3259 = vadd.f32 0.0, %v3258
  %v3260 = vpop.f32.mrb[0].mxu0
  %v3261 = vadd.f32 0.0, %v3260
  %v3262 = vpop.f32.mrb[0].mxu0
  %v3263 = vadd.f32 0.0, %v3262
  %v3264 = vpop.f32.mrb[0].mxu0
  %v3265 = vadd.f32 0.0, %v3264
  %3266 = vmatprep.mubr.bf16.mxu0 %v3051
  %3267 = vmatmul.mubr.bf16.gmra.mrb[0].mxu0 %v2806
  %v3268 = vpop.f32.mrb[0].mxu0
  %v3269 = vadd.f32 0.0, %v3268
  %v3270 = vpop.f32.mrb[0].mxu0
  %v3271 = vadd.f32 0.0, %v3270
  %v3272 = vpop.f32.mrb[0].mxu0
  %v3273 = vadd.f32 0.0, %v3272
  %v3274 = vpop.f32.mrb[0].mxu0
  %v3275 = vadd.f32 0.0, %v3274
  %3276 = vmatprep.mubr.bf16.mxu0 %v3054
  %3277 = vmatmul.mubr.bf16.gmra.mrb[0].mxu0 %v2808
  %v3278 = vpop.f32.mrb[0].mxu0
  %v3279 = vadd.f32 0.0, %v3278
  %v3280 = vpop.f32.mrb[0].mxu0
  %v3281 = vadd.f32 0.0, %v3280
  %v3282 = vpop.f32.mrb[0].mxu0
  %v3283 = vadd.f32 0.0, %v3282
  %v3284 = vpop.f32.mrb[0].mxu0
  %v3285 = vadd.f32 0.0, %v3284
  %3286 = vmatprep.mubr.bf16.mxu0 %v3057
  %3287 = vmatmul.mubr.bf16.gmra.mrb[0].mxu0 %v2810
  %v3288 = vpop.f32.mrb[0].mxu0
  %v3289 = vadd.f32 0.0, %v3288
  %v3290 = vpop.f32.mrb[0].mxu0
  %v3291 = vadd.f32 0.0, %v3290
  %v3292 = vpop.f32.mrb[0].mxu0
  %v3293 = vadd.f32 0.0, %v3292
  %v3294 = vpop.f32.mrb[0].mxu0
  %v3295 = vadd.f32 0.0, %v3294
  %3296 = vmatprep.mubr.bf16.mxu0 %v3060
  %3297 = vmatmul.mubr.bf16.gmra.mrb[0].mxu0 %v2812
  %v3298 = vpop.f32.mrb[0].mxu0
  %v3299 = vadd.f32 0.0, %v3298
  %v3300 = vpop.f32.mrb[0].mxu0
  %v3301 = vadd.f32 0.0, %v3300
  %v3302 = vpop.f32.mrb[0].mxu0
  %v3303 = vadd.f32 0.0, %v3302
  %v3304 = vpop.f32.mrb[0].mxu0
  %v3305 = vadd.f32 0.0, %v3304
  %3306 = vmatprep.mubr.bf16.mxu0 %v3063
  %3307 = vmatmul.mubr.bf16.gmra.mrb[0].mxu0 %v2814
  %v3308 = vpop.f32.mrb[0].mxu0
  %v3309 = vadd.f32 0.0, %v3308
  %v3310 = vpop.f32.mrb[0].mxu0
  %v3311 = vadd.f32 0.0, %v3310
  %v3312 = vpop.f32.mrb[0].mxu0
  %v3313 = vadd.f32 0.0, %v3312
  %v3314 = vpop.f32.mrb[0].mxu0
  %v3315 = vadd.f32 0.0, %v3314
  %3316 = vmatprep.mubr.bf16.mxu0 %v3066
  %3317 = vmatmul.mubr.bf16.gmra.mrb[0].mxu0 %v2816
  %v3318 = vpop.f32.mrb[0].mxu0
  %v3319 = vadd.f32 0.0, %v3318
  %v3320 = vpop.f32.mrb[0].mxu0
  %v3321 = vadd.f32 0.0, %v3320
  %v3322 = vpop.f32.mrb[0].mxu0
  %v3323 = vadd.f32 0.0, %v3322
  %v3324 = vpop.f32.mrb[0].mxu0
  %v3325 = vadd.f32 0.0, %v3324
  %3326 = vmatprep.mubr.bf16.mxu0 %v3069
  %3327 = vmatmul.mubr.bf16.gmra.mrb[0].mxu0 %v2818
  %v3328 = vpop.f32.mrb[0].mxu0
  %v3329 = vadd.f32 0.0, %v3328
  %v3330 = vpop.f32.mrb[0].mxu0
  %v3331 = vadd.f32 0.0, %v3330
  %v3332 = vpop.f32.mrb[0].mxu0
  %v3333 = vadd.f32 0.0, %v3332
  %v3334 = vpop.f32.mrb[0].mxu0
  %v3335 = vadd.f32 0.0, %v3334
  %3336 = vmatprep.mubr.bf16.mxu0 %v3072
  %3337 = vmatmul.mubr.bf16.gmra.mrb[0].mxu0 %v2820
  %v3338 = vpop.f32.mrb[0].mxu0
  %v3339 = vadd.f32 0.0, %v3338
  %v3340 = vpop.f32.mrb[0].mxu0
  %v3341 = vadd.f32 0.0, %v3340
  %v3342 = vpop.f32.mrb[0].mxu0
  %v3343 = vadd.f32 0.0, %v3342
  %v3344 = vpop.f32.mrb[0].mxu0
  %v3345 = vadd.f32 0.0, %v3344
  %3346 = vdwg.mxu0
  %v3347 = vmax.f32 %v3109, %v3111
  %v3348 = vmax.f32 %v3113, %v3115
  %v3349 = vmax.f32 %v3119, %v3121
  %v3350 = vmax.f32 %v3123, %v3125
  %v3351 = vmax.f32 %v3129, %v3131
  %v3352 = vmax.f32 %v3133, %v3135
  %v3353 = vmax.f32 %v3139, %v3141
  %v3354 = vmax.f32 %v3143, %v3145
  %v3355 = vmax.f32 %v3149, %v3151
  %v3356 = vmax.f32 %v3153, %v3155
  %v3357 = vmax.f32 %v3159, %v3161
  %v3358 = vmax.f32 %v3163, %v3165
  %v3359 = vmax.f32 %v3169, %v3171
  %v3360 = vmax.f32 %v3173, %v3175
  %v3361 = vmax.f32 %v3179, %v3181
  %v3362 = vmax.f32 %v3183, %v3185
  %v3363 = vmax.f32 %v3189, %v3191
  %v3364 = vmax.f32 %v3193, %v3195
  %v3365 = vmax.f32 %v3199, %v3201
  %v3366 = vmax.f32 %v3203, %v3205
  %v3367 = vmax.f32 %v3209, %v3211
  %v3368 = vmax.f32 %v3213, %v3215
  %v3369 = vmax.f32 %v3219, %v3221
  %v3370 = vmax.f32 %v3223, %v3225
  %v3371 = vmax.f32 %v3229, %v3231
  %v3372 = vmax.f32 %v3233, %v3235
  %v3373 = vmax.f32 %v3239, %v3241
  %v3374 = vmax.f32 %v3243, %v3245
  %v3375 = vmax.f32 %v3249, %v3251
  %v3376 = vmax.f32 %v3253, %v3255
  %v3377 = vmax.f32 %v3259, %v3261
  %v3378 = vmax.f32 %v3263, %v3265
  %v3379 = vmax.f32 %v3269, %v3271
  %v3380 = vmax.f32 %v3273, %v3275
  %v3381 = vmax.f32 %v3279, %v3281
  %v3382 = vmax.f32 %v3283, %v3285
  %v3383 = vmax.f32 %v3289, %v3291
  %v3384 = vmax.f32 %v3293, %v3295
  %v3385 = vmax.f32 %v3299, %v3301
  %v3386 = vmax.f32 %v3303, %v3305
  %v3387 = vmax.f32 %v3309, %v3311
  %v3388 = vmax.f32 %v3313, %v3315
  %v3389 = vmax.f32 %v3319, %v3321
  %v3390 = vmax.f32 %v3323, %v3325
  %v3391 = vmax.f32 %v3329, %v3331
  %v3392 = vmax.f32 %v3333, %v3335
  %v3393 = vmax.f32 %v3339, %v3341
  %v3394 = vmax.f32 %v3343, %v3345
  %v3395 = vmax.f32 %v3347, 0.0
  %v3396 = vmax.f32 %v3348, 0.0
  %v3397 = vmax.f32 %v3349, 0.0
  %v3398 = vmax.f32 %v3350, 0.0
  %v3399 = vmax.f32 %v3351, 0.0
  %v3400 = vmax.f32 %v3352, 0.0
  %v3401 = vmax.f32 %v3353, 0.0
  %v3402 = vmax.f32 %v3354, 0.0
  %v3403 = vmax.f32 %v3355, 0.0
  %v3404 = vmax.f32 %v3356, 0.0
  %v3405 = vmax.f32 %v3357, 0.0
  %v3406 = vmax.f32 %v3358, 0.0
  %v3407 = vmax.f32 %v3359, 0.0
  %v3408 = vmax.f32 %v3360, 0.0
  %v3409 = vmax.f32 %v3361, 0.0
  %v3410 = vmax.f32 %v3362, 0.0
  %v3411 = vmax.f32 %v3363, 0.0
  %v3412 = vmax.f32 %v3364, 0.0
  %v3413 = vmax.f32 %v3365, 0.0
  %v3414 = vmax.f32 %v3366, 0.0
  %v3415 = vmax.f32 %v3367, 0.0
  %v3416 = vmax.f32 %v3368, 0.0
  %v3417 = vmax.f32 %v3369, 0.0
  %v3418 = vmax.f32 %v3370, 0.0
  %v3419 = vmax.f32 %v3371, 0.0
  %v3420 = vmax.f32 %v3372, 0.0
  %v3421 = vmax.f32 %v3373, 0.0
  %v3422 = vmax.f32 %v3374, 0.0
  %v3423 = vmax.f32 %v3375, 0.0
  %v3424 = vmax.f32 %v3376, 0.0
  %v3425 = vmax.f32 %v3377, 0.0
  %v3426 = vmax.f32 %v3378, 0.0
  %v3427 = vmax.f32 %v3379, 0.0
  %v3428 = vmax.f32 %v3380, 0.0
  %v3429 = vmax.f32 %v3381, 0.0
  %v3430 = vmax.f32 %v3382, 0.0
  %v3431 = vmax.f32 %v3383, 0.0
  %v3432 = vmax.f32 %v3384, 0.0
  %v3433 = vmax.f32 %v3385, 0.0
  %v3434 = vmax.f32 %v3386, 0.0
  %v3435 = vmax.f32 %v3387, 0.0
  %v3436 = vmax.f32 %v3388, 0.0
  %v3437 = vmax.f32 %v3389, 0.0
  %v3438 = vmax.f32 %v3390, 0.0
  %v3439 = vmax.f32 %v3391, 0.0
  %v3440 = vmax.f32 %v3392, 0.0
  %v3441 = vmax.f32 %v3393, 0.0
  %v3442 = vmax.f32 %v3394, 0.0
  %v3443 = vpack.c.bf16 %v3396, %v3395
  %v3444 = vpack.c.bf16 %v3398, %v3397
  %v3445 = vpack.c.bf16 %v3400, %v3399
  %v3446 = vpack.c.bf16 %v3402, %v3401
  %v3447 = vpack.c.bf16 %v3404, %v3403
  %v3448 = vpack.c.bf16 %v3406, %v3405
  %v3449 = vpack.c.bf16 %v3408, %v3407
  %v3450 = vpack.c.bf16 %v3410, %v3409
  %v3451 = vpack.c.bf16 %v3412, %v3411
  %v3452 = vpack.c.bf16 %v3414, %v3413
  %v3453 = vpack.c.bf16 %v3416, %v3415
  %v3454 = vpack.c.bf16 %v3418, %v3417
  %v3455 = vpack.c.bf16 %v3420, %v3419
  %v3456 = vpack.c.bf16 %v3422, %v3421
  %v3457 = vpack.c.bf16 %v3424, %v3423
  %v3458 = vpack.c.bf16 %v3426, %v3425
  %v3459 = vpack.c.bf16 %v3428, %v3427
  %v3460 = vpack.c.bf16 %v3430, %v3429
  %v3461 = vpack.c.bf16 %v3432, %v3431
  %v3462 = vpack.c.bf16 %v3434, %v3433
  %v3463 = vpack.c.bf16 %v3436, %v3435
  %v3464 = vpack.c.bf16 %v3438, %v3437
  %v3465 = vpack.c.bf16 %v3440, %v3439
  %v3466 = vpack.c.bf16 %v3442, %v3441
  %v3467 = vld [vmem:[%s4] sm:$0xff]
  %v3468 = vld [vmem:[%s4 + $0x8] sm:$0xff]
  %v3469 = vld [vmem:[%s4 + $0x10] sm:$0xff]
  %v3470 = vld [vmem:[%s4 + $0x18] sm:$0xff]
  %v3471 = vld [vmem:[%s4 + $0x20] sm:$0xff]
  %v3472 = vld [vmem:[%s4 + $0x28] sm:$0xff]
  %v3473 = vld [vmem:[%s4 + $0x30] sm:$0xff]
  %v3474 = vld [vmem:[%s4 + $0x38] sm:$0xff]
  %v3475 = vld [vmem:[%s4 + $0x40] sm:$0xff]
  %v3476 = vld [vmem:[%s4 + $0x48] sm:$0xff]
  %v3477 = vld [vmem:[%s4 + $0x50] sm:$0xff]
  %v3478 = vld [vmem:[%s4 + $0x58] sm:$0xff]
  %v3479 = vld [vmem:[%s4 + $0x60] sm:$0xff]
  %v3480 = vld [vmem:[%s4 + $0x68] sm:$0xff]
  %v3481 = vld [vmem:[%s4 + $0x70] sm:$0xff]
  %v3482 = vld [vmem:[%s4 + $0x78] sm:$0xff]
  %v3483 = vld [vmem:[%s4 + $0x80] sm:$0xff]
  %v3484 = vld [vmem:[%s4 + $0x88] sm:$0xff]
  %v3485 = vld [vmem:[%s4 + $0x90] sm:$0xff]
  %v3486 = vld [vmem:[%s4 + $0x98] sm:$0xff]
  %v3487 = vld [vmem:[%s4 + $0xa0] sm:$0xff]
  %v3488 = vld [vmem:[%s4 + $0xa8] sm:$0xff]
  %v3489 = vld [vmem:[%s4 + $0xb0] sm:$0xff]
  %v3490 = vld [vmem:[%s4 + $0xb8] sm:$0xff]
  %v3491 = vld [vmem:[%s4 + $0xc0] sm:$0xff]
  %v3492 = vld [vmem:[%s4 + $0xc8] sm:$0xff]
  %v3493 = vld [vmem:[%s4 + $0xd0] sm:$0xff]
  %v3494 = vld [vmem:[%s4 + $0xd8] sm:$0xff]
  %v3495 = vld [vmem:[%s4 + $0xe0] sm:$0xff]
  %v3496 = vld [vmem:[%s4 + $0xe8] sm:$0xff]
  %v3497 = vld [vmem:[%s4 + $0xf0] sm:$0xff]
  %v3498 = vld [vmem:[%s4 + $0xf8] sm:$0xff]
  %v3499 = vld [vmem:[%s4 + $0x100] sm:$0xff]
  %v3500 = vld [vmem:[%s4 + $0x108] sm:$0xff]
  %v3501 = vld [vmem:[%s4 + $0x110] sm:$0xff]
  %v3502 = vld [vmem:[%s4 + $0x118] sm:$0xff]
  %v3503 = vld [vmem:[%s4 + $0x120] sm:$0xff]
  %v3504 = vld [vmem:[%s4 + $0x128] sm:$0xff]
  %v3505 = vld [vmem:[%s4 + $0x130] sm:$0xff]
  %v3506 = vld [vmem:[%s4 + $0x138] sm:$0xff]
  %v3507 = vld [vmem:[%s4 + $0x140] sm:$0xff]
  %v3508 = vld [vmem:[%s4 + $0x148] sm:$0xff]
  %v3509 = vld [vmem:[%s4 + $0x150] sm:$0xff]
  %v3510 = vld [vmem:[%s4 + $0x158] sm:$0xff]
  %v3511 = vld [vmem:[%s4 + $0x160] sm:$0xff]
  %v3512 = vld [vmem:[%s4 + $0x168] sm:$0xff]
  %v3513 = vld [vmem:[%s4 + $0x170] sm:$0xff]
  %v3514 = vld [vmem:[%s4 + $0x178] sm:$0xff]
  %v3515 = vld [vmem:[%s4 + $0x180] sm:$0xff]
  %v3516 = vld [vmem:[%s4 + $0x188] sm:$0xff]
  %v3517 = vld [vmem:[%s4 + $0x190] sm:$0xff]
  %v3518 = vld [vmem:[%s4 + $0x198] sm:$0xff]
  %v3519 = vld [vmem:[%s4 + $0x1a0] sm:$0xff]
  %v3520 = vld [vmem:[%s4 + $0x1a8] sm:$0xff]
  %v3521 = vld [vmem:[%s4 + $0x1b0] sm:$0xff]
  %v3522 = vld [vmem:[%s4 + $0x1b8] sm:$0xff]
  %v3523 = vld [vmem:[%s4 + $0x1c0] sm:$0xff]
  %v3524 = vld [vmem:[%s4 + $0x1c8] sm:$0xff]
  %v3525 = vld [vmem:[%s4 + $0x1d0] sm:$0xff]
  %v3526 = vld [vmem:[%s4 + $0x1d8] sm:$0xff]
  %v3527 = vld [vmem:[%s4 + $0x1e0] sm:$0xff]
  %v3528 = vld [vmem:[%s4 + $0x1e8] sm:$0xff]
  %v3529 = vld [vmem:[%s4 + $0x1f0] sm:$0xff]
  %v3530 = vld [vmem:[%s4 + $0x1f8] sm:$0xff]
  %v3531 = vld [vmem:[%s4 + $0x200] sm:$0xff]
  %v3532 = vld [vmem:[%s4 + $0x208] sm:$0xff]
  %v3533 = vld [vmem:[%s4 + $0x210] sm:$0xff]
  %v3534 = vld [vmem:[%s4 + $0x218] sm:$0xff]
  %v3535 = vld [vmem:[%s4 + $0x220] sm:$0xff]
  %v3536 = vld [vmem:[%s4 + $0x228] sm:$0xff]
  %v3537 = vld [vmem:[%s4 + $0x230] sm:$0xff]
  %v3538 = vld [vmem:[%s4 + $0x238] sm:$0xff]
  %v3539 = vld [vmem:[%s4 + $0x240] sm:$0xff]
  %v3540 = vld [vmem:[%s4 + $0x248] sm:$0xff]
  %v3541 = vld [vmem:[%s4 + $0x250] sm:$0xff]
  %v3542 = vld [vmem:[%s4 + $0x258] sm:$0xff]
  %v3543 = vld [vmem:[%s4 + $0x260] sm:$0xff]
  %v3544 = vld [vmem:[%s4 + $0x268] sm:$0xff]
  %v3545 = vld [vmem:[%s4 + $0x270] sm:$0xff]
  %v3546 = vld [vmem:[%s4 + $0x278] sm:$0xff]
  %v3547 = vld [vmem:[%s5] sm:$0x3]
  %v3549 = vlaneseq
  %v3550 = vshrl.u32 %v3549, 7
  %v3551 = vsub.s32 0, %v3550
  %v3552 = vrot.slane %v3547, %v3551
  %v3553 = vlaneseq
  %v3554 = vshrl.u32 %v3553, 7
  %v3555 = vsub.s32 1, %v3554
  %v3556 = vrot.slane %v3547, %v3555
  %v3639 = vunpack.c.l.b16 %v3467
  %v3640 = vunpack.c.h.b16 %v3467
  %v3641 = vunpack.c.l.b16 %v3468
  %v3642 = vunpack.c.h.b16 %v3468
  %v3643 = vunpack.c.l.b16 %v3469
  %v3644 = vunpack.c.h.b16 %v3469
  %v3645 = vunpack.c.l.b16 %v3470
  %v3646 = vunpack.c.h.b16 %v3470
  %v3647 = vunpack.c.l.b16 %v3471
  %v3648 = vunpack.c.h.b16 %v3471
  %v3649 = vunpack.c.l.b16 %v3472
  %v3650 = vunpack.c.h.b16 %v3472
  %v3651 = vunpack.c.l.b16 %v3473
  %v3652 = vunpack.c.h.b16 %v3473
  %v3653 = vunpack.c.l.b16 %v3474
  %v3654 = vunpack.c.h.b16 %v3474
  %v3655 = vunpack.c.l.b16 %v3475
  %v3656 = vunpack.c.h.b16 %v3475
  %v3657 = vunpack.c.l.b16 %v3476
  %v3658 = vunpack.c.h.b16 %v3476
  %v3659 = vunpack.c.l.b16 %v3477
  %v3660 = vunpack.c.h.b16 %v3477
  %v3661 = vunpack.c.l.b16 %v3478
  %v3662 = vunpack.c.h.b16 %v3478
  %v3663 = vunpack.c.l.b16 %v3479
  %v3664 = vunpack.c.h.b16 %v3479
  %v3665 = vunpack.c.l.b16 %v3480
  %v3666 = vunpack.c.h.b16 %v3480
  %v3667 = vunpack.c.l.b16 %v3481
  %v3668 = vunpack.c.h.b16 %v3481
  %v3669 = vunpack.c.l.b16 %v3482
  %v3670 = vunpack.c.h.b16 %v3482
  %v3671 = vunpack.c.l.b16 %v3483
  %v3672 = vunpack.c.h.b16 %v3483
  %v3673 = vunpack.c.l.b16 %v3484
  %v3674 = vunpack.c.h.b16 %v3484
  %v3675 = vunpack.c.l.b16 %v3485
  %v3676 = vunpack.c.h.b16 %v3485
  %v3677 = vunpack.c.l.b16 %v3486
  %v3678 = vunpack.c.h.b16 %v3486
  %v3679 = vunpack.c.l.b16 %v3487
  %v3680 = vunpack.c.h.b16 %v3487
  %v3681 = vunpack.c.l.b16 %v3488
  %v3682 = vunpack.c.h.b16 %v3488
  %v3683 = vunpack.c.l.b16 %v3489
  %v3684 = vunpack.c.h.b16 %v3489
  %v3685 = vunpack.c.l.b16 %v3490
  %v3686 = vunpack.c.h.b16 %v3490
  %v3687 = vunpack.c.l.b16 %v3491
  %v3688 = vunpack.c.h.b16 %v3491
  %v3689 = vunpack.c.l.b16 %v3492
  %v3690 = vunpack.c.h.b16 %v3492
  %v3691 = vunpack.c.l.b16 %v3493
  %v3692 = vunpack.c.h.b16 %v3493
  %v3693 = vunpack.c.l.b16 %v3494
  %v3694 = vunpack.c.h.b16 %v3494
  %v3695 = vunpack.c.l.b16 %v3495
  %v3696 = vunpack.c.h.b16 %v3495
  %v3697 = vunpack.c.l.b16 %v3496
  %v3698 = vunpack.c.h.b16 %v3496
  %v3699 = vunpack.c.l.b16 %v3497
  %v3700 = vunpack.c.h.b16 %v3497
  %v3701 = vunpack.c.l.b16 %v3498
  %v3702 = vunpack.c.h.b16 %v3498
  %v3703 = vunpack.c.l.b16 %v3499
  %v3704 = vunpack.c.h.b16 %v3499
  %v3705 = vunpack.c.l.b16 %v3500
  %v3706 = vunpack.c.h.b16 %v3500
  %v3707 = vunpack.c.l.b16 %v3501
  %v3708 = vunpack.c.h.b16 %v3501
  %v3709 = vunpack.c.l.b16 %v3502
  %v3710 = vunpack.c.h.b16 %v3502
  %v3711 = vunpack.c.l.b16 %v3503
  %v3712 = vunpack.c.h.b16 %v3503
  %v3713 = vunpack.c.l.b16 %v3504
  %v3714 = vunpack.c.h.b16 %v3504
  %v3715 = vunpack.c.l.b16 %v3505
  %v3716 = vunpack.c.h.b16 %v3505
  %v3717 = vunpack.c.l.b16 %v3506
  %v3718 = vunpack.c.h.b16 %v3506
  %v3719 = vunpack.c.l.b16 %v3507
  %v3720 = vunpack.c.h.b16 %v3507
  %v3721 = vunpack.c.l.b16 %v3508
  %v3722 = vunpack.c.h.b16 %v3508
  %v3723 = vunpack.c.l.b16 %v3509
  %v3724 = vunpack.c.h.b16 %v3509
  %v3725 = vunpack.c.l.b16 %v3510
  %v3726 = vunpack.c.h.b16 %v3510
  %v3727 = vunpack.c.l.b16 %v3511
  %v3728 = vunpack.c.h.b16 %v3511
  %v3729 = vunpack.c.l.b16 %v3512
  %v3730 = vunpack.c.h.b16 %v3512
  %v3731 = vunpack.c.l.b16 %v3513
  %v3732 = vunpack.c.h.b16 %v3513
  %v3733 = vunpack.c.l.b16 %v3514
  %v3734 = vunpack.c.h.b16 %v3514
  %v3735 = vunpack.c.l.b16 %v3515
  %v3736 = vunpack.c.h.b16 %v3515
  %v3737 = vunpack.c.l.b16 %v3516
  %v3738 = vunpack.c.h.b16 %v3516
  %v3739 = vunpack.c.l.b16 %v3517
  %v3740 = vunpack.c.h.b16 %v3517
  %v3741 = vunpack.c.l.b16 %v3518
  %v3742 = vunpack.c.h.b16 %v3518
  %v3743 = vunpack.c.l.b16 %v3519
  %v3744 = vunpack.c.h.b16 %v3519
  %v3745 = vunpack.c.l.b16 %v3520
  %v3746 = vunpack.c.h.b16 %v3520
  %v3747 = vunpack.c.l.b16 %v3521
  %v3748 = vunpack.c.h.b16 %v3521
  %v3749 = vunpack.c.l.b16 %v3522
  %v3750 = vunpack.c.h.b16 %v3522
  %v3751 = vunpack.c.l.b16 %v3523
  %v3752 = vunpack.c.h.b16 %v3523
  %v3753 = vunpack.c.l.b16 %v3524
  %v3754 = vunpack.c.h.b16 %v3524
  %v3755 = vunpack.c.l.b16 %v3525
  %v3756 = vunpack.c.h.b16 %v3525
  %v3757 = vunpack.c.l.b16 %v3526
  %v3758 = vunpack.c.h.b16 %v3526
  %v3759 = vunpack.c.l.b16 %v3527
  %v3760 = vunpack.c.h.b16 %v3527
  %v3761 = vunpack.c.l.b16 %v3528
  %v3762 = vunpack.c.h.b16 %v3528
  %v3763 = vunpack.c.l.b16 %v3529
  %v3764 = vunpack.c.h.b16 %v3529
  %v3765 = vunpack.c.l.b16 %v3530
  %v3766 = vunpack.c.h.b16 %v3530
  %v3767 = vunpack.c.l.b16 %v3531
  %v3768 = vunpack.c.h.b16 %v3531
  %v3769 = vunpack.c.l.b16 %v3532
  %v3770 = vunpack.c.h.b16 %v3532
  %v3771 = vunpack.c.l.b16 %v3533
  %v3772 = vunpack.c.h.b16 %v3533
  %v3773 = vunpack.c.l.b16 %v3534
  %v3774 = vunpack.c.h.b16 %v3534
  %v3775 = vunpack.c.l.b16 %v3535
  %v3776 = vunpack.c.h.b16 %v3535
  %v3777 = vunpack.c.l.b16 %v3536
  %v3778 = vunpack.c.h.b16 %v3536
  %v3779 = vunpack.c.l.b16 %v3537
  %v3780 = vunpack.c.h.b16 %v3537
  %v3781 = vunpack.c.l.b16 %v3538
  %v3782 = vunpack.c.h.b16 %v3538
  %v3783 = vunpack.c.l.b16 %v3539
  %v3784 = vunpack.c.h.b16 %v3539
  %v3785 = vunpack.c.l.b16 %v3540
  %v3786 = vunpack.c.h.b16 %v3540
  %v3787 = vunpack.c.l.b16 %v3541
  %v3788 = vunpack.c.h.b16 %v3541
  %v3789 = vunpack.c.l.b16 %v3542
  %v3790 = vunpack.c.h.b16 %v3542
  %v3791 = vunpack.c.l.b16 %v3543
  %v3792 = vunpack.c.h.b16 %v3543
  %v3793 = vunpack.c.l.b16 %v3544
  %v3794 = vunpack.c.h.b16 %v3544
  %v3795 = vunpack.c.l.b16 %v3545
  %v3796 = vunpack.c.h.b16 %v3545
  %v3797 = vunpack.c.l.b16 %v3546
  %v3798 = vunpack.c.h.b16 %v3546
  %v3799 = vpack.c.b16 %v3641, %v3639
  %v3800 = vpack.c.b16 %v3642, %v3640
  %v3801 = vpack.c.b16 %v3645, %v3643
  %v3802 = vpack.c.b16 %v3646, %v3644
  %v3803 = vpack.c.b16 %v3649, %v3647
  %v3804 = vpack.c.b16 %v3650, %v3648
  %v3805 = vpack.c.b16 %v3653, %v3651
  %v3806 = vpack.c.b16 %v3654, %v3652
  %v3807 = vpack.c.b16 %v3657, %v3655
  %v3808 = vpack.c.b16 %v3658, %v3656
  %v3809 = vpack.c.b16 %v3661, %v3659
  %v3810 = vpack.c.b16 %v3662, %v3660
  %v3811 = vpack.c.b16 %v3665, %v3663
  %v3812 = vpack.c.b16 %v3666, %v3664
  %v3813 = vpack.c.b16 %v3669, %v3667
  %v3814 = vpack.c.b16 %v3670, %v3668
  %v3815 = vpack.c.b16 %v3673, %v3671
  %v3816 = vpack.c.b16 %v3674, %v3672
  %v3817 = vpack.c.b16 %v3677, %v3675
  %v3818 = vpack.c.b16 %v3678, %v3676
  %v3819 = vpack.c.b16 %v3681, %v3679
  %v3820 = vpack.c.b16 %v3682, %v3680
  %v3821 = vpack.c.b16 %v3685, %v3683
  %v3822 = vpack.c.b16 %v3686, %v3684
  %v3823 = vpack.c.b16 %v3689, %v3687
  %v3824 = vpack.c.b16 %v3690, %v3688
  %v3825 = vpack.c.b16 %v3693, %v3691
  %v3826 = vpack.c.b16 %v3694, %v3692
  %v3827 = vpack.c.b16 %v3697, %v3695
  %v3828 = vpack.c.b16 %v3698, %v3696
  %v3829 = vpack.c.b16 %v3701, %v3699
  %v3830 = vpack.c.b16 %v3702, %v3700
  %v3831 = vpack.c.b16 %v3705, %v3703
  %v3832 = vpack.c.b16 %v3706, %v3704
  %v3833 = vpack.c.b16 %v3709, %v3707
  %v3834 = vpack.c.b16 %v3710, %v3708
  %v3835 = vpack.c.b16 %v3713, %v3711
  %v3836 = vpack.c.b16 %v3714, %v3712
  %v3837 = vpack.c.b16 %v3717, %v3715
  %v3838 = vpack.c.b16 %v3718, %v3716
  %v3839 = vpack.c.b16 %v3721, %v3719
  %v3840 = vpack.c.b16 %v3722, %v3720
  %v3841 = vpack.c.b16 %v3725, %v3723
  %v3842 = vpack.c.b16 %v3726, %v3724
  %v3843 = vpack.c.b16 %v3729, %v3727
  %v3844 = vpack.c.b16 %v3730, %v3728
  %v3845 = vpack.c.b16 %v3733, %v3731
  %v3846 = vpack.c.b16 %v3734, %v3732
  %v3847 = vpack.c.b16 %v3737, %v3735
  %v3848 = vpack.c.b16 %v3738, %v3736
  %v3849 = vpack.c.b16 %v3741, %v3739
  %v3850 = vpack.c.b16 %v3742, %v3740
  %v3851 = vpack.c.b16 %v3745, %v3743
  %v3852 = vpack.c.b16 %v3746, %v3744
  %v3853 = vpack.c.b16 %v3749, %v3747
  %v3854 = vpack.c.b16 %v3750, %v3748
  %v3855 = vpack.c.b16 %v3753, %v3751
  %v3856 = vpack.c.b16 %v3754, %v3752
  %v3857 = vpack.c.b16 %v3757, %v3755
  %v3858 = vpack.c.b16 %v3758, %v3756
  %v3859 = vpack.c.b16 %v3761, %v3759
  %v3860 = vpack.c.b16 %v3762, %v3760
  %v3861 = vpack.c.b16 %v3765, %v3763
  %v3862 = vpack.c.b16 %v3766, %v3764
  %v3863 = vpack.c.b16 %v3769, %v3767
  %v3864 = vpack.c.b16 %v3770, %v3768
  %v3865 = vpack.c.b16 %v3773, %v3771
  %v3866 = vpack.c.b16 %v3774, %v3772
  %v3867 = vpack.c.b16 %v3777, %v3775
  %v3868 = vpack.c.b16 %v3778, %v3776
  %v3869 = vpack.c.b16 %v3781, %v3779
  %v3870 = vpack.c.b16 %v3782, %v3780
  %v3871 = vpack.c.b16 %v3785, %v3783
  %v3872 = vpack.c.b16 %v3786, %v3784
  %v3873 = vpack.c.b16 %v3789, %v3787
  %v3874 = vpack.c.b16 %v3790, %v3788
  %v3875 = vpack.c.b16 %v3793, %v3791
  %v3876 = vpack.c.b16 %v3794, %v3792
  %v3877 = vpack.c.b16 %v3797, %v3795
  %v3878 = vpack.c.b16 %v3798, %v3796
  %3959 = vmatprep.subr.bf16.mxu0 %v3800
  %3960 = vmatpush1.bf16.msra.mxu0 %v3799
  %3961 = vmatprep.subr.bf16.mxu0 %v3802
  %3962 = vmatpush1.bf16.msra.mxu0 %v3801
  %3963 = vmatprep.subr.bf16.mxu0 %v3804
  %3964 = vmatpush1.bf16.msra.mxu0 %v3803
  %3965 = vmatprep.subr.bf16.mxu0 %v3806
  %3966 = vmatpush1.bf16.msra.mxu0 %v3805
  %3967 = vmatprep.subr.bf16.mxu0 %v3808
  %3968 = vmatpush1.bf16.msra.mxu0 %v3807
  %3969 = vmatprep.subr.bf16.mxu0 %v3810
  %3970 = vmatpush1.bf16.msra.mxu0 %v3809
  %3971 = vmatprep.subr.bf16.mxu0 %v3812
  %3972 = vmatpush1.bf16.msra.mxu0 %v3811
  %3973 = vmatprep.subr.bf16.mxu0 %v3814
  %3974 = vmatpush1.bf16.msra.mxu0 %v3813
  %3975 = vmatprep.subr.bf16.mxu0 %v3816
  %3976 = vmatpush1.bf16.msra.mxu0 %v3815
  %3977 = vmatprep.subr.bf16.mxu0 %v3818
  %3978 = vmatpush1.bf16.msra.mxu0 %v3817
  %3979 = vmatprep.subr.bf16.mxu0 %v3820
  %3980 = vmatpush1.bf16.msra.mxu0 %v3819
  %3981 = vmatprep.subr.bf16.mxu0 %v3822
  %3982 = vmatpush1.bf16.msra.mxu0 %v3821
  %3983 = vmatprep.subr.bf16.mxu0 %v3824
  %3984 = vmatpush1.bf16.msra.mxu0 %v3823
  %3985 = vmatprep.subr.bf16.mxu0 %v3826
  %3986 = vmatpush1.bf16.msra.mxu0 %v3825
  %3987 = vmatprep.subr.bf16.mxu0 %v3828
  %3988 = vmatpush1.bf16.msra.mxu0 %v3827
  %3989 = vmatprep.subr.bf16.mxu0 %v3830
  %3990 = vmatpush1.bf16.msra.mxu0 %v3829
  %3991 = vmatprep.mubr.bf16.mxu0 %v3445
  %3992 = vmatmul.mubr.bf16.gmra.mrb[0].mxu0 %v3443
  %v3993 = vpop.f32.mrb[0].mxu0
  %v3994 = vadd.f32 %v3552, %v3993
  %v3995 = vpop.f32.mrb[0].mxu0
  %v3996 = vadd.f32 %v3556, %v3995
  %v3997 = vpop.f32.mrb[0].mxu0
  %v3998 = vadd.f32 %v3552, %v3997
  %v3999 = vpop.f32.mrb[0].mxu0
  %v4000 = vadd.f32 %v3556, %v3999
  %4001 = vmatprep.mubr.bf16.mxu0 %v3446
  %4002 = vmatmul.mubr.bf16.gmra.mrb[0].mxu0 %v3444
  %v4003 = vpop.f32.mrb[0].mxu0
  %v4004 = vadd.f32 %v3552, %v4003
  %v4005 = vpop.f32.mrb[0].mxu0
  %v4006 = vadd.f32 %v3556, %v4005
  %v4007 = vpop.f32.mrb[0].mxu0
  %v4008 = vadd.f32 %v3552, %v4007
  %v4009 = vpop.f32.mrb[0].mxu0
  %v4010 = vadd.f32 %v3556, %v4009
  %4011 = vmatprep.mubr.bf16.mxu0 %v3447
  %4012 = vmatmul.mubr.bf16.gmra.mrb[0].mxu0 %v3445
  %v4013 = vpop.f32.mrb[0].mxu0
  %v4014 = vadd.f32 %v3552, %v4013
  %v4015 = vpop.f32.mrb[0].mxu0
  %v4016 = vadd.f32 %v3556, %v4015
  %v4017 = vpop.f32.mrb[0].mxu0
  %v4018 = vadd.f32 %v3552, %v4017
  %v4019 = vpop.f32.mrb[0].mxu0
  %v4020 = vadd.f32 %v3556, %v4019
  %4021 = vmatprep.mubr.bf16.mxu0 %v3448
  %4022 = vmatmul.mubr.bf16.gmra.mrb[0].mxu0 %v3446
  %v4023 = vpop.f32.mrb[0].mxu0
  %v4024 = vadd.f32 %v3552, %v4023
  %v4025 = vpop.f32.mrb[0].mxu0
  %v4026 = vadd.f32 %v3556, %v4025
  %v4027 = vpop.f32.mrb[0].mxu0
  %v4028 = vadd.f32 %v3552, %v4027
  %v4029 = vpop.f32.mrb[0].mxu0
  %v4030 = vadd.f32 %v3556, %v4029
  %4031 = vmatprep.mubr.bf16.mxu0 %v3449
  %4032 = vmatmul.mubr.bf16.gmra.mrb[0].mxu0 %v3447
  %v4033 = vpop.f32.mrb[0].mxu0
  %v4034 = vadd.f32 %v3552, %v4033
  %v4035 = vpop.f32.mrb[0].mxu0
  %v4036 = vadd.f32 %v3556, %v4035
  %v4037 = vpop.f32.mrb[0].mxu0
  %v4038 = vadd.f32 %v3552, %v4037
  %v4039 = vpop.f32.mrb[0].mxu0
  %v4040 = vadd.f32 %v3556, %v4039
  %4041 = vmatprep.mubr.bf16.mxu0 %v3450
  %4042 = vmatmul.mubr.bf16.gmra.mrb[0].mxu0 %v3448
  %v4043 = vpop.f32.mrb[0].mxu0
  %v4044 = vadd.f32 %v3552, %v4043
  %v4045 = vpop.f32.mrb[0].mxu0
  %v4046 = vadd.f32 %v3556, %v4045
  %v4047 = vpop.f32.mrb[0].mxu0
  %v4048 = vadd.f32 %v3552, %v4047
  %v4049 = vpop.f32.mrb[0].mxu0
  %v4050 = vadd.f32 %v3556, %v4049
  %4051 = vmatprep.mubr.bf16.mxu0 %v3451
  %4052 = vmatmul.mubr.bf16.gmra.mrb[0].mxu0 %v3449
  %v4053 = vpop.f32.mrb[0].mxu0
  %v4054 = vadd.f32 %v3552, %v4053
  %v4055 = vpop.f32.mrb[0].mxu0
  %v4056 = vadd.f32 %v3556, %v4055
  %v4057 = vpop.f32.mrb[0].mxu0
  %v4058 = vadd.f32 %v3552, %v4057
  %v4059 = vpop.f32.mrb[0].mxu0
  %v4060 = vadd.f32 %v3556, %v4059
  %4061 = vmatprep.mubr.bf16.mxu0 %v3452
  %4062 = vmatmul.mubr.bf16.gmra.mrb[0].mxu0 %v3450
  %v4063 = vpop.f32.mrb[0].mxu0
  %v4064 = vadd.f32 %v3552, %v4063
  %v4065 = vpop.f32.mrb[0].mxu0
  %v4066 = vadd.f32 %v3556, %v4065
  %v4067 = vpop.f32.mrb[0].mxu0
  %v4068 = vadd.f32 %v3552, %v4067
  %v4069 = vpop.f32.mrb[0].mxu0
  %v4070 = vadd.f32 %v3556, %v4069
  %4071 = vmatprep.mubr.bf16.mxu0 %v3453
  %4072 = vmatmul.mubr.bf16.gmra.mrb[0].mxu0 %v3451
  %v4073 = vpop.f32.mrb[0].mxu0
  %v4074 = vadd.f32 %v3552, %v4073
  %v4075 = vpop.f32.mrb[0].mxu0
  %v4076 = vadd.f32 %v3556, %v4075
  %v4077 = vpop.f32.mrb[0].mxu0
  %v4078 = vadd.f32 %v3552, %v4077
  %v4079 = vpop.f32.mrb[0].mxu0
  %v4080 = vadd.f32 %v3556, %v4079
  %4081 = vmatprep.mubr.bf16.mxu0 %v3454
  %4082 = vmatmul.mubr.bf16.gmra.mrb[0].mxu0 %v3452
  %v4083 = vpop.f32.mrb[0].mxu0
  %v4084 = vadd.f32 %v3552, %v4083
  %v4085 = vpop.f32.mrb[0].mxu0
  %v4086 = vadd.f32 %v3556, %v4085
  %v4087 = vpop.f32.mrb[0].mxu0
  %v4088 = vadd.f32 %v3552, %v4087
  %v4089 = vpop.f32.mrb[0].mxu0
  %v4090 = vadd.f32 %v3556, %v4089
  %4091 = vmatprep.mubr.bf16.mxu0 %v3455
  %4092 = vmatmul.mubr.bf16.gmra.mrb[0].mxu0 %v3453
  %v4093 = vpop.f32.mrb[0].mxu0
  %v4094 = vadd.f32 %v3552, %v4093
  %v4095 = vpop.f32.mrb[0].mxu0
  %v4096 = vadd.f32 %v3556, %v4095
  %v4097 = vpop.f32.mrb[0].mxu0
  %v4098 = vadd.f32 %v3552, %v4097
  %v4099 = vpop.f32.mrb[0].mxu0
  %v4100 = vadd.f32 %v3556, %v4099
  %4101 = vmatprep.mubr.bf16.mxu0 %v3456
  %4102 = vmatmul.mubr.bf16.gmra.mrb[0].mxu0 %v3454
  %v4103 = vpop.f32.mrb[0].mxu0
  %v4104 = vadd.f32 %v3552, %v4103
  %v4105 = vpop.f32.mrb[0].mxu0
  %v4106 = vadd.f32 %v3556, %v4105
  %v4107 = vpop.f32.mrb[0].mxu0
  %v4108 = vadd.f32 %v3552, %v4107
  %v4109 = vpop.f32.mrb[0].mxu0
  %v4110 = vadd.f32 %v3556, %v4109
  %4111 = vmatprep.mubr.bf16.mxu0 %v3457
  %4112 = vmatmul.mubr.bf16.gmra.mrb[0].mxu0 %v3455
  %v4113 = vpop.f32.mrb[0].mxu0
  %v4114 = vadd.f32 %v3552, %v4113
  %v4115 = vpop.f32.mrb[0].mxu0
  %v4116 = vadd.f32 %v3556, %v4115
  %v4117 = vpop.f32.mrb[0].mxu0
  %v4118 = vadd.f32 %v3552, %v4117
  %v4119 = vpop.f32.mrb[0].mxu0
  %v4120 = vadd.f32 %v3556, %v4119
  %4121 = vmatprep.mubr.bf16.mxu0 %v3458
  %4122 = vmatmul.mubr.bf16.gmra.mrb[0].mxu0 %v3456
  %v4123 = vpop.f32.mrb[0].mxu0
  %v4124 = vadd.f32 %v3552, %v4123
  %v4125 = vpop.f32.mrb[0].mxu0
  %v4126 = vadd.f32 %v3556, %v4125
  %v4127 = vpop.f32.mrb[0].mxu0
  %v4128 = vadd.f32 %v3552, %v4127
  %v4129 = vpop.f32.mrb[0].mxu0
  %v4130 = vadd.f32 %v3556, %v4129
  %4131 = vmatprep.mubr.bf16.mxu0 %v3459
  %4132 = vmatmul.mubr.bf16.gmra.mrb[0].mxu0 %v3457
  %v4133 = vpop.f32.mrb[0].mxu0
  %v4134 = vadd.f32 %v3552, %v4133
  %v4135 = vpop.f32.mrb[0].mxu0
  %v4136 = vadd.f32 %v3556, %v4135
  %v4137 = vpop.f32.mrb[0].mxu0
  %v4138 = vadd.f32 %v3552, %v4137
  %v4139 = vpop.f32.mrb[0].mxu0
  %v4140 = vadd.f32 %v3556, %v4139
  %4141 = vmatprep.mubr.bf16.mxu0 %v3460
  %4142 = vmatmul.mubr.bf16.gmra.mrb[0].mxu0 %v3458
  %v4143 = vpop.f32.mrb[0].mxu0
  %v4144 = vadd.f32 %v3552, %v4143
  %v4145 = vpop.f32.mrb[0].mxu0
  %v4146 = vadd.f32 %v3556, %v4145
  %v4147 = vpop.f32.mrb[0].mxu0
  %v4148 = vadd.f32 %v3552, %v4147
  %v4149 = vpop.f32.mrb[0].mxu0
  %v4150 = vadd.f32 %v3556, %v4149
  %4151 = vdwg.mxu0
  %4152 = vmatprep.subr.bf16.mxu0 %v3832
  %4153 = vmatpush1.bf16.msra.mxu0 %v3831
  %4154 = vmatprep.subr.bf16.mxu0 %v3834
  %4155 = vmatpush1.bf16.msra.mxu0 %v3833
  %4156 = vmatprep.subr.bf16.mxu0 %v3836
  %4157 = vmatpush1.bf16.msra.mxu0 %v3835
  %4158 = vmatprep.subr.bf16.mxu0 %v3838
  %4159 = vmatpush1.bf16.msra.mxu0 %v3837
  %4160 = vmatprep.subr.bf16.mxu0 %v3840
  %4161 = vmatpush1.bf16.msra.mxu0 %v3839
  %4162 = vmatprep.subr.bf16.mxu0 %v3842
  %4163 = vmatpush1.bf16.msra.mxu0 %v3841
  %4164 = vmatprep.subr.bf16.mxu0 %v3844
  %4165 = vmatpush1.bf16.msra.mxu0 %v3843
  %4166 = vmatprep.subr.bf16.mxu0 %v3846
  %4167 = vmatpush1.bf16.msra.mxu0 %v3845
  %4168 = vmatprep.subr.bf16.mxu0 %v3848
  %4169 = vmatpush1.bf16.msra.mxu0 %v3847
  %4170 = vmatprep.subr.bf16.mxu0 %v3850
  %4171 = vmatpush1.bf16.msra.mxu0 %v3849
  %4172 = vmatprep.subr.bf16.mxu0 %v3852
  %4173 = vmatpush1.bf16.msra.mxu0 %v3851
  %4174 = vmatprep.subr.bf16.mxu0 %v3854
  %4175 = vmatpush1.bf16.msra.mxu0 %v3853
  %4176 = vmatprep.subr.bf16.mxu0 %v3856
  %4177 = vmatpush1.bf16.msra.mxu0 %v3855
  %4178 = vmatprep.subr.bf16.mxu0 %v3858
  %4179 = vmatpush1.bf16.msra.mxu0 %v3857
  %4180 = vmatprep.subr.bf16.mxu0 %v3860
  %4181 = vmatpush1.bf16.msra.mxu0 %v3859
  %4182 = vmatprep.subr.bf16.mxu0 %v3862
  %4183 = vmatpush1.bf16.msra.mxu0 %v3861
  %4184 = vmatprep.mubr.bf16.mxu0 %v3449
  %4185 = vmatmul.mubr.bf16.gmra.mrb[0].mxu0 %v3447
  %v4186 = vpop.f32.mrb[0].mxu0
  %v4187 = vadd.f32 %v3994, %v4186
  %v4188 = vpop.f32.mrb[0].mxu0
  %v4189 = vadd.f32 %v3996, %v4188
  %v4190 = vpop.f32.mrb[0].mxu0
  %v4191 = vadd.f32 %v3998, %v4190
  %v4192 = vpop.f32.mrb[0].mxu0
  %v4193 = vadd.f32 %v4000, %v4192
  %4194 = vmatprep.mubr.bf16.mxu0 %v3450
  %4195 = vmatmul.mubr.bf16.gmra.mrb[0].mxu0 %v3448
  %v4196 = vpop.f32.mrb[0].mxu0
  %v4197 = vadd.f32 %v4004, %v4196
  %v4198 = vpop.f32.mrb[0].mxu0
  %v4199 = vadd.f32 %v4006, %v4198
  %v4200 = vpop.f32.mrb[0].mxu0
  %v4201 = vadd.f32 %v4008, %v4200
  %v4202 = vpop.f32.mrb[0].mxu0
  %v4203 = vadd.f32 %v4010, %v4202
  %4204 = vmatprep.mubr.bf16.mxu0 %v3451
  %4205 = vmatmul.mubr.bf16.gmra.mrb[0].mxu0 %v3449
  %v4206 = vpop.f32.mrb[0].mxu0
  %v4207 = vadd.f32 %v4014, %v4206
  %v4208 = vpop.f32.mrb[0].mxu0
  %v4209 = vadd.f32 %v4016, %v4208
  %v4210 = vpop.f32.mrb[0].mxu0
  %v4211 = vadd.f32 %v4018, %v4210
  %v4212 = vpop.f32.mrb[0].mxu0
  %v4213 = vadd.f32 %v4020, %v4212
  %4214 = vmatprep.mubr.bf16.mxu0 %v3452
  %4215 = vmatmul.mubr.bf16.gmra.mrb[0].mxu0 %v3450
  %v4216 = vpop.f32.mrb[0].mxu0
  %v4217 = vadd.f32 %v4024, %v4216
  %v4218 = vpop.f32.mrb[0].mxu0
  %v4219 = vadd.f32 %v4026, %v4218
  %v4220 = vpop.f32.mrb[0].mxu0
  %v4221 = vadd.f32 %v4028, %v4220
  %v4222 = vpop.f32.mrb[0].mxu0
  %v4223 = vadd.f32 %v4030, %v4222
  %4224 = vmatprep.mubr.bf16.mxu0 %v3453
  %4225 = vmatmul.mubr.bf16.gmra.mrb[0].mxu0 %v3451
  %v4226 = vpop.f32.mrb[0].mxu0
  %v4227 = vadd.f32 %v4034, %v4226
  %v4228 = vpop.f32.mrb[0].mxu0
  %v4229 = vadd.f32 %v4036, %v4228
  %v4230 = vpop.f32.mrb[0].mxu0
  %v4231 = vadd.f32 %v4038, %v4230
  %v4232 = vpop.f32.mrb[0].mxu0
  %v4233 = vadd.f32 %v4040, %v4232
  %4234 = vmatprep.mubr.bf16.mxu0 %v3454
  %4235 = vmatmul.mubr.bf16.gmra.mrb[0].mxu0 %v3452
  %v4236 = vpop.f32.mrb[0].mxu0
  %v4237 = vadd.f32 %v4044, %v4236
  %v4238 = vpop.f32.mrb[0].mxu0
  %v4239 = vadd.f32 %v4046, %v4238
  %v4240 = vpop.f32.mrb[0].mxu0
  %v4241 = vadd.f32 %v4048, %v4240
  %v4242 = vpop.f32.mrb[0].mxu0
  %v4243 = vadd.f32 %v4050, %v4242
  %4244 = vmatprep.mubr.bf16.mxu0 %v3455
  %4245 = vmatmul.mubr.bf16.gmra.mrb[0].mxu0 %v3453
  %v4246 = vpop.f32.mrb[0].mxu0
  %v4247 = vadd.f32 %v4054, %v4246
  %v4248 = vpop.f32.mrb[0].mxu0
  %v4249 = vadd.f32 %v4056, %v4248
  %v4250 = vpop.f32.mrb[0].mxu0
  %v4251 = vadd.f32 %v4058, %v4250
  %v4252 = vpop.f32.mrb[0].mxu0
  %v4253 = vadd.f32 %v4060, %v4252
  %4254 = vmatprep.mubr.bf16.mxu0 %v3456
  %4255 = vmatmul.mubr.bf16.gmra.mrb[0].mxu0 %v3454
  %v4256 = vpop.f32.mrb[0].mxu0
  %v4257 = vadd.f32 %v4064, %v4256
  %v4258 = vpop.f32.mrb[0].mxu0
  %v4259 = vadd.f32 %v4066, %v4258
  %v4260 = vpop.f32.mrb[0].mxu0
  %v4261 = vadd.f32 %v4068, %v4260
  %v4262 = vpop.f32.mrb[0].mxu0
  %v4263 = vadd.f32 %v4070, %v4262
  %4264 = vmatprep.mubr.bf16.mxu0 %v3457
  %4265 = vmatmul.mubr.bf16.gmra.mrb[0].mxu0 %v3455
  %v4266 = vpop.f32.mrb[0].mxu0
  %v4267 = vadd.f32 %v4074, %v4266
  %v4268 = vpop.f32.mrb[0].mxu0
  %v4269 = vadd.f32 %v4076, %v4268
  %v4270 = vpop.f32.mrb[0].mxu0
  %v4271 = vadd.f32 %v4078, %v4270
  %v4272 = vpop.f32.mrb[0].mxu0
  %v4273 = vadd.f32 %v4080, %v4272
  %4274 = vmatprep.mubr.bf16.mxu0 %v3458
  %4275 = vmatmul.mubr.bf16.gmra.mrb[0].mxu0 %v3456
  %v4276 = vpop.f32.mrb[0].mxu0
  %v4277 = vadd.f32 %v4084, %v4276
  %v4278 = vpop.f32.mrb[0].mxu0
  %v4279 = vadd.f32 %v4086, %v4278
  %v4280 = vpop.f32.mrb[0].mxu0
  %v4281 = vadd.f32 %v4088, %v4280
  %v4282 = vpop.f32.mrb[0].mxu0
  %v4283 = vadd.f32 %v4090, %v4282
  %4284 = vmatprep.mubr.bf16.mxu0 %v3459
  %4285 = vmatmul.mubr.bf16.gmra.mrb[0].mxu0 %v3457
  %v4286 = vpop.f32.mrb[0].mxu0
  %v4287 = vadd.f32 %v4094, %v4286
  %v4288 = vpop.f32.mrb[0].mxu0
  %v4289 = vadd.f32 %v4096, %v4288
  %v4290 = vpop.f32.mrb[0].mxu0
  %v4291 = vadd.f32 %v4098, %v4290
  %v4292 = vpop.f32.mrb[0].mxu0
  %v4293 = vadd.f32 %v4100, %v4292
  %4294 = vmatprep.mubr.bf16.mxu0 %v3460
  %4295 = vmatmul.mubr.bf16.gmra.mrb[0].mxu0 %v3458
  %v4296 = vpop.f32.mrb[0].mxu0
  %v4297 = vadd.f32 %v4104, %v4296
  %v4298 = vpop.f32.mrb[0].mxu0
  %v4299 = vadd.f32 %v4106, %v4298
  %v4300 = vpop.f32.mrb[0].mxu0
  %v4301 = vadd.f32 %v4108, %v4300
  %v4302 = vpop.f32.mrb[0].mxu0
  %v4303 = vadd.f32 %v4110, %v4302
  %4304 = vmatprep.mubr.bf16.mxu0 %v3461
  %4305 = vmatmul.mubr.bf16.gmra.mrb[0].mxu0 %v3459
  %v4306 = vpop.f32.mrb[0].mxu0
  %v4307 = vadd.f32 %v4114, %v4306
  %v4308 = vpop.f32.mrb[0].mxu0
  %v4309 = vadd.f32 %v4116, %v4308
  %v4310 = vpop.f32.mrb[0].mxu0
  %v4311 = vadd.f32 %v4118, %v4310
  %v4312 = vpop.f32.mrb[0].mxu0
  %v4313 = vadd.f32 %v4120, %v4312
  %4314 = vmatprep.mubr.bf16.mxu0 %v3462
  %4315 = vmatmul.mubr.bf16.gmra.mrb[0].mxu0 %v3460
  %v4316 = vpop.f32.mrb[0].mxu0
  %v4317 = vadd.f32 %v4124, %v4316
  %v4318 = vpop.f32.mrb[0].mxu0
  %v4319 = vadd.f32 %v4126, %v4318
  %v4320 = vpop.f32.mrb[0].mxu0
  %v4321 = vadd.f32 %v4128, %v4320
  %v4322 = vpop.f32.mrb[0].mxu0
  %v4323 = vadd.f32 %v4130, %v4322
  %4324 = vmatprep.mubr.bf16.mxu0 %v3463
  %4325 = vmatmul.mubr.bf16.gmra.mrb[0].mxu0 %v3461
  %v4326 = vpop.f32.mrb[0].mxu0
  %v4327 = vadd.f32 %v4134, %v4326
  %v4328 = vpop.f32.mrb[0].mxu0
  %v4329 = vadd.f32 %v4136, %v4328
  %v4330 = vpop.f32.mrb[0].mxu0
  %v4331 = vadd.f32 %v4138, %v4330
  %v4332 = vpop.f32.mrb[0].mxu0
  %v4333 = vadd.f32 %v4140, %v4332
  %4334 = vmatprep.mubr.bf16.mxu0 %v3464
  %4335 = vmatmul.mubr.bf16.gmra.mrb[0].mxu0 %v3462
  %v4336 = vpop.f32.mrb[0].mxu0
  %v4337 = vadd.f32 %v4144, %v4336
  %v4338 = vpop.f32.mrb[0].mxu0
  %v4339 = vadd.f32 %v4146, %v4338
  %v4340 = vpop.f32.mrb[0].mxu0
  %v4341 = vadd.f32 %v4148, %v4340
  %v4342 = vpop.f32.mrb[0].mxu0
  %v4343 = vadd.f32 %v4150, %v4342
  %4344 = vdwg.mxu0
  %4345 = vmatprep.subr.bf16.mxu0 %v3864
  %4346 = vmatpush1.bf16.msra.mxu0 %v3863
  %4347 = vmatprep.subr.bf16.mxu0 %v3866
  %4348 = vmatpush1.bf16.msra.mxu0 %v3865
  %4349 = vmatprep.subr.bf16.mxu0 %v3868
  %4350 = vmatpush1.bf16.msra.mxu0 %v3867
  %4351 = vmatprep.subr.bf16.mxu0 %v3870
  %4352 = vmatpush1.bf16.msra.mxu0 %v3869
  %4353 = vmatprep.subr.bf16.mxu0 %v3872
  %4354 = vmatpush1.bf16.msra.mxu0 %v3871
  %4355 = vmatprep.subr.bf16.mxu0 %v3874
  %4356 = vmatpush1.bf16.msra.mxu0 %v3873
  %4357 = vmatprep.subr.bf16.mxu0 %v3876
  %4358 = vmatpush1.bf16.msra.mxu0 %v3875
  %4359 = vmatprep.subr.bf16.mxu0 %v3878
  %4360 = vmatpush1.bf16.msra.mxu0 %v3877
  %4361 = vmatprep.subr.bf16.mxu0 0
  %4362 = vmatpush1.bf16.msra.mxu0 0
  %4363 = vmatprep.subr.bf16.mxu0 0
  %4364 = vmatpush1.bf16.msra.mxu0 0
  %4365 = vmatprep.subr.bf16.mxu0 0
  %4366 = vmatpush1.bf16.msra.mxu0 0
  %4367 = vmatprep.subr.bf16.mxu0 0
  %4368 = vmatpush1.bf16.msra.mxu0 0
  %4369 = vmatprep.subr.bf16.mxu0 0
  %4370 = vmatpush1.bf16.msra.mxu0 0
  %4371 = vmatprep.subr.bf16.mxu0 0
  %4372 = vmatpush1.bf16.msra.mxu0 0
  %4373 = vmatprep.subr.bf16.mxu0 0
  %4374 = vmatpush1.bf16.msra.mxu0 0
  %4375 = vmatprep.subr.bf16.mxu0 0
  %4376 = vmatpush1.bf16.msra.mxu0 0
  %4377 = vmatprep.mubr.bf16.mxu0 0
  %4378 = vmatmul.mubr.bf16.gmra.mrb[0].mxu0 %v3451
  %v4379 = vpop.f32.mrb[0].mxu0
  %v4380 = vadd.f32 %v4187, %v4379
  %v4381 = vpop.f32.mrb[0].mxu0
  %v4382 = vadd.f32 %v4189, %v4381
  %v4383 = vpop.f32.mrb[0].mxu0
  %v4384 = vadd.f32 %v4191, %v4383
  %v4385 = vpop.f32.mrb[0].mxu0
  %v4386 = vadd.f32 %v4193, %v4385
  %4387 = vmatprep.mubr.bf16.mxu0 0
  %4388 = vmatmul.mubr.bf16.gmra.mrb[0].mxu0 %v3452
  %v4389 = vpop.f32.mrb[0].mxu0
  %v4390 = vadd.f32 %v4197, %v4389
  %v4391 = vpop.f32.mrb[0].mxu0
  %v4392 = vadd.f32 %v4199, %v4391
  %v4393 = vpop.f32.mrb[0].mxu0
  %v4394 = vadd.f32 %v4201, %v4393
  %v4395 = vpop.f32.mrb[0].mxu0
  %v4396 = vadd.f32 %v4203, %v4395
  %4397 = vmatprep.mubr.bf16.mxu0 0
  %4398 = vmatmul.mubr.bf16.gmra.mrb[0].mxu0 %v3453
  %v4399 = vpop.f32.mrb[0].mxu0
  %v4400 = vadd.f32 %v4207, %v4399
  %v4401 = vpop.f32.mrb[0].mxu0
  %v4402 = vadd.f32 %v4209, %v4401
  %v4403 = vpop.f32.mrb[0].mxu0
  %v4404 = vadd.f32 %v4211, %v4403
  %v4405 = vpop.f32.mrb[0].mxu0
  %v4406 = vadd.f32 %v4213, %v4405
  %4407 = vmatprep.mubr.bf16.mxu0 0
  %4408 = vmatmul.mubr.bf16.gmra.mrb[0].mxu0 %v3454
  %v4409 = vpop.f32.mrb[0].mxu0
  %v4410 = vadd.f32 %v4217, %v4409
  %v4411 = vpop.f32.mrb[0].mxu0
  %v4412 = vadd.f32 %v4219, %v4411
  %v4413 = vpop.f32.mrb[0].mxu0
  %v4414 = vadd.f32 %v4221, %v4413
  %v4415 = vpop.f32.mrb[0].mxu0
  %v4416 = vadd.f32 %v4223, %v4415
  %4417 = vmatprep.mubr.bf16.mxu0 0
  %4418 = vmatmul.mubr.bf16.gmra.mrb[0].mxu0 %v3455
  %v4419 = vpop.f32.mrb[0].mxu0
  %v4420 = vadd.f32 %v4227, %v4419
  %v4421 = vpop.f32.mrb[0].mxu0
  %v4422 = vadd.f32 %v4229, %v4421
  %v4423 = vpop.f32.mrb[0].mxu0
  %v4424 = vadd.f32 %v4231, %v4423
  %v4425 = vpop.f32.mrb[0].mxu0
  %v4426 = vadd.f32 %v4233, %v4425
  %4427 = vmatprep.mubr.bf16.mxu0 0
  %4428 = vmatmul.mubr.bf16.gmra.mrb[0].mxu0 %v3456
  %v4429 = vpop.f32.mrb[0].mxu0
  %v4430 = vadd.f32 %v4237, %v4429
  %v4431 = vpop.f32.mrb[0].mxu0
  %v4432 = vadd.f32 %v4239, %v4431
  %v4433 = vpop.f32.mrb[0].mxu0
  %v4434 = vadd.f32 %v4241, %v4433
  %v4435 = vpop.f32.mrb[0].mxu0
  %v4436 = vadd.f32 %v4243, %v4435
  %4437 = vmatprep.mubr.bf16.mxu0 0
  %4438 = vmatmul.mubr.bf16.gmra.mrb[0].mxu0 %v3457
  %v4439 = vpop.f32.mrb[0].mxu0
  %v4440 = vadd.f32 %v4247, %v4439
  %v4441 = vpop.f32.mrb[0].mxu0
  %v4442 = vadd.f32 %v4249, %v4441
  %v4443 = vpop.f32.mrb[0].mxu0
  %v4444 = vadd.f32 %v4251, %v4443
  %v4445 = vpop.f32.mrb[0].mxu0
  %v4446 = vadd.f32 %v4253, %v4445
  %4447 = vmatprep.mubr.bf16.mxu0 0
  %4448 = vmatmul.mubr.bf16.gmra.mrb[0].mxu0 %v3458
  %v4449 = vpop.f32.mrb[0].mxu0
  %v4450 = vadd.f32 %v4257, %v4449
  %v4451 = vpop.f32.mrb[0].mxu0
  %v4452 = vadd.f32 %v4259, %v4451
  %v4453 = vpop.f32.mrb[0].mxu0
  %v4454 = vadd.f32 %v4261, %v4453
  %v4455 = vpop.f32.mrb[0].mxu0
  %v4456 = vadd.f32 %v4263, %v4455
  %4457 = vmatprep.mubr.bf16.mxu0 0
  %4458 = vmatmul.mubr.bf16.gmra.mrb[0].mxu0 %v3459
  %v4459 = vpop.f32.mrb[0].mxu0
  %v4460 = vadd.f32 %v4267, %v4459
  %v4461 = vpop.f32.mrb[0].mxu0
  %v4462 = vadd.f32 %v4269, %v4461
  %v4463 = vpop.f32.mrb[0].mxu0
  %v4464 = vadd.f32 %v4271, %v4463
  %v4465 = vpop.f32.mrb[0].mxu0
  %v4466 = vadd.f32 %v4273, %v4465
  %4467 = vmatprep.mubr.bf16.mxu0 0
  %4468 = vmatmul.mubr.bf16.gmra.mrb[0].mxu0 %v3460
  %v4469 = vpop.f32.mrb[0].mxu0
  %v4470 = vadd.f32 %v4277, %v4469
  %v4471 = vpop.f32.mrb[0].mxu0
  %v4472 = vadd.f32 %v4279, %v4471
  %v4473 = vpop.f32.mrb[0].mxu0
  %v4474 = vadd.f32 %v4281, %v4473
  %v4475 = vpop.f32.mrb[0].mxu0
  %v4476 = vadd.f32 %v4283, %v4475
  %4477 = vmatprep.mubr.bf16.mxu0 0
  %4478 = vmatmul.mubr.bf16.gmra.mrb[0].mxu0 %v3461
  %v4479 = vpop.f32.mrb[0].mxu0
  %v4480 = vadd.f32 %v4287, %v4479
  %v4481 = vpop.f32.mrb[0].mxu0
  %v4482 = vadd.f32 %v4289, %v4481
  %v4483 = vpop.f32.mrb[0].mxu0
  %v4484 = vadd.f32 %v4291, %v4483
  %v4485 = vpop.f32.mrb[0].mxu0
  %v4486 = vadd.f32 %v4293, %v4485
  %4487 = vmatprep.mubr.bf16.mxu0 0
  %4488 = vmatmul.mubr.bf16.gmra.mrb[0].mxu0 %v3462
  %v4489 = vpop.f32.mrb[0].mxu0
  %v4490 = vadd.f32 %v4297, %v4489
  %v4491 = vpop.f32.mrb[0].mxu0
  %v4492 = vadd.f32 %v4299, %v4491
  %v4493 = vpop.f32.mrb[0].mxu0
  %v4494 = vadd.f32 %v4301, %v4493
  %v4495 = vpop.f32.mrb[0].mxu0
  %v4496 = vadd.f32 %v4303, %v4495
  %4497 = vmatprep.mubr.bf16.mxu0 0
  %4498 = vmatmul.mubr.bf16.gmra.mrb[0].mxu0 %v3463
  %v4499 = vpop.f32.mrb[0].mxu0
  %v4500 = vadd.f32 %v4307, %v4499
  %v4501 = vpop.f32.mrb[0].mxu0
  %v4502 = vadd.f32 %v4309, %v4501
  %v4503 = vpop.f32.mrb[0].mxu0
  %v4504 = vadd.f32 %v4311, %v4503
  %v4505 = vpop.f32.mrb[0].mxu0
  %v4506 = vadd.f32 %v4313, %v4505
  %4507 = vmatprep.mubr.bf16.mxu0 0
  %4508 = vmatmul.mubr.bf16.gmra.mrb[0].mxu0 %v3464
  %v4509 = vpop.f32.mrb[0].mxu0
  %v4510 = vadd.f32 %v4317, %v4509
  %v4511 = vpop.f32.mrb[0].mxu0
  %v4512 = vadd.f32 %v4319, %v4511
  %v4513 = vpop.f32.mrb[0].mxu0
  %v4514 = vadd.f32 %v4321, %v4513
  %v4515 = vpop.f32.mrb[0].mxu0
  %v4516 = vadd.f32 %v4323, %v4515
  %4517 = vmatprep.mubr.bf16.mxu0 0
  %4518 = vmatmul.mubr.bf16.gmra.mrb[0].mxu0 %v3465
  %v4519 = vpop.f32.mrb[0].mxu0
  %v4520 = vadd.f32 %v4327, %v4519
  %v4521 = vpop.f32.mrb[0].mxu0
  %v4522 = vadd.f32 %v4329, %v4521
  %v4523 = vpop.f32.mrb[0].mxu0
  %v4524 = vadd.f32 %v4331, %v4523
  %v4525 = vpop.f32.mrb[0].mxu0
  %v4526 = vadd.f32 %v4333, %v4525
  %4527 = vmatprep.mubr.bf16.mxu0 0
  %4528 = vmatmul.mubr.bf16.gmra.mrb[0].mxu0 %v3466
  %v4529 = vpop.f32.mrb[0].mxu0
  %v4530 = vadd.f32 %v4337, %v4529
  %v4531 = vpop.f32.mrb[0].mxu0
  %v4532 = vadd.f32 %v4339, %v4531
  %v4533 = vpop.f32.mrb[0].mxu0
  %v4534 = vadd.f32 %v4341, %v4533
  %v4535 = vpop.f32.mrb[0].mxu0
  %v4536 = vadd.f32 %v4343, %v4535
  %4537 = vdwg.mxu0
  %v4538 = vmax.f32 %v4380, %v4400
  %v4539 = vmax.f32 %v4382, %v4402
  %v4540 = vmax.f32 %v4384, %v4404
  %v4541 = vmax.f32 %v4386, %v4406
  %v4542 = vmax.f32 %v4390, %v4410
  %v4543 = vmax.f32 %v4392, %v4412
  %v4544 = vmax.f32 %v4394, %v4414
  %v4545 = vmax.f32 %v4396, %v4416
  %v4546 = vmax.f32 %v4420, %v4440
  %v4547 = vmax.f32 %v4422, %v4442
  %v4548 = vmax.f32 %v4424, %v4444
  %v4549 = vmax.f32 %v4426, %v4446
  %v4550 = vmax.f32 %v4430, %v4450
  %v4551 = vmax.f32 %v4432, %v4452
  %v4552 = vmax.f32 %v4434, %v4454
  %v4553 = vmax.f32 %v4436, %v4456
  %v4554 = vmax.f32 %v4460, %v4480
  %v4555 = vmax.f32 %v4462, %v4482
  %v4556 = vmax.f32 %v4464, %v4484
  %v4557 = vmax.f32 %v4466, %v4486
  %v4558 = vmax.f32 %v4470, %v4490
  %v4559 = vmax.f32 %v4472, %v4492
  %v4560 = vmax.f32 %v4474, %v4494
  %v4561 = vmax.f32 %v4476, %v4496
  %v4562 = vmax.f32 %v4500, %v4520
  %v4563 = vmax.f32 %v4502, %v4522
  %v4564 = vmax.f32 %v4504, %v4524
  %v4565 = vmax.f32 %v4506, %v4526
  %v4566 = vmax.f32 %v4510, %v4530
  %v4567 = vmax.f32 %v4512, %v4532
  %v4568 = vmax.f32 %v4514, %v4534
  %v4569 = vmax.f32 %v4516, %v4536
  %v4570 = vpack.c.bf16 %v4540, %v4538
  %v4571 = vpack.c.bf16 %v4541, %v4539
  %v4572 = vpack.c.bf16 %v4544, %v4542
  %v4573 = vpack.c.bf16 %v4545, %v4543
  %v4574 = vpack.c.bf16 %v4548, %v4546
  %v4575 = vpack.c.bf16 %v4549, %v4547
  %v4576 = vpack.c.bf16 %v4552, %v4550
  %v4577 = vpack.c.bf16 %v4553, %v4551
  %v4578 = vpack.c.bf16 %v4556, %v4554
  %v4579 = vpack.c.bf16 %v4557, %v4555
  %v4580 = vpack.c.bf16 %v4560, %v4558
  %v4581 = vpack.c.bf16 %v4561, %v4559
  %v4582 = vpack.c.bf16 %v4564, %v4562
  %v4583 = vpack.c.bf16 %v4565, %v4563
  %v4584 = vpack.c.bf16 %v4568, %v4566
  %v4585 = vpack.c.bf16 %v4569, %v4567
  %v4586 = vld [vmem:[%s6] sm:$0xff]
  %v4587 = vld [vmem:[%s6 + $0x8] sm:$0xff]
  %v4588 = vld [vmem:[%s6 + $0x10] sm:$0xff]
  %v4589 = vld [vmem:[%s6 + $0x18] sm:$0xff]
  %v4590 = vld [vmem:[%s6 + $0x20] sm:$0xff]
  %v4591 = vld [vmem:[%s6 + $0x28] sm:$0xff]
  %v4592 = vld [vmem:[%s6 + $0x30] sm:$0xff]
  %v4593 = vld [vmem:[%s6 + $0x38] sm:$0xff]
  %v4594 = vld [vmem:[%s6 + $0x40] sm:$0xff]
  %v4595 = vld [vmem:[%s6 + $0x48] sm:$0xff]
  %v4596 = vld [vmem:[%s6 + $0x50] sm:$0xff]
  %v4597 = vld [vmem:[%s6 + $0x58] sm:$0xff]
  %v4598 = vld [vmem:[%s6 + $0x60] sm:$0xff]
  %v4599 = vld [vmem:[%s6 + $0x68] sm:$0xff]
  %v4600 = vld [vmem:[%s6 + $0x70] sm:$0xff]
  %v4601 = vld [vmem:[%s6 + $0x78] sm:$0xff]
  %v4602 = vld [vmem:[%s6 + $0x80] sm:$0xff]
  %v4603 = vld [vmem:[%s6 + $0x88] sm:$0xff]
  %v4604 = vld [vmem:[%s6 + $0x90] sm:$0xff]
  %v4605 = vld [vmem:[%s6 + $0x98] sm:$0xff]
  %v4626 = vunpack.c.l.b16 %v4586
  %v4627 = vunpack.c.h.b16 %v4586
  %v4628 = vunpack.c.l.b16 %v4587
  %v4629 = vunpack.c.h.b16 %v4587
  %v4630 = vunpack.c.l.b16 %v4588
  %v4631 = vunpack.c.h.b16 %v4588
  %v4632 = vunpack.c.l.b16 %v4589
  %v4633 = vunpack.c.h.b16 %v4589
  %v4634 = vunpack.c.l.b16 %v4590
  %v4635 = vunpack.c.h.b16 %v4590
  %v4636 = vunpack.c.l.b16 %v4591
  %v4637 = vunpack.c.h.b16 %v4591
  %v4638 = vunpack.c.l.b16 %v4592
  %v4639 = vunpack.c.h.b16 %v4592
  %v4640 = vunpack.c.l.b16 %v4593
  %v4641 = vunpack.c.h.b16 %v4593
  %v4642 = vunpack.c.l.b16 %v4594
  %v4643 = vunpack.c.h.b16 %v4594
  %v4644 = vunpack.c.l.b16 %v4595
  %v4645 = vunpack.c.h.b16 %v4595
  %v4646 = vunpack.c.l.b16 %v4596
  %v4647 = vunpack.c.h.b16 %v4596
  %v4648 = vunpack.c.l.b16 %v4597
  %v4649 = vunpack.c.h.b16 %v4597
  %v4650 = vunpack.c.l.b16 %v4598
  %v4651 = vunpack.c.h.b16 %v4598
  %v4652 = vunpack.c.l.b16 %v4599
  %v4653 = vunpack.c.h.b16 %v4599
  %v4654 = vunpack.c.l.b16 %v4600
  %v4655 = vunpack.c.h.b16 %v4600
  %v4656 = vunpack.c.l.b16 %v4601
  %v4657 = vunpack.c.h.b16 %v4601
  %v4658 = vunpack.c.l.b16 %v4602
  %v4659 = vunpack.c.h.b16 %v4602
  %v4660 = vunpack.c.l.b16 %v4603
  %v4661 = vunpack.c.h.b16 %v4603
  %v4662 = vunpack.c.l.b16 %v4604
  %v4663 = vunpack.c.h.b16 %v4604
  %v4664 = vunpack.c.l.b16 %v4605
  %v4665 = vunpack.c.h.b16 %v4605
  %v4666 = vpack.c.b16 %v4628, %v4626
  %v4667 = vpack.c.b16 %v4629, %v4627
  %v4668 = vpack.c.b16 %v4632, %v4630
  %v4669 = vpack.c.b16 %v4633, %v4631
  %v4670 = vpack.c.b16 %v4636, %v4634
  %v4671 = vpack.c.b16 %v4637, %v4635
  %v4672 = vpack.c.b16 %v4640, %v4638
  %v4673 = vpack.c.b16 %v4641, %v4639
  %v4674 = vpack.c.b16 %v4644, %v4642
  %v4675 = vpack.c.b16 %v4645, %v4643
  %v4676 = vpack.c.b16 %v4648, %v4646
  %v4677 = vpack.c.b16 %v4649, %v4647
  %v4678 = vpack.c.b16 %v4652, %v4650
  %v4679 = vpack.c.b16 %v4653, %v4651
  %v4680 = vpack.c.b16 %v4656, %v4654
  %v4681 = vpack.c.b16 %v4657, %v4655
  %v4682 = vpack.c.b16 %v4660, %v4658
  %v4683 = vpack.c.b16 %v4661, %v4659
  %v4684 = vpack.c.b16 %v4664, %v4662
  %v4685 = vpack.c.b16 %v4665, %v4663
  %vm4706 = vcmask 261120
  %v4708 = vsel %vm4706, %v4571, 0
  %v4711 = vsel %vm4706, %v4573, 0
  %v4714 = vsel %vm4706, %v4575, 0
  %v4717 = vsel %vm4706, %v4577, 0
  %v4720 = vsel %vm4706, %v4579, 0
  %v4723 = vsel %vm4706, %v4581, 0
  %v4726 = vsel %vm4706, %v4583, 0
  %v4729 = vsel %vm4706, %v4585, 0
  %4731 = vmatprep.subr.bf16.mxu0 %v4667
  %4732 = vmatpush1.bf16.msra.mxu0 %v4666
  %4733 = vmatprep.subr.bf16.mxu0 %v4669
  %4734 = vmatpush1.bf16.msra.mxu0 %v4668
  %4735 = vmatprep.subr.bf16.mxu0 %v4671
  %4736 = vmatpush1.bf16.msra.mxu0 %v4670
  %4737 = vmatprep.subr.bf16.mxu0 %v4673
  %4738 = vmatpush1.bf16.msra.mxu0 %v4672
  %4739 = vmatprep.subr.bf16.mxu0 %v4675
  %4740 = vmatpush1.bf16.msra.mxu0 %v4674
  %4741 = vmatprep.subr.bf16.mxu0 %v4677
  %4742 = vmatpush1.bf16.msra.mxu0 %v4676
  %4743 = vmatprep.subr.bf16.mxu0 %v4679
  %4744 = vmatpush1.bf16.msra.mxu0 %v4678
  %4745 = vmatprep.subr.bf16.mxu0 %v4681
  %4746 = vmatpush1.bf16.msra.mxu0 %v4680
  %4747 = vmatprep.subr.bf16.mxu0 %v4683
  %4748 = vmatpush1.bf16.msra.mxu0 %v4682
  %4749 = vmatprep.subr.bf16.mxu0 %v4685
  %4750 = vmatpush1.bf16.msra.mxu0 %v4684
  %4751 = vmatprep.subr.bf16.mxu0 0
  %4752 = vmatpush1.bf16.msra.mxu0 0
  %4753 = vmatprep.subr.bf16.mxu0 0
  %4754 = vmatpush1.bf16.msra.mxu0 0
  %4755 = vmatprep.subr.bf16.mxu0 0
  %4756 = vmatpush1.bf16.msra.mxu0 0
  %4757 = vmatprep.subr.bf16.mxu0 0
  %4758 = vmatpush1.bf16.msra.mxu0 0
  %4759 = vmatprep.subr.bf16.mxu0 0
  %4760 = vmatpush1.bf16.msra.mxu0 0
  %4761 = vmatprep.subr.bf16.mxu0 0
  %4762 = vmatpush1.bf16.msra.mxu0 0
  %4763 = vmatprep.mubr.bf16.mxu0 %v4708
  %4764 = vmatmul.mubr.bf16.gmra.mrb[0].mxu0 %v4570
  %v4765 = vpop.f32.mrb[0].mxu0
  %v4766 = vadd.f32 0.0, %v4765
  %v4767 = vpop.f32.mrb[0].mxu0
  %v4768 = vadd.f32 0.0, %v4767
  %v4769 = vpop.f32.mrb[0].mxu0
  %v4770 = vadd.f32 0.0, %v4769
  %v4771 = vpop.f32.mrb[0].mxu0
  %v4772 = vadd.f32 0.0, %v4771
  %4773 = vmatprep.mubr.bf16.mxu0 %v4711
  %4774 = vmatmul.mubr.bf16.gmra.mrb[0].mxu0 %v4572
  %v4775 = vpop.f32.mrb[0].mxu0
  %v4776 = vadd.f32 0.0, %v4775
  %v4777 = vpop.f32.mrb[0].mxu0
  %v4778 = vadd.f32 0.0, %v4777
  %v4779 = vpop.f32.mrb[0].mxu0
  %v4780 = vadd.f32 0.0, %v4779
  %v4781 = vpop.f32.mrb[0].mxu0
  %v4782 = vadd.f32 0.0, %v4781
  %4783 = vmatprep.mubr.bf16.mxu0 %v4714
  %4784 = vmatmul.mubr.bf16.gmra.mrb[0].mxu0 %v4574
  %v4785 = vpop.f32.mrb[0].mxu0
  %v4786 = vadd.f32 0.0, %v4785
  %v4787 = vpop.f32.mrb[0].mxu0
  %v4788 = vadd.f32 0.0, %v4787
  %v4789 = vpop.f32.mrb[0].mxu0
  %v4790 = vadd.f32 0.0, %v4789
  %v4791 = vpop.f32.mrb[0].mxu0
  %v4792 = vadd.f32 0.0, %v4791
  %4793 = vmatprep.mubr.bf16.mxu0 %v4717
  %4794 = vmatmul.mubr.bf16.gmra.mrb[0].mxu0 %v4576
  %v4795 = vpop.f32.mrb[0].mxu0
  %v4796 = vadd.f32 0.0, %v4795
  %v4797 = vpop.f32.mrb[0].mxu0
  %v4798 = vadd.f32 0.0, %v4797
  %v4799 = vpop.f32.mrb[0].mxu0
  %v4800 = vadd.f32 0.0, %v4799
  %v4801 = vpop.f32.mrb[0].mxu0
  %v4802 = vadd.f32 0.0, %v4801
  %4803 = vmatprep.mubr.bf16.mxu0 %v4720
  %4804 = vmatmul.mubr.bf16.gmra.mrb[0].mxu0 %v4578
  %v4805 = vpop.f32.mrb[0].mxu0
  %v4806 = vadd.f32 0.0, %v4805
  %v4807 = vpop.f32.mrb[0].mxu0
  %v4808 = vadd.f32 0.0, %v4807
  %v4809 = vpop.f32.mrb[0].mxu0
  %v4810 = vadd.f32 0.0, %v4809
  %v4811 = vpop.f32.mrb[0].mxu0
  %v4812 = vadd.f32 0.0, %v4811
  %4813 = vmatprep.mubr.bf16.mxu0 %v4723
  %4814 = vmatmul.mubr.bf16.gmra.mrb[0].mxu0 %v4580
  %v4815 = vpop.f32.mrb[0].mxu0
  %v4816 = vadd.f32 0.0, %v4815
  %v4817 = vpop.f32.mrb[0].mxu0
  %v4818 = vadd.f32 0.0, %v4817
  %v4819 = vpop.f32.mrb[0].mxu0
  %v4820 = vadd.f32 0.0, %v4819
  %v4821 = vpop.f32.mrb[0].mxu0
  %v4822 = vadd.f32 0.0, %v4821
  %4823 = vmatprep.mubr.bf16.mxu0 %v4726
  %4824 = vmatmul.mubr.bf16.gmra.mrb[0].mxu0 %v4582
  %v4825 = vpop.f32.mrb[0].mxu0
  %v4826 = vadd.f32 0.0, %v4825
  %v4827 = vpop.f32.mrb[0].mxu0
  %v4828 = vadd.f32 0.0, %v4827
  %v4829 = vpop.f32.mrb[0].mxu0
  %v4830 = vadd.f32 0.0, %v4829
  %v4831 = vpop.f32.mrb[0].mxu0
  %v4832 = vadd.f32 0.0, %v4831
  %4833 = vmatprep.mubr.bf16.mxu0 %v4729
  %4834 = vmatmul.mubr.bf16.gmra.mrb[0].mxu0 %v4584
  %v4835 = vpop.f32.mrb[0].mxu0
  %v4836 = vadd.f32 0.0, %v4835
  %v4837 = vpop.f32.mrb[0].mxu0
  %v4838 = vadd.f32 0.0, %v4837
  %v4839 = vpop.f32.mrb[0].mxu0
  %v4840 = vadd.f32 0.0, %v4839
  %v4841 = vpop.f32.mrb[0].mxu0
  %v4842 = vadd.f32 0.0, %v4841
  %4843 = vdwg.mxu0
  %v4844 = vmax.f32 %v4766, %v4768
  %v4845 = vmax.f32 %v4770, %v4772
  %v4846 = vmax.f32 %v4776, %v4778
  %v4847 = vmax.f32 %v4780, %v4782
  %v4848 = vmax.f32 %v4786, %v4788
  %v4849 = vmax.f32 %v4790, %v4792
  %v4850 = vmax.f32 %v4796, %v4798
  %v4851 = vmax.f32 %v4800, %v4802
  %v4852 = vmax.f32 %v4806, %v4808
  %v4853 = vmax.f32 %v4810, %v4812
  %v4854 = vmax.f32 %v4816, %v4818
  %v4855 = vmax.f32 %v4820, %v4822
  %v4856 = vmax.f32 %v4826, %v4828
  %v4857 = vmax.f32 %v4830, %v4832
  %v4858 = vmax.f32 %v4836, %v4838
  %v4859 = vmax.f32 %v4840, %v4842
  %v4860 = vmax.f32 %v4844, 0.0
  %v4861 = vmax.f32 %v4845, 0.0
  %v4862 = vmax.f32 %v4846, 0.0
  %v4863 = vmax.f32 %v4847, 0.0
  %v4864 = vmax.f32 %v4848, 0.0
  %v4865 = vmax.f32 %v4849, 0.0
  %v4866 = vmax.f32 %v4850, 0.0
  %v4867 = vmax.f32 %v4851, 0.0
  %v4868 = vmax.f32 %v4852, 0.0
  %v4869 = vmax.f32 %v4853, 0.0
  %v4870 = vmax.f32 %v4854, 0.0
  %v4871 = vmax.f32 %v4855, 0.0
  %v4872 = vmax.f32 %v4856, 0.0
  %v4873 = vmax.f32 %v4857, 0.0
  %v4874 = vmax.f32 %v4858, 0.0
  %v4875 = vmax.f32 %v4859, 0.0
  %v4876 = vpack.c.bf16 %v4861, %v4860
  %v4877 = vpack.c.bf16 %v4863, %v4862
  %v4878 = vpack.c.bf16 %v4865, %v4864
  %v4879 = vpack.c.bf16 %v4867, %v4866
  %v4880 = vpack.c.bf16 %v4869, %v4868
  %v4881 = vpack.c.bf16 %v4871, %v4870
  %v4882 = vpack.c.bf16 %v4873, %v4872
  %v4883 = vpack.c.bf16 %v4875, %v4874
  %v4884 = vld [vmem:[%s7] sm:$0xf]
  %v4885 = vld [vmem:[%s7 + $0x4] sm:$0xf]
  %v4886 = vld [vmem:[%s7 + $0x8] sm:$0xf]
  %v4887 = vld [vmem:[%s7 + $0xc] sm:$0xf]
  %v4888 = vld [vmem:[%s7 + $0x10] sm:$0xf]
  %v4889 = vld [vmem:[%s7 + $0x14] sm:$0xf]
  %v4890 = vld [vmem:[%s7 + $0x18] sm:$0xf]
  %v4891 = vld [vmem:[%s7 + $0x1c] sm:$0xf]
  %v4892 = vld [vmem:[%s7 + $0x20] sm:$0xf]
  %v4893 = vld [vmem:[%s7 + $0x24] sm:$0xf]
  %v4894 = vld [vmem:[%s7 + $0x28] sm:$0xf]
  %v4895 = vld [vmem:[%s7 + $0x2c] sm:$0xf]
  %v4896 = vld [vmem:[%s7 + $0x30] sm:$0xf]
  %v4897 = vld [vmem:[%s7 + $0x34] sm:$0xf]
  %v4898 = vld [vmem:[%s7 + $0x38] sm:$0xf]
  %v4899 = vld [vmem:[%s7 + $0x3c] sm:$0xf]
  %v4900 = vld [vmem:[%s7 + $0x40] sm:$0xf]
  %v4901 = vld [vmem:[%s7 + $0x44] sm:$0xf]
  %v4902 = vld [vmem:[%s7 + $0x48] sm:$0xf]
  %v4903 = vld [vmem:[%s7 + $0x4c] sm:$0xf]
  %v4904 = vld [vmem:[%s7 + $0x50] sm:$0xf]
  %v4905 = vld [vmem:[%s7 + $0x54] sm:$0xf]
  %v4906 = vld [vmem:[%s7 + $0x58] sm:$0xf]
  %v4907 = vld [vmem:[%s7 + $0x5c] sm:$0xf]
  %v4908 = vld [vmem:[%s7 + $0x60] sm:$0xf]
  %v4909 = vld [vmem:[%s7 + $0x64] sm:$0xf]
  %v4910 = vld [vmem:[%s7 + $0x68] sm:$0xf]
  %v4911 = vld [vmem:[%s7 + $0x6c] sm:$0xf]
  %v4912 = vld [vmem:[%s7 + $0x70] sm:$0xf]
  %v4913 = vld [vmem:[%s7 + $0x74] sm:$0xf]
  %v4914 = vld [vmem:[%s7 + $0x78] sm:$0xf]
  %v4915 = vld [vmem:[%s7 + $0x7c] sm:$0xf]
  %v4916 = vld [vmem:[%s7 + $0x80] sm:$0xf]
  %v4917 = vld [vmem:[%s7 + $0x84] sm:$0xf]
  %v4918 = vld [vmem:[%s7 + $0x88] sm:$0xf]
  %v4919 = vld [vmem:[%s7 + $0x8c] sm:$0xf]
  %v4920 = vld [vmem:[%s7 + $0x90] sm:$0xf]
  %v4921 = vld [vmem:[%s7 + $0x94] sm:$0xf]
  %v4922 = vld [vmem:[%s7 + $0x98] sm:$0xf]
  %v4923 = vld [vmem:[%s7 + $0x9c] sm:$0xf]
  %v4924 = vld [vmem:[%s7 + $0xa0] sm:$0xf]
  %v4925 = vld [vmem:[%s7 + $0xa4] sm:$0xf]
  %v4926 = vld [vmem:[%s7 + $0xa8] sm:$0xf]
  %v4927 = vld [vmem:[%s7 + $0xac] sm:$0xf]
  %v4928 = vld [vmem:[%s7 + $0xb0] sm:$0xf]
  %v4929 = vld [vmem:[%s7 + $0xb4] sm:$0xf]
  %v4930 = vld [vmem:[%s7 + $0xb8] sm:$0xf]
  %v4931 = vld [vmem:[%s7 + $0xbc] sm:$0xf]
  %v4932 = vld [vmem:[%s7 + $0xc0] sm:$0xf]
  %v4933 = vld [vmem:[%s7 + $0xc4] sm:$0xf]
  %v4934 = vld [vmem:[%s7 + $0xc8] sm:$0xf]
  %v4935 = vld [vmem:[%s7 + $0xcc] sm:$0xf]
  %v4936 = vld [vmem:[%s7 + $0xd0] sm:$0xf]
  %v4937 = vld [vmem:[%s7 + $0xd4] sm:$0xf]
  %v4938 = vld [vmem:[%s7 + $0xd8] sm:$0xf]
  %v4939 = vld [vmem:[%s7 + $0xdc] sm:$0xf]
  %v4940 = vld [vmem:[%s7 + $0xe0] sm:$0xf]
  %v4941 = vld [vmem:[%s7 + $0xe4] sm:$0xf]
  %v4942 = vld [vmem:[%s7 + $0xe8] sm:$0xf]
  %v4943 = vld [vmem:[%s7 + $0xec] sm:$0xf]
  %v4944 = vld [vmem:[%s7 + $0xf0] sm:$0xf]
  %v4945 = vld [vmem:[%s7 + $0xf4] sm:$0xf]
  %v4946 = vld [vmem:[%s7 + $0xf8] sm:$0xf]
  %v4947 = vld [vmem:[%s7 + $0xfc] sm:$0xf]
  %v4948 = vld [vmem:[%s8] sm:$0x1]
  %v4950 = vlaneseq
  %v4951 = vshrl.u32 %v4950, 7
  %v4952 = vsub.s32 0, %v4951
  %v4953 = vrot.slane %v4948, %v4952
  %v5019 = vunpack.c.l.b16 %v4884
  %v5020 = vunpack.c.l.b16 %v4885
  %v5021 = vunpack.c.l.b16 %v4886
  %v5022 = vunpack.c.l.b16 %v4887
  %v5023 = vunpack.c.l.b16 %v4888
  %v5024 = vunpack.c.l.b16 %v4889
  %v5025 = vunpack.c.l.b16 %v4890
  %v5026 = vunpack.c.l.b16 %v4891
  %v5027 = vunpack.c.l.b16 %v4892
  %v5028 = vunpack.c.l.b16 %v4893
  %v5029 = vunpack.c.l.b16 %v4894
  %v5030 = vunpack.c.l.b16 %v4895
  %v5031 = vunpack.c.l.b16 %v4896
  %v5032 = vunpack.c.l.b16 %v4897
  %v5033 = vunpack.c.l.b16 %v4898
  %v5034 = vunpack.c.l.b16 %v4899
  %v5035 = vunpack.c.l.b16 %v4900
  %v5036 = vunpack.c.l.b16 %v4901
  %v5037 = vunpack.c.l.b16 %v4902
  %v5038 = vunpack.c.l.b16 %v4903
  %v5039 = vunpack.c.l.b16 %v4904
  %v5040 = vunpack.c.l.b16 %v4905
  %v5041 = vunpack.c.l.b16 %v4906
  %v5042 = vunpack.c.l.b16 %v4907
  %v5043 = vunpack.c.l.b16 %v4908
  %v5044 = vunpack.c.l.b16 %v4909
  %v5045 = vunpack.c.l.b16 %v4910
  %v5046 = vunpack.c.l.b16 %v4911
  %v5047 = vunpack.c.l.b16 %v4912
  %v5048 = vunpack.c.l.b16 %v4913
  %v5049 = vunpack.c.l.b16 %v4914
  %v5050 = vunpack.c.l.b16 %v4915
  %v5051 = vunpack.c.l.b16 %v4916
  %v5052 = vunpack.c.l.b16 %v4917
  %v5053 = vunpack.c.l.b16 %v4918
  %v5054 = vunpack.c.l.b16 %v4919
  %v5055 = vunpack.c.l.b16 %v4920
  %v5056 = vunpack.c.l.b16 %v4921
  %v5057 = vunpack.c.l.b16 %v4922
  %v5058 = vunpack.c.l.b16 %v4923
  %v5059 = vunpack.c.l.b16 %v4924
  %v5060 = vunpack.c.l.b16 %v4925
  %v5061 = vunpack.c.l.b16 %v4926
  %v5062 = vunpack.c.l.b16 %v4927
  %v5063 = vunpack.c.l.b16 %v4928
  %v5064 = vunpack.c.l.b16 %v4929
  %v5065 = vunpack.c.l.b16 %v4930
  %v5066 = vunpack.c.l.b16 %v4931
  %v5067 = vunpack.c.l.b16 %v4932
  %v5068 = vunpack.c.l.b16 %v4933
  %v5069 = vunpack.c.l.b16 %v4934
  %v5070 = vunpack.c.l.b16 %v4935
  %v5071 = vunpack.c.l.b16 %v4936
  %v5072 = vunpack.c.l.b16 %v4937
  %v5073 = vunpack.c.l.b16 %v4938
  %v5074 = vunpack.c.l.b16 %v4939
  %v5075 = vunpack.c.l.b16 %v4940
  %v5076 = vunpack.c.l.b16 %v4941
  %v5077 = vunpack.c.l.b16 %v4942
  %v5078 = vunpack.c.l.b16 %v4943
  %v5079 = vunpack.c.l.b16 %v4944
  %v5080 = vunpack.c.l.b16 %v4945
  %v5081 = vunpack.c.l.b16 %v4946
  %v5082 = vunpack.c.l.b16 %v4947
  %v5083 = vpack.c.b16 %v5020, %v5019
  %v5084 = vpack.c.b16 %v5022, %v5021
  %v5085 = vpack.c.b16 %v5024, %v5023
  %v5086 = vpack.c.b16 %v5026, %v5025
  %v5087 = vpack.c.b16 %v5028, %v5027
  %v5088 = vpack.c.b16 %v5030, %v5029
  %v5089 = vpack.c.b16 %v5032, %v5031
  %v5090 = vpack.c.b16 %v5034, %v5033
  %v5091 = vpack.c.b16 %v5036, %v5035
  %v5092 = vpack.c.b16 %v5038, %v5037
  %v5093 = vpack.c.b16 %v5040, %v5039
  %v5094 = vpack.c.b16 %v5042, %v5041
  %v5095 = vpack.c.b16 %v5044, %v5043
  %v5096 = vpack.c.b16 %v5046, %v5045
  %v5097 = vpack.c.b16 %v5048, %v5047
  %v5098 = vpack.c.b16 %v5050, %v5049
  %v5099 = vpack.c.b16 %v5052, %v5051
  %v5100 = vpack.c.b16 %v5054, %v5053
  %v5101 = vpack.c.b16 %v5056, %v5055
  %v5102 = vpack.c.b16 %v5058, %v5057
  %v5103 = vpack.c.b16 %v5060, %v5059
  %v5104 = vpack.c.b16 %v5062, %v5061
  %v5105 = vpack.c.b16 %v5064, %v5063
  %v5106 = vpack.c.b16 %v5066, %v5065
  %v5107 = vpack.c.b16 %v5068, %v5067
  %v5108 = vpack.c.b16 %v5070, %v5069
  %v5109 = vpack.c.b16 %v5072, %v5071
  %v5110 = vpack.c.b16 %v5074, %v5073
  %v5111 = vpack.c.b16 %v5076, %v5075
  %v5112 = vpack.c.b16 %v5078, %v5077
  %v5113 = vpack.c.b16 %v5080, %v5079
  %v5114 = vpack.c.b16 %v5082, %v5081
  %5147 = vmatprep.subr.bf16.mxu0 0
  %5148 = vmatpush1.bf16.msra.mxu0 %v5083
  %5149 = vmatprep.subr.bf16.mxu0 0
  %5150 = vmatpush1.bf16.msra.mxu0 %v5084
  %5151 = vmatprep.subr.bf16.mxu0 0
  %5152 = vmatpush1.bf16.msra.mxu0 %v5085
  %5153 = vmatprep.subr.bf16.mxu0 0
  %5154 = vmatpush1.bf16.msra.mxu0 %v5086
  %5155 = vmatprep.subr.bf16.mxu0 0
  %5156 = vmatpush1.bf16.msra.mxu0 %v5087
  %5157 = vmatprep.subr.bf16.mxu0 0
  %5158 = vmatpush1.bf16.msra.mxu0 %v5088
  %5159 = vmatprep.subr.bf16.mxu0 0
  %5160 = vmatpush1.bf16.msra.mxu0 %v5089
  %5161 = vmatprep.subr.bf16.mxu0 0
  %5162 = vmatpush1.bf16.msra.mxu0 %v5090
  %5163 = vmatprep.subr.bf16.mxu0 0
  %5164 = vmatpush1.bf16.msra.mxu0 %v5091
  %5165 = vmatprep.subr.bf16.mxu0 0
  %5166 = vmatpush1.bf16.msra.mxu0 %v5092
  %5167 = vmatprep.subr.bf16.mxu0 0
  %5168 = vmatpush1.bf16.msra.mxu0 %v5093
  %5169 = vmatprep.subr.bf16.mxu0 0
  %5170 = vmatpush1.bf16.msra.mxu0 %v5094
  %5171 = vmatprep.subr.bf16.mxu0 0
  %5172 = vmatpush1.bf16.msra.mxu0 %v5095
  %5173 = vmatprep.subr.bf16.mxu0 0
  %5174 = vmatpush1.bf16.msra.mxu0 %v5096
  %5175 = vmatprep.subr.bf16.mxu0 0
  %5176 = vmatpush1.bf16.msra.mxu0 %v5097
  %5177 = vmatprep.subr.bf16.mxu0 0
  %5178 = vmatpush1.bf16.msra.mxu0 %v5098
  %5179 = vmatprep.mubr.bf16.mxu0 %v4878
  %5180 = vmatmul.mubr.bf16.gmra.mrb[0].mxu0 %v4876
  %v5181 = vpop.f32.mrb[0].mxu0
  %v5182 = vadd.f32 %v4953, %v5181
  %v5183 = vpop.f32.mrb[0].mxu0
  %v5184 = vpop.f32.mrb[0].mxu0
  %v5185 = vadd.f32 %v4953, %v5184
  %v5186 = vpop.f32.mrb[0].mxu0
  %5187 = vmatprep.mubr.bf16.mxu0 %v4879
  %5188 = vmatmul.mubr.bf16.gmra.mrb[0].mxu0 %v4877
  %v5189 = vpop.f32.mrb[0].mxu0
  %v5190 = vadd.f32 %v4953, %v5189
  %v5191 = vpop.f32.mrb[0].mxu0
  %v5192 = vpop.f32.mrb[0].mxu0
  %v5193 = vadd.f32 %v4953, %v5192
  %v5194 = vpop.f32.mrb[0].mxu0
  %5195 = vdwg.mxu0
  %5196 = vmatprep.subr.bf16.mxu0 0
  %5197 = vmatpush1.bf16.msra.mxu0 %v5099
  %5198 = vmatprep.subr.bf16.mxu0 0
  %5199 = vmatpush1.bf16.msra.mxu0 %v5100
  %5200 = vmatprep.subr.bf16.mxu0 0
  %5201 = vmatpush1.bf16.msra.mxu0 %v5101
  %5202 = vmatprep.subr.bf16.mxu0 0
  %5203 = vmatpush1.bf16.msra.mxu0 %v5102
  %5204 = vmatprep.subr.bf16.mxu0 0
  %5205 = vmatpush1.bf16.msra.mxu0 %v5103
  %5206 = vmatprep.subr.bf16.mxu0 0
  %5207 = vmatpush1.bf16.msra.mxu0 %v5104
  %5208 = vmatprep.subr.bf16.mxu0 0
  %5209 = vmatpush1.bf16.msra.mxu0 %v5105
  %5210 = vmatprep.subr.bf16.mxu0 0
  %5211 = vmatpush1.bf16.msra.mxu0 %v5106
  %5212 = vmatprep.subr.bf16.mxu0 0
  %5213 = vmatpush1.bf16.msra.mxu0 %v5107
  %5214 = vmatprep.subr.bf16.mxu0 0
  %5215 = vmatpush1.bf16.msra.mxu0 %v5108
  %5216 = vmatprep.subr.bf16.mxu0 0
  %5217 = vmatpush1.bf16.msra.mxu0 %v5109
  %5218 = vmatprep.subr.bf16.mxu0 0
  %5219 = vmatpush1.bf16.msra.mxu0 %v5110
  %5220 = vmatprep.subr.bf16.mxu0 0
  %5221 = vmatpush1.bf16.msra.mxu0 %v5111
  %5222 = vmatprep.subr.bf16.mxu0 0
  %5223 = vmatpush1.bf16.msra.mxu0 %v5112
  %5224 = vmatprep.subr.bf16.mxu0 0
  %5225 = vmatpush1.bf16.msra.mxu0 %v5113
  %5226 = vmatprep.subr.bf16.mxu0 0
  %5227 = vmatpush1.bf16.msra.mxu0 %v5114
  %5228 = vmatprep.mubr.bf16.mxu0 %v4882
  %5229 = vmatmul.mubr.bf16.gmra.mrb[0].mxu0 %v4880
  %v5230 = vpop.f32.mrb[0].mxu0
  %v5231 = vadd.f32 %v5182, %v5230
  %v5232 = vpop.f32.mrb[0].mxu0
  %v5233 = vpop.f32.mrb[0].mxu0
  %v5234 = vadd.f32 %v5185, %v5233
  %v5235 = vpop.f32.mrb[0].mxu0
  %5236 = vmatprep.mubr.bf16.mxu0 %v4883
  %5237 = vmatmul.mubr.bf16.gmra.mrb[0].mxu0 %v4881
  %v5238 = vpop.f32.mrb[0].mxu0
  %v5239 = vadd.f32 %v5190, %v5238
  %v5240 = vpop.f32.mrb[0].mxu0
  %v5241 = vpop.f32.mrb[0].mxu0
  %v5242 = vadd.f32 %v5193, %v5241
  %v5243 = vpop.f32.mrb[0].mxu0
  %5244 = vdwg.mxu0
  %v5245 = vmax.f32 %v5231, 0.0
  %v5246 = vmax.f32 %v5234, 0.0
  %v5247 = vmax.f32 %v5239, 0.0
  %v5248 = vmax.f32 %v5242, 0.0
  %v5249 = vpack.c.bf16 %v5246, %v5245
  %v5250 = vpack.c.bf16 %v5248, %v5247
  %v5251 = vld [vmem:[%s9] sm:$0xf]
  %v5252 = vld [vmem:[%s9 + $0x4] sm:$0xf]
  %v5253 = vld [vmem:[%s9 + $0x8] sm:$0xf]
  %v5254 = vld [vmem:[%s9 + $0xc] sm:$0xf]
  %v5255 = vld [vmem:[%s9 + $0x10] sm:$0xf]
  %v5256 = vld [vmem:[%s9 + $0x14] sm:$0xf]
  %v5257 = vld [vmem:[%s9 + $0x18] sm:$0x1]
  %v5258 = vld [vmem:[%s10] sm:$0x1]
  %v5260 = vlaneseq
  %v5261 = vshrl.u32 %v5260, 7
  %v5262 = vsub.s32 0, %v5261
  %v5263 = vrot.slane %v5258, %v5262
  %v5272 = vunpack.c.l.b16 %v5251
  %v5273 = vunpack.c.l.b16 %v5252
  %v5274 = vunpack.c.l.b16 %v5253
  %v5275 = vunpack.c.l.b16 %v5254
  %v5276 = vunpack.c.l.b16 %v5255
  %v5277 = vunpack.c.l.b16 %v5256
  %v5278 = vunpack.c.l.b16 %v5257
  %v5279 = vpack.c.b16 %v5273, %v5272
  %v5280 = vpack.c.b16 %v5275, %v5274
  %v5281 = vpack.c.b16 %v5277, %v5276
  %v5282 = vpack.c.b16 %v5278, %v5278
  %vm5286 = vcmask 408576
  %v5288 = vsel %vm5286, %v5249, 0
  %v5291 = vsel %vm5286, %v5250, 0
  %vm5293 = vcmask 1040384
  %v5295 = vsel %vm5293, %v5282, 0
  %5297 = vmatprep.subr.bf16.mxu0 0
  %5298 = vmatpush1.bf16.msra.mxu0 %v5279
  %5299 = vmatprep.subr.bf16.mxu0 0
  %5300 = vmatpush1.bf16.msra.mxu0 %v5280
  %5301 = vmatprep.subr.bf16.mxu0 0
  %5302 = vmatpush1.bf16.msra.mxu0 %v5281
  %5303 = vmatprep.subr.bf16.mxu0 0
  %5304 = vmatpush1.bf16.msra.mxu0 %v5295
  %5305 = vmatprep.subr.bf16.mxu0 0
  %5306 = vmatpush1.bf16.msra.mxu0 0
  %5307 = vmatprep.subr.bf16.mxu0 0
  %5308 = vmatpush1.bf16.msra.mxu0 0
  %5309 = vmatprep.subr.bf16.mxu0 0
  %5310 = vmatpush1.bf16.msra.mxu0 0
  %5311 = vmatprep.subr.bf16.mxu0 0
  %5312 = vmatpush1.bf16.msra.mxu0 0
  %5313 = vmatprep.subr.bf16.mxu0 0
  %5314 = vmatpush1.bf16.msra.mxu0 0
  %5315 = vmatprep.subr.bf16.mxu0 0
  %5316 = vmatpush1.bf16.msra.mxu0 0
  %5317 = vmatprep.subr.bf16.mxu0 0
  %5318 = vmatpush1.bf16.msra.mxu0 0
  %5319 = vmatprep.subr.bf16.mxu0 0
  %5320 = vmatpush1.bf16.msra.mxu0 0
  %5321 = vmatprep.subr.bf16.mxu0 0
  %5322 = vmatpush1.bf16.msra.mxu0 0
  %5323 = vmatprep.subr.bf16.mxu0 0
  %5324 = vmatpush1.bf16.msra.mxu0 0
  %5325 = vmatprep.subr.bf16.mxu0 0
  %5326 = vmatpush1.bf16.msra.mxu0 0
  %5327 = vmatprep.subr.bf16.mxu0 0
  %5328 = vmatpush1.bf16.msra.mxu0 0
  %5329 = vmatprep.mubr.bf16.mxu0 0
  %5330 = vmatmul.mubr.bf16.gmra.mrb[0].mxu0 %v5288
  %v5331 = vpop.f32.mrb[0].mxu0
  %v5332 = vadd.f32 %v5263, %v5331
  %v5333 = vpop.f32.mrb[0].mxu0
  %v5334 = vpop.f32.mrb[0].mxu0
  %v5335 = vadd.f32 %v5263, %v5334
  %v5336 = vpop.f32.mrb[0].mxu0
  %5337 = vmatprep.mubr.bf16.mxu0 0
  %5338 = vmatmul.mubr.bf16.gmra.mrb[0].mxu0 %v5291
  %v5339 = vpop.f32.mrb[0].mxu0
  %v5340 = vadd.f32 %v5263, %v5339
  %v5341 = vpop.f32.mrb[0].mxu0
  %v5342 = vpop.f32.mrb[0].mxu0
  %v5343 = vadd.f32 %v5263, %v5342
  %v5344 = vpop.f32.mrb[0].mxu0
  %5345 = vdwg.mxu0
  %5346 = vmax.xlane.f32.xlu0 %v5332
  %v5347 = vpop.xlane.xlu0 %5346
  %5348 = vmax.xlane.f32.xlu0 %v5335
  %v5349 = vpop.xlane.xlu0 %5348
  %5350 = vmax.xlane.f32.xlu0 %v5340
  %v5351 = vpop.xlane.xlu0 %5350
  %5352 = vmax.xlane.f32.xlu0 %v5343
  %v5353 = vpop.xlane.xlu0 %5352
  %v5354 = vsub.f32 %v5332, %v5347
  %v5355 = vsub.f32 %v5335, %v5349
  %v5356 = vsub.f32 %v5340, %v5351
  %v5357 = vsub.f32 %v5343, %v5353
  %v5358 = vmul.f32 %v5354, 1.442695
  %v5359 = vpow.pop %v5358
  %v5360 = vmul.f32 %v5355, 1.442695
  %v5361 = vpow.pop %v5360
  %v5362 = vmul.f32 %v5356, 1.442695
  %v5363 = vpow.pop %v5362
  %v5364 = vmul.f32 %v5357, 1.442695
  %v5365 = vpow.pop %v5364
  %5366 = vadd.xlane.f32.xlu0 %v5359
  %v5367 = vpop.xlane.xlu0 %5366
  %5368 = vadd.xlane.f32.xlu0 %v5361
  %v5369 = vpop.xlane.xlu0 %5368
  %5370 = vadd.xlane.f32.xlu0 %v5363
  %v5371 = vpop.xlane.xlu0 %5370
  %5372 = vadd.xlane.f32.xlu0 %v5365
  %v5373 = vpop.xlane.xlu0 %5372
  %v5374 = vlog2.pop %v5367
  %v5375 = vmul.f32 %v5374, 0.6931472
  %v5376 = vlog2.pop %v5369
  %v5377 = vmul.f32 %v5376, 0.6931472
  %v5378 = vlog2.pop %v5371
  %v5379 = vmul.f32 %v5378, 0.6931472
  %v5380 = vlog2.pop %v5373
  %v5381 = vmul.f32 %v5380, 0.6931472
  %v5382 = vsub.f32 %v5354, %v5375
  %v5383 = vsub.f32 %v5355, %v5377
  %v5384 = vsub.f32 %v5356, %v5379
  %v5385 = vsub.f32 %v5357, %v5381
  %5386 = vst [vmem:[%s11] sm:$0xff] %v5382
  %5387 = vst [vmem:[%s11 + $0x8] sm:$0xff] %v5383
  %5388 = vst [vmem:[%s11 + $0x10] sm:$0xff] %v5384
  %5389 = vst [vmem:[%s11 + $0x18] sm:$0xff] %v5385
  // Predicated region
  $region46: #{smallnet_forward.1} parent=0 // pred_check
    _
  $region47: #{smallnet_forward.1} parent=0 // pred_check_branch
    %5391 = sbr.rel (0) target = $region49
  $region48: #{smallnet_forward.1} parent=0 // pred_region
    _
  $region49: #{smallnet_forward.1} parent=0 // pred_fallthru
    _
  // Predicated region
  $region50: #{smallnet_forward.1} parent=0 // pred_check
    _
  $region51: #{smallnet_forward.1} parent=0 // pred_check_branch
    %5393 = sbr.rel (0) target = $region53
  $region52: #{smallnet_forward.1} parent=0 // pred_region
    _
  $region53: #{smallnet_forward.1} parent=0 // pred_fallthru
    _

</llo_original>
